<compile_context>
chip_gen: v6e
topology: v6e:2x2x1
jax: 0.10.0
libtpu: 0.0.40
codegen_flags: <defaults>
</compile_context>

<pallas_src>
import functools

import jax
import jax.numpy as jnp
from jax.experimental import pallas as pl
from jax.experimental.pallas import tpu as pltpu

LANE = 128  # TPU lane width; channel dims are padded to a multiple of this.


def _round_up(x, m):
    return ((x + m - 1) // m) * m


def _pad_last_to(a, target):
    pad = target - a.shape[-1]
    if pad == 0:
        return a
    widths = [(0, 0)] * (a.ndim - 1) + [(0, pad)]
    return jnp.pad(a, widths)


# ---------------------------------------------------------------------------
# Kernel 1: tiled (im2col-matmul + bias + optional ReLU) for the 4x4/s2 convs.
# ---------------------------------------------------------------------------
def _matmul_bias_kernel(x_ref, w_ref, b_ref, o_ref, *, relu_out):
    acc = jnp.dot(x_ref[...], w_ref[...], preferred_element_type=jnp.float32)
    acc = acc + b_ref[...]                      # (1, Np) bias broadcast
    if relu_out:
        acc = jnp.maximum(acc, 0.0)
    o_ref[...] = acc.astype(o_ref.dtype)


def matmul_bias_act(x, w, b, *, relu_out, out_dtype, tm_max=1024):
    """x: (M, K) bf16; w: (K, Np) bf16; b: (1, Np) f32.  Returns (M, Np)."""
    M, K = x.shape
    Np = w.shape[1]
    TM = min(tm_max, _round_up(M, 8))
    # v7x has 2 TensorCores: when M is large, prefer >= 2 parallel grid steps
    # (per-step overhead ~0.35us is negligible at that size).
    if M > 2 * 512 and _round_up(M, TM) // TM < 2:
        TM = _round_up(pl.cdiv(M, 2), 8)
    Mp = _round_up(M, TM)
    xb = x.astype(jnp.bfloat16)
    if Mp != M:
        xb = jnp.pad(xb, ((0, Mp - M), (0, 0)))

    out_isz = jnp.dtype(out_dtype).itemsize
    out = pl.pallas_call(
        functools.partial(_matmul_bias_kernel, relu_out=relu_out),
        out_shape=jax.ShapeDtypeStruct((Mp, Np), out_dtype),
        grid_spec=pltpu.PrefetchScalarGridSpec(
            num_scalar_prefetch=0,
            grid=(Mp // TM,),
            in_specs=[
                pl.BlockSpec((TM, K), lambda i: (i, 0)),
                pl.BlockSpec((K, Np), lambda i: (0, 0)),   # weights stay resident
                pl.BlockSpec((1, Np), lambda i: (0, 0)),
            ],
            out_specs=pl.BlockSpec((TM, Np), lambda i: (i, 0)),
        ),
        compiler_params=pltpu.CompilerParams(dimension_semantics=("parallel",)),
        cost_estimate=pl.CostEstimate(
            flops=2 * Mp * K * Np,
            transcendentals=0,
            bytes_accessed=Mp * K * 2 + K * Np * 2 + Np * 4 + Mp * Np * out_isz,
        ),
    )(xb, w.astype(jnp.bfloat16), b.astype(jnp.float32))
    return out[:M] if Mp != M else out


def _im2col(x, kh, kw, stride, pad, cin_keep=None):
    """x: (N, H, W, C) -> (N*Ho*Wo, kh*kw*cin_keep) patches (same dtype as x).

    `cin_keep` lets the caller fold a channel drop (lane padding from the
    previous conv) into the gather so no standalone slice copy hits HBM.
    Plain-JAX glue, stride-2 head only; patches are built in bf16.
    """
    n, h, w, c = x.shape
    if cin_keep is None:
        cin_keep = c
    xp = jnp.pad(x, ((0, 0), (pad, pad), (pad, pad), (0, 0)))
    ho = (h + 2 * pad - kh) // stride + 1
    wo = (w + 2 * pad - kw) // stride + 1
    cols = []
    for i in range(kh):
        for j in range(kw):
            cols.append(
                xp[:, i:i + stride * ho:stride, j:j + stride * wo:stride, :cin_keep])
    patches = jnp.concatenate(cols, axis=-1)
    return patches.reshape(n * ho * wo, kh * kw * cin_keep), (n, ho, wo)


def conv2d_strided(x, w, b, *, stride, pad, relu_out, out_dtype=jnp.bfloat16,
                   tm_max=1024):
    """x: NHWC; w: (KH,KW,Cin,Cout).  Returns (n, ho, wo, round_up(Cout,128));
    the padded output channels are exactly zero.  If x has more channels than
    Cin (lane padding from a previous conv), the extras are dropped inside the
    im2col gather."""
    kh, kw, cin, cout = w.shape
    np_ = _round_up(cout, LANE)
    xb = x.astype(jnp.bfloat16)                     # bf16 BEFORE im2col: halves
    patches, (n, ho, wo) = _im2col(xb, kh, kw, stride, pad, cin_keep=cin)
    wm = _pad_last_to(w.reshape(kh * kw * cin, cout), np_).astype(jnp.bfloat16)
    bm = _pad_last_to(b.reshape(1, cout), np_).astype(jnp.float32)
    y = matmul_bias_act(patches, wm, bm, relu_out=relu_out, out_dtype=out_dtype,
                        tm_max=tm_max)
    return y.reshape(n, ho, wo, np_), (n, ho, wo)


# ---------------------------------------------------------------------------
# Kernel 2: fused conv3(3x3,s1,p1) + shared-weight residual stack + final ReLU.
# One grid step per image; activation stays in VMEM for the whole tail.
# Each 3x3 conv is ONE K-stacked bf16 matmul (K = 9*cp) built from shifted
# views of a zero-haloed bf16 VMEM shift buffer.
# ---------------------------------------------------------------------------
def _tail_kernel(x_ref, w3_ref, b3_ref, rw1_ref, rw2_ref, ml_ref, mr_ref,
                 o_ref, buf_ref, *, wo, m, pad_rows, n_res_layers):
    cp = buf_ref.shape[1]
    # (Re)zero the halo rows of the shift buffer; the interior is always
    # overwritten before use.
    zeros_pad = jnp.zeros((pad_rows, cp), jnp.bfloat16)
    buf_ref[0:pad_rows, :] = zeros_pad
    buf_ref[pad_rows + m: 2 * pad_rows + m, :] = zeros_pad

    ml = ml_ref[...] != 0.0   # (m, 1) bool: False where x == 0       (left edge)
    mr = mr_ref[...] != 0.0   # (m, 1) bool: False where x == wo - 1  (right edge)

    def conv3x3(x_bf16, w_ref):
        # 3x3 / stride-1 / pad-1 conv: write the row-flattened (m, cp) bf16
        # activation into the haloed shift buffer, gather the 9 shifted taps
        # (bitwise-select masking at the image left/right edges), K-stack them
        # into an (m, 9*cp) slab and issue a single MXU matmul.
        buf_ref[pad_rows:pad_rows + m, :] = x_bf16
        taps = []
        for ki in range(3):
            for kj in range(3):
                s = (ki - 1) * wo + (kj - 1)
                v = buf_ref[pad_rows + s: pad_rows + s + m, :]
                if kj == 0:
                    v = jnp.where(ml, v, jnp.zeros_like(v))
                elif kj == 2:
                    v = jnp.where(mr, v, jnp.zeros_like(v))
                taps.append(v)
        slab = jnp.concatenate(taps, axis=-1)          # (m, 9*cp) bf16
        return jnp.dot(slab, w_ref[...], preferred_element_type=jnp.float32)

    x_cur = conv3x3(x_ref[0], w3_ref) + b3_ref[...]    # conv3 (no ReLU)

    def res_layer(x_cur):
        # relu -> 3x3 (no bias) -> relu -> 1x1 (no bias), + skip
        h = conv3x3(jnp.maximum(x_cur, 0.0).astype(jnp.bfloat16), rw1_ref)
        h = jnp.maximum(h, 0.0).astype(jnp.bfloat16)
        return x_cur + jnp.dot(h, rw2_ref[...], preferred_element_type=jnp.float32)

    if n_res_layers <= 3:
        for _ in range(n_res_layers):                  # shared-weight stack
            x_cur = res_layer(x_cur)
    else:
        # Deep stacks: fori_loop bounds live ranges (weights are shared, so
        # the body is loop-invariant apart from the carried activation).
        x_cur = jax.lax.fori_loop(0, n_res_layers, lambda _, x: res_layer(x),
                                  x_cur)

    x_cur = jnp.maximum(x_cur, 0.0)                    # ResidualStack final ReLU
    o_ref[0, :, :] = x_cur.astype(o_ref.dtype)


# ---------------------------------------------------------------------------
# Encoder forward
# ---------------------------------------------------------------------------
def encoder_forward(x_nchw, params, n_res_layers, tail_out_dtype=jnp.float32):
    h_dim = params["b2"].shape[0]
    res_h = params["rw1"].shape[-1]
    cp = _round_up(h_dim, LANE)
    rp = _round_up(res_h, LANE)

    x = jnp.transpose(x_nchw, (0, 2, 3, 1)).astype(jnp.float32)   # NCHW -> NHWC

    # conv1 + ReLU, conv2 + ReLU (4x4 / stride 2 / pad 1).  y1 keeps its lane
    # padding; conv2's im2col slices each tap back to h_dim//2 channels so no
    # standalone channel-drop copy is materialized in HBM.
    y1, _ = conv2d_strided(x, params["w1"], params["b1"],
                           stride=2, pad=1, relu_out=True, tm_max=2048)
    y2, (n, ho, wo) = conv2d_strided(y1, params["w2"], params["b2"],
                                     stride=2, pad=1, relu_out=True, tm_max=1024)
    # y2: (n, ho, wo, cp) bf16; padded channels are exactly zero.

    m = ho * wo
    x_tail = y2.reshape(n, m, cp)

    # channel-padded tail weights, laid out K-stacked (9*cp rows) so each 3x3
    # conv is a single MXU matmul.  Padded rows/cols are zero => padded output
    # channels stay exactly zero through the whole stack.
    w3p = jnp.pad(params["w3"],
                  ((0, 0), (0, 0), (0, cp - h_dim), (0, cp - h_dim)))
    w3p = w3p.reshape(9 * cp, cp).astype(jnp.bfloat16)
    b3p = _pad_last_to(params["b3"].reshape(1, h_dim), cp).astype(jnp.float32)
    rw1p = jnp.pad(params["rw1"],
                   ((0, 0), (0, 0), (0, cp - h_dim), (0, rp - res_h)))
    rw1p = rw1p.reshape(9 * cp, rp).astype(jnp.bfloat16)
    rw2p = jnp.pad(params["rw2"].reshape(res_h, h_dim),
                   ((0, rp - res_h), (0, cp - h_dim))).astype(jnp.bfloat16)

    # boundary masks for the shifted-row 3x3 taps (constant across the batch
    # grid; Pallas does not re-DMA constant-index blocks)
    col = jnp.arange(m, dtype=jnp.int32) % wo
    mask_l = (col != 0).astype(jnp.float32).reshape(m, 1)
    mask_r = (col != wo - 1).astype(jnp.float32).reshape(m, 1)

    pad_rows = _round_up(wo + 1, 8)
    out_isz = jnp.dtype(tail_out_dtype).itemsize

    # explicit VMEM budget (matters on v7x's 64 MiB): in/out double buffers,
    # resident weights, bf16 shift buffer and the K-stacked slab temp.
    vmem_need = (2 * m * cp * 2 + 2 * m * cp * out_isz
                 + 2 * (9 * cp * cp + cp + 9 * cp * rp + rp * cp) * 2
                 + (m + 2 * pad_rows) * cp * 2
                 + 2 * m * 9 * cp * 2)
    vmem_limit = int(min(max(2 * vmem_need, 32 * 1024 * 1024), 64 * 1024 * 1024))

    # TODO(synk): if batch n == 1 (or odd) on v7x, split the image into row
    # blocks as a second "parallel" grid axis so both TensorCores are used.
    out = pl.pallas_call(
        functools.partial(_tail_kernel, wo=wo, m=m, pad_rows=pad_rows,
                          n_res_layers=n_res_layers),
        out_shape=jax.ShapeDtypeStruct((n, m, cp), tail_out_dtype),
        grid_spec=pltpu.PrefetchScalarGridSpec(
            num_scalar_prefetch=0,
            grid=(n,),
            in_specs=[
                pl.BlockSpec((1, m, cp), lambda b: (b, 0, 0)),
                pl.BlockSpec((9 * cp, cp), lambda b: (0, 0)),   # weights resident
                pl.BlockSpec((1, cp), lambda b: (0, 0)),
                pl.BlockSpec((9 * cp, rp), lambda b: (0, 0)),
                pl.BlockSpec((rp, cp), lambda b: (0, 0)),
                pl.BlockSpec((m, 1), lambda b: (0, 0)),
                pl.BlockSpec((m, 1), lambda b: (0, 0)),
            ],
            out_specs=pl.BlockSpec((1, m, cp), lambda b: (b, 0, 0)),
            scratch_shapes=[pltpu.VMEM((m + 2 * pad_rows, cp), jnp.bfloat16)],
        ),
        compiler_params=pltpu.CompilerParams(
            dimension_semantics=("parallel",),
            vmem_limit_bytes=vmem_limit),
        cost_estimate=pl.CostEstimate(
            flops=2 * n * m * cp * (9 * cp + n_res_layers * 10 * rp),
            transcendentals=0,
            bytes_accessed=n * m * cp * (2 + out_isz)
            + (9 * cp * cp + cp + 9 * cp * rp + rp * cp) * 2
            + 2 * m * 4,
        ),
    )(x_tail, w3p, b3p, rw1p, rw2p, mask_l, mask_r)

    out = out[:, :, :h_dim].reshape(n, ho, wo, h_dim)
    return jnp.transpose(out, (0, 3, 1, 2))       # back to NCHW


# ---------------------------------------------------------------------------
# Plain-JAX f32 reference (for a correctness check in __main__)
# ---------------------------------------------------------------------------
def reference_encoder(x_nchw, params, n_res_layers):
    def conv(x, w, stride, pad):
        return jax.lax.conv_general_dilated(
            x, w, (stride, stride), [(pad, pad), (pad, pad)],
            dimension_numbers=("NHWC", "HWIO", "NHWC"),
            precision=jax.lax.Precision.HIGHEST)

    x = jnp.transpose(x_nchw, (0, 2, 3, 1)).astype(jnp.float32)
    y = jax.nn.relu(conv(x, params["w1"], 2, 1) + params["b1"])
    y = jax.nn.relu(conv(y, params["w2"], 2, 1) + params["b2"])
    y = conv(y, params["w3"], 1, 1) + params["b3"]
    for _ in range(n_res_layers):
        h = conv(jax.nn.relu(y), params["rw1"], 1, 1)
        y = y + conv(jax.nn.relu(h), params["rw2"], 1, 0)
    y = jax.nn.relu(y)
    return jnp.transpose(y, (0, 3, 1, 2))


def init_params(key, in_dim, h_dim, res_h_dim):
    ks = jax.random.split(key, 8)
    s = 0.05
    return {
        # weights stored as (KH, KW, Cin, Cout)
        "w1": s * jax.random.normal(ks[0], (4, 4, in_dim, h_dim // 2), jnp.float32),
        "b1": s * jax.random.normal(ks[1], (h_dim // 2,), jnp.float32),
        "w2": s * jax.random.normal(ks[2], (4, 4, h_dim // 2, h_dim), jnp.float32),
        "b2": s * jax.random.normal(ks[3], (h_dim,), jnp.float32),
        "w3": s * jax.random.normal(ks[4], (3, 3, h_dim, h_dim), jnp.float32),
        "b3": s * jax.random.normal(ks[5], (h_dim,), jnp.float32),
        # residual layer (shared across the stack), bias=False in PyTorch
        "rw1": s * jax.random.normal(ks[6], (3, 3, h_dim, res_h_dim), jnp.float32),
        "rw2": s * jax.random.normal(ks[7], (1, 1, res_h_dim, h_dim), jnp.float32),
    }


if __name__ == "__main__":
    in_dim, h_dim, res_h_dim, n_res_layers = 4, 32, 8, 2
    key = jax.random.PRNGKey(0)
    kx, kp = jax.random.split(key)

    x = jax.random.normal(kx, (2, in_dim, 16, 16), jnp.float32)   # NCHW like PyTorch
    params = init_params(kp, in_dim, h_dim, res_h_dim)

    fwd = jax.jit(functools.partial(encoder_forward, n_res_layers=n_res_layers))
    out = fwd(x, params)
    jax.block_until_ready(out)

    ref = reference_encoder(x, params, n_res_layers)

    # 16x16 input -> /2 -> /2 -> same  ==> (2, h_dim, 4, 4)
    assert out.shape == (2, h_dim, 4, 4), out.shape
    assert out.dtype == jnp.float32
    assert bool(jnp.all(jnp.isfinite(out)))
    max_err = float(jnp.max(jnp.abs(out - ref)))
    assert max_err < 5e-2, f"max abs error vs f32 reference: {max_err}"
    print("KERNEL_OK")
</pallas_src>

<mosaic_0001>
module attributes {stable_mosaic.version = 11 : i64} {
  func.func @_matmul_bias_kernel(%arg0: i32, %arg1: memref<128x64xbf16, #tpu.memory_space<vmem>>, %arg2: memref<64x128xbf16, #tpu.memory_space<vmem>>, %arg3: memref<1x128xf32, #tpu.memory_space<vmem>>, %arg4: memref<128x128xbf16, #tpu.memory_space<vmem>>) attributes {dimension_semantics = [#tpu.dimension_semantics<parallel>], iteration_bounds = array<i64: 1>, scalar_prefetch = 0 : i64, scratch_operands = 0 : i64, tpu.core_type = #tpu.core_type<tc>, window_params = [{transform_indices = @transform_0, window_bounds = array<i64: 128, 64>}, {pipeline_mode = #tpu.pipeline_mode<synchronous>, transform_indices = @transform_1, window_bounds = array<i64: 64, 128>}, {pipeline_mode = #tpu.pipeline_mode<synchronous>, transform_indices = @transform_2, window_bounds = array<i64: 1, 128>}, {transform_indices = @transform_3, window_bounds = array<i64: 128, 128>}]} {
    %c0 = arith.constant 0 : index
    %c0_0 = arith.constant 0 : index
    %0 = vector.load %arg1[%c0, %c0_0] : memref<128x64xbf16, #tpu.memory_space<vmem>>, vector<128x64xbf16>
    %c0_1 = arith.constant 0 : index
    %c0_2 = arith.constant 0 : index
    %1 = vector.load %arg2[%c0_1, %c0_2] : memref<64x128xbf16, #tpu.memory_space<vmem>>, vector<64x128xbf16>
    %cst = arith.constant dense<0.000000e+00> : vector<128x128xf32>
    %2 = tpu.matmul %0, %1, %cst {dimension_numbers = #tpu.dot_dimension_numbers<[1], [0], [0], [1], [0, 0, 1, 1], [], []>} : vector<128x64xbf16>, vector<64x128xbf16>, vector<128x128xf32> -> vector<128x128xf32>
    %c0_3 = arith.constant 0 : index
    %c0_4 = arith.constant 0 : index
    %3 = vector.load %arg3[%c0_3, %c0_4] : memref<1x128xf32, #tpu.memory_space<vmem>>, vector<1x128xf32>
    %4 = vector.broadcast %3 : vector<1x128xf32> to vector<128x128xf32>
    %5 = arith.addf %2, %4 : vector<128x128xf32>
    %cst_5 = arith.constant 0.000000e+00 : f32
    %6 = vector.broadcast %cst_5 : f32 to vector<128x128xf32>
    %7 = arith.maximumf %5, %6 : vector<128x128xf32>
    %8 = arith.truncf %7 : vector<128x128xf32> to vector<128x128xbf16>
    %c0_6 = arith.constant 0 : index
    %c0_7 = arith.constant 0 : index
    %9 = vector.load %arg4[%c0_6, %c0_7] : memref<128x128xbf16, #tpu.memory_space<vmem>>, vector<128x128xbf16>
    tpu.vector_store %arg4[%c0_6, %c0_7], %8 {strides = array<i32>} : memref<128x128xbf16, #tpu.memory_space<vmem>>, vector<128x128xbf16>,
    return
  }
  func.func @transform_0(%arg0: i32) -> (i32, i32) {
    %c0_i32 = arith.constant 0 : i32
    %c0_i32_0 = arith.constant 0 : i32
    return %arg0, %c0_i32 : i32, i32
  }
  func.func @transform_1(%arg0: i32) -> (i32, i32) {
    %c0_i32 = arith.constant 0 : i32
    %c0_i32_0 = arith.constant 0 : i32
    %c0_i32_1 = arith.constant 0 : i32
    return %c0_i32, %c0_i32_0 : i32, i32
  }
  func.func @transform_2(%arg0: i32) -> (i32, i32) {
    %c0_i32 = arith.constant 0 : i32
    %c0_i32_0 = arith.constant 0 : i32
    %c0_i32_1 = arith.constant 0 : i32
    return %c0_i32, %c0_i32_0 : i32, i32
  }
  func.func @transform_3(%arg0: i32) -> (i32, i32) {
    %c0_i32 = arith.constant 0 : i32
    %c0_i32_0 = arith.constant 0 : i32
    return %arg0, %c0_i32 : i32, i32
  }
}

module attributes {stable_mosaic.version = 11 : i64} {
  func.func @_matmul_bias_kernel(%arg0: i32, %arg1: memref<32x256xbf16, #tpu.memory_space<vmem>>, %arg2: memref<256x128xbf16, #tpu.memory_space<vmem>>, %arg3: memref<1x128xf32, #tpu.memory_space<vmem>>, %arg4: memref<32x128xbf16, #tpu.memory_space<vmem>>) attributes {dimension_semantics = [#tpu.dimension_semantics<parallel>], iteration_bounds = array<i64: 1>, scalar_prefetch = 0 : i64, scratch_operands = 0 : i64, tpu.core_type = #tpu.core_type<tc>, window_params = [{transform_indices = @transform_0, window_bounds = array<i64: 32, 256>}, {pipeline_mode = #tpu.pipeline_mode<synchronous>, transform_indices = @transform_1, window_bounds = array<i64: 256, 128>}, {pipeline_mode = #tpu.pipeline_mode<synchronous>, transform_indices = @transform_2, window_bounds = array<i64: 1, 128>}, {transform_indices = @transform_3, window_bounds = array<i64: 32, 128>}]} {
    %c0 = arith.constant 0 : index
    %c0_0 = arith.constant 0 : index
    %0 = vector.load %arg1[%c0, %c0_0] : memref<32x256xbf16, #tpu.memory_space<vmem>>, vector<32x256xbf16>
    %c0_1 = arith.constant 0 : index
    %c0_2 = arith.constant 0 : index
    %1 = vector.load %arg2[%c0_1, %c0_2] : memref<256x128xbf16, #tpu.memory_space<vmem>>, vector<256x128xbf16>
    %cst = arith.constant dense<0.000000e+00> : vector<32x128xf32>
    %2 = tpu.matmul %0, %1, %cst {dimension_numbers = #tpu.dot_dimension_numbers<[1], [0], [0], [1], [0, 0, 1, 1], [], []>} : vector<32x256xbf16>, vector<256x128xbf16>, vector<32x128xf32> -> vector<32x128xf32>
    %c0_3 = arith.constant 0 : index
    %c0_4 = arith.constant 0 : index
    %3 = vector.load %arg3[%c0_3, %c0_4] : memref<1x128xf32, #tpu.memory_space<vmem>>, vector<1x128xf32>
    %4 = vector.broadcast %3 : vector<1x128xf32> to vector<32x128xf32>
    %5 = arith.addf %2, %4 : vector<32x128xf32>
    %cst_5 = arith.constant 0.000000e+00 : f32
    %6 = vector.broadcast %cst_5 : f32 to vector<32x128xf32>
    %7 = arith.maximumf %5, %6 : vector<32x128xf32>
    %8 = arith.truncf %7 : vector<32x128xf32> to vector<32x128xbf16>
    %c0_6 = arith.constant 0 : index
    %c0_7 = arith.constant 0 : index
    %9 = vector.load %arg4[%c0_6, %c0_7] : memref<32x128xbf16, #tpu.memory_space<vmem>>, vector<32x128xbf16>
    tpu.vector_store %arg4[%c0_6, %c0_7], %8 {strides = array<i32>} : memref<32x128xbf16, #tpu.memory_space<vmem>>, vector<32x128xbf16>,
    return
  }
  func.func @transform_0(%arg0: i32) -> (i32, i32) {
    %c0_i32 = arith.constant 0 : i32
    %c0_i32_0 = arith.constant 0 : i32
    return %arg0, %c0_i32 : i32, i32
  }
  func.func @transform_1(%arg0: i32) -> (i32, i32) {
    %c0_i32 = arith.constant 0 : i32
    %c0_i32_0 = arith.constant 0 : i32
    %c0_i32_1 = arith.constant 0 : i32
    return %c0_i32, %c0_i32_0 : i32, i32
  }
  func.func @transform_2(%arg0: i32) -> (i32, i32) {
    %c0_i32 = arith.constant 0 : i32
    %c0_i32_0 = arith.constant 0 : i32
    %c0_i32_1 = arith.constant 0 : i32
    return %c0_i32, %c0_i32_0 : i32, i32
  }
  func.func @transform_3(%arg0: i32) -> (i32, i32) {
    %c0_i32 = arith.constant 0 : i32
    %c0_i32_0 = arith.constant 0 : i32
    return %arg0, %c0_i32 : i32, i32
  }
}

module attributes {stable_mosaic.version = 11 : i64} {
  func.func @_tail_kernel(%arg0: i32, %arg1: memref<1x16x128xbf16, #tpu.memory_space<vmem>>, %arg2: memref<1152x128xbf16, #tpu.memory_space<vmem>>, %arg3: memref<1x128xf32, #tpu.memory_space<vmem>>, %arg4: memref<1152x128xbf16, #tpu.memory_space<vmem>>, %arg5: memref<128x128xbf16, #tpu.memory_space<vmem>>, %arg6: memref<16x1xf32, #tpu.memory_space<vmem>>, %arg7: memref<16x1xf32, #tpu.memory_space<vmem>>, %arg8: memref<1x16x128xf32, #tpu.memory_space<vmem>>, %arg9: memref<32x128xbf16, #tpu.memory_space<vmem>>) attributes {dimension_semantics = [#tpu.dimension_semantics<parallel>], iteration_bounds = array<i64: 2>, scalar_prefetch = 0 : i64, scratch_operands = 1 : i64, tpu.core_type = #tpu.core_type<tc>, window_params = [{transform_indices = @transform_0, window_bounds = array<i64: 1, 16, 128>}, {pipeline_mode = #tpu.pipeline_mode<synchronous>, transform_indices = @transform_1, window_bounds = array<i64: 1152, 128>}, {pipeline_mode = #tpu.pipeline_mode<synchronous>, transform_indices = @transform_2, window_bounds = array<i64: 1, 128>}, {pipeline_mode = #tpu.pipeline_mode<synchronous>, transform_indices = @transform_3, window_bounds = array<i64: 1152, 128>}, {pipeline_mode = #tpu.pipeline_mode<synchronous>, transform_indices = @transform_4, window_bounds = array<i64: 128, 128>}, {pipeline_mode = #tpu.pipeline_mode<synchronous>, transform_indices = @transform_5, window_bounds = array<i64: 16, 1>}, {pipeline_mode = #tpu.pipeline_mode<synchronous>, transform_indices = @transform_6, window_bounds = array<i64: 16, 1>}, {transform_indices = @transform_7, window_bounds = array<i64: 1, 16, 128>}]} {
    %cst = arith.constant 0.000000e+00 : bf16
    %0 = vector.broadcast %cst : bf16 to vector<8x128xbf16>
    %c0 = arith.constant 0 : index
    %c0_0 = arith.constant 0 : index
    %1 = vector.load %arg9[%c0, %c0_0] : memref<32x128xbf16, #tpu.memory_space<vmem>>, vector<8x128xbf16>
    tpu.vector_store %arg9[%c0, %c0_0], %0 {strides = array<i32>} : memref<32x128xbf16, #tpu.memory_space<vmem>>, vector<8x128xbf16>,
    %c24 = arith.constant 24 : index
    %c0_1 = arith.constant 0 : index
    %2 = vector.load %arg9[%c24, %c0_1] : memref<32x128xbf16, #tpu.memory_space<vmem>>, vector<8x128xbf16>
    tpu.vector_store %arg9[%c24, %c0_1], %0 {strides = array<i32>} : memref<32x128xbf16, #tpu.memory_space<vmem>>, vector<8x128xbf16>,
    %c0_2 = arith.constant 0 : index
    %c0_3 = arith.constant 0 : index
    %3 = vector.load %arg6[%c0_2, %c0_3] : memref<16x1xf32, #tpu.memory_space<vmem>>, vector<16x1xf32>
    %cst_4 = arith.constant 0.000000e+00 : f32
    %4 = vector.broadcast %cst_4 : f32 to vector<16x1xf32>
    %5 = arith.cmpf one, %3, %4 : vector<16x1xf32>
    %c0_5 = arith.constant 0 : index
    %c0_6 = arith.constant 0 : index
    %6 = vector.load %arg7[%c0_5, %c0_6] : memref<16x1xf32, #tpu.memory_space<vmem>>, vector<16x1xf32>
    %cst_7 = arith.constant 0.000000e+00 : f32
    %7 = vector.broadcast %cst_7 : f32 to vector<16x1xf32>
    %8 = arith.cmpf one, %6, %7 : vector<16x1xf32>
    %c0_8 = arith.constant 0 : index
    %c0_9 = arith.constant 0 : index
    %c0_10 = arith.constant 0 : index
    %9 = vector.load %arg1[%c0_8, %c0_9, %c0_10] : memref<1x16x128xbf16, #tpu.memory_space<vmem>>, vector<1x16x128xbf16>
    %10 = vector.shape_cast %9 : vector<1x16x128xbf16> to vector<16x128xbf16>
    %c8 = arith.constant 8 : index
    %c0_11 = arith.constant 0 : index
    %11 = vector.load %arg9[%c8, %c0_11] : memref<32x128xbf16, #tpu.memory_space<vmem>>, vector<16x128xbf16>
    tpu.vector_store %arg9[%c8, %c0_11], %10 {strides = array<i32>} : memref<32x128xbf16, #tpu.memory_space<vmem>>, vector<16x128xbf16>,
    %c3 = arith.constant 3 : index
    %c0_12 = arith.constant 0 : index
    %12 = vector.load %arg9[%c3, %c0_12] : memref<32x128xbf16, #tpu.memory_space<vmem>>, vector<16x128xbf16>
    %cst_13 = arith.constant 0.000000e+00 : bf16
    %13 = vector.broadcast %cst_13 : bf16 to vector<16x128xbf16>
    %14 = vector.shape_cast %5 : vector<16x1xi1> to vector<16x1xi1>
    %15 = vector.broadcast %14 : vector<16x1xi1> to vector<16x128xi1>
    %16 = arith.select %15, %12, %13 : vector<16x128xi1>, vector<16x128xbf16>
    %c4 = arith.constant 4 : index
    %c0_14 = arith.constant 0 : index
    %17 = vector.load %arg9[%c4, %c0_14] : memref<32x128xbf16, #tpu.memory_space<vmem>>, vector<16x128xbf16>
    %c5 = arith.constant 5 : index
    %c0_15 = arith.constant 0 : index
    %18 = vector.load %arg9[%c5, %c0_15] : memref<32x128xbf16, #tpu.memory_space<vmem>>, vector<16x128xbf16>
    %cst_16 = arith.constant 0.000000e+00 : bf16
    %19 = vector.broadcast %cst_16 : bf16 to vector<16x128xbf16>
    %20 = vector.shape_cast %8 : vector<16x1xi1> to vector<16x1xi1>
    %21 = vector.broadcast %20 : vector<16x1xi1> to vector<16x128xi1>
    %22 = arith.select %21, %18, %19 : vector<16x128xi1>, vector<16x128xbf16>
    %c7 = arith.constant 7 : index
    %c0_17 = arith.constant 0 : index
    %23 = vector.load %arg9[%c7, %c0_17] : memref<32x128xbf16, #tpu.memory_space<vmem>>, vector<16x128xbf16>
    %cst_18 = arith.constant 0.000000e+00 : bf16
    %24 = vector.broadcast %cst_18 : bf16 to vector<16x128xbf16>
    %25 = vector.shape_cast %5 : vector<16x1xi1> to vector<16x1xi1>
    %26 = vector.broadcast %25 : vector<16x1xi1> to vector<16x128xi1>
    %27 = arith.select %26, %23, %24 : vector<16x128xi1>, vector<16x128xbf16>
    %c8_19 = arith.constant 8 : index
    %c0_20 = arith.constant 0 : index
    %28 = vector.load %arg9[%c8_19, %c0_20] : memref<32x128xbf16, #tpu.memory_space<vmem>>, vector<16x128xbf16>
    %c9 = arith.constant 9 : index
    %c0_21 = arith.constant 0 : index
    %29 = vector.load %arg9[%c9, %c0_21] : memref<32x128xbf16, #tpu.memory_space<vmem>>, vector<16x128xbf16>
    %cst_22 = arith.constant 0.000000e+00 : bf16
    %30 = vector.broadcast %cst_22 : bf16 to vector<16x128xbf16>
    %31 = vector.shape_cast %8 : vector<16x1xi1> to vector<16x1xi1>
    %32 = vector.broadcast %31 : vector<16x1xi1> to vector<16x128xi1>
    %33 = arith.select %32, %29, %30 : vector<16x128xi1>, vector<16x128xbf16>
    %c11 = arith.constant 11 : index
    %c0_23 = arith.constant 0 : index
    %34 = vector.load %arg9[%c11, %c0_23] : memref<32x128xbf16, #tpu.memory_space<vmem>>, vector<16x128xbf16>
    %cst_24 = arith.constant 0.000000e+00 : bf16
    %35 = vector.broadcast %cst_24 : bf16 to vector<16x128xbf16>
    %36 = vector.shape_cast %5 : vector<16x1xi1> to vector<16x1xi1>
    %37 = vector.broadcast %36 : vector<16x1xi1> to vector<16x128xi1>
    %38 = arith.select %37, %34, %35 : vector<16x128xi1>, vector<16x128xbf16>
    %c12 = arith.constant 12 : index
    %c0_25 = arith.constant 0 : index
    %39 = vector.load %arg9[%c12, %c0_25] : memref<32x128xbf16, #tpu.memory_space<vmem>>, vector<16x128xbf16>
    %c13 = arith.constant 13 : index
    %c0_26 = arith.constant 0 : index
    %40 = vector.load %arg9[%c13, %c0_26] : memref<32x128xbf16, #tpu.memory_space<vmem>>, vector<16x128xbf16>
    %cst_27 = arith.constant 0.000000e+00 : bf16
    %41 = vector.broadcast %cst_27 : bf16 to vector<16x128xbf16>
    %42 = vector.shape_cast %8 : vector<16x1xi1> to vector<16x1xi1>
    %43 = vector.broadcast %42 : vector<16x1xi1> to vector<16x128xi1>
    %44 = arith.select %43, %40, %41 : vector<16x128xi1>, vector<16x128xbf16>
    %45 = tpu.concatenate %16, %17, %22, %27, %28, %33, %38, %39, %44 in 1 : vector<16x128xbf16>, vector<16x128xbf16>, vector<16x128xbf16>, vector<16x128xbf16>, vector<16x128xbf16>, vector<16x128xbf16>, vector<16x128xbf16>, vector<16x128xbf16>, vector<16x128xbf16> -> vector<16x1152xbf16>
    %c0_28 = arith.constant 0 : index
    %c0_29 = arith.constant 0 : index
    %46 = vector.load %arg2[%c0_28, %c0_29] : memref<1152x128xbf16, #tpu.memory_space<vmem>>, vector<1152x128xbf16>
    %cst_30 = arith.constant dense<0.000000e+00> : vector<16x128xf32>
    %47 = tpu.matmul %45, %46, %cst_30 {dimension_numbers = #tpu.dot_dimension_numbers<[1], [0], [0], [1], [0, 0, 1, 1], [], []>} : vector<16x1152xbf16>, vector<1152x128xbf16>, vector<16x128xf32> -> vector<16x128xf32>
    %c0_31 = arith.constant 0 : index
    %c0_32 = arith.constant 0 : index
    %48 = vector.load %arg3[%c0_31, %c0_32] : memref<1x128xf32, #tpu.memory_space<vmem>>, vector<1x128xf32>
    %49 = vector.broadcast %48 : vector<1x128xf32> to vector<16x128xf32>
    %50 = arith.addf %47, %49 : vector<16x128xf32>
    %cst_33 = arith.constant 0.000000e+00 : f32
    %51 = vector.broadcast %cst_33 : f32 to vector<16x128xf32>
    %52 = arith.maximumf %50, %51 : vector<16x128xf32>
    %53 = arith.truncf %52 : vector<16x128xf32> to vector<16x128xbf16>
    %c8_34 = arith.constant 8 : index
    %c0_35 = arith.constant 0 : index
    %54 = vector.load %arg9[%c8_34, %c0_35] : memref<32x128xbf16, #tpu.memory_space<vmem>>, vector<16x128xbf16>
    tpu.vector_store %arg9[%c8_34, %c0_35], %53 {strides = array<i32>} : memref<32x128xbf16, #tpu.memory_space<vmem>>, vector<16x128xbf16>,
    %c3_36 = arith.constant 3 : index
    %c0_37 = arith.constant 0 : index
    %55 = vector.load %arg9[%c3_36, %c0_37] : memref<32x128xbf16, #tpu.memory_space<vmem>>, vector<16x128xbf16>
    %cst_38 = arith.constant 0.000000e+00 : bf16
    %56 = vector.broadcast %cst_38 : bf16 to vector<16x128xbf16>
    %57 = vector.shape_cast %5 : vector<16x1xi1> to vector<16x1xi1>
    %58 = vector.broadcast %57 : vector<16x1xi1> to vector<16x128xi1>
    %59 = arith.select %58, %55, %56 : vector<16x128xi1>, vector<16x128xbf16>
    %c4_39 = arith.constant 4 : index
    %c0_40 = arith.constant 0 : index
    %60 = vector.load %arg9[%c4_39, %c0_40] : memref<32x128xbf16, #tpu.memory_space<vmem>>, vector<16x128xbf16>
    %c5_41 = arith.constant 5 : index
    %c0_42 = arith.constant 0 : index
    %61 = vector.load %arg9[%c5_41, %c0_42] : memref<32x128xbf16, #tpu.memory_space<vmem>>, vector<16x128xbf16>
    %cst_43 = arith.constant 0.000000e+00 : bf16
    %62 = vector.broadcast %cst_43 : bf16 to vector<16x128xbf16>
    %63 = vector.shape_cast %8 : vector<16x1xi1> to vector<16x1xi1>
    %64 = vector.broadcast %63 : vector<16x1xi1> to vector<16x128xi1>
    %65 = arith.select %64, %61, %62 : vector<16x128xi1>, vector<16x128xbf16>
    %c7_44 = arith.constant 7 : index
    %c0_45 = arith.constant 0 : index
    %66 = vector.load %arg9[%c7_44, %c0_45] : memref<32x128xbf16, #tpu.memory_space<vmem>>, vector<16x128xbf16>
    %cst_46 = arith.constant 0.000000e+00 : bf16
    %67 = vector.broadcast %cst_46 : bf16 to vector<16x128xbf16>
    %68 = vector.shape_cast %5 : vector<16x1xi1> to vector<16x1xi1>
    %69 = vector.broadcast %68 : vector<16x1xi1> to vector<16x128xi1>
    %70 = arith.select %69, %66, %67 : vector<16x128xi1>, vector<16x128xbf16>
    %c8_47 = arith.constant 8 : index
    %c0_48 = arith.constant 0 : index
    %71 = vector.load %arg9[%c8_47, %c0_48] : memref<32x128xbf16, #tpu.memory_space<vmem>>, vector<16x128xbf16>
    %c9_49 = arith.constant 9 : index
    %c0_50 = arith.constant 0 : index
    %72 = vector.load %arg9[%c9_49, %c0_50] : memref<32x128xbf16, #tpu.memory_space<vmem>>, vector<16x128xbf16>
    %cst_51 = arith.constant 0.000000e+00 : bf16
    %73 = vector.broadcast %cst_51 : bf16 to vector<16x128xbf16>
    %74 = vector.shape_cast %8 : vector<16x1xi1> to vector<16x1xi1>
    %75 = vector.broadcast %74 : vector<16x1xi1> to vector<16x128xi1>
    %76 = arith.select %75, %72, %73 : vector<16x128xi1>, vector<16x128xbf16>
    %c11_52 = arith.constant 11 : index
    %c0_53 = arith.constant 0 : index
    %77 = vector.load %arg9[%c11_52, %c0_53] : memref<32x128xbf16, #tpu.memory_space<vmem>>, vector<16x128xbf16>
    %cst_54 = arith.constant 0.000000e+00 : bf16
    %78 = vector.broadcast %cst_54 : bf16 to vector<16x128xbf16>
    %79 = vector.shape_cast %5 : vector<16x1xi1> to vector<16x1xi1>
    %80 = vector.broadcast %79 : vector<16x1xi1> to vector<16x128xi1>
    %81 = arith.select %80, %77, %78 : vector<16x128xi1>, vector<16x128xbf16>
    %c12_55 = arith.constant 12 : index
    %c0_56 = arith.constant 0 : index
    %82 = vector.load %arg9[%c12_55, %c0_56] : memref<32x128xbf16, #tpu.memory_space<vmem>>, vector<16x128xbf16>
    %c13_57 = arith.constant 13 : index
    %c0_58 = arith.constant 0 : index
    %83 = vector.load %arg9[%c13_57, %c0_58] : memref<32x128xbf16, #tpu.memory_space<vmem>>, vector<16x128xbf16>
    %cst_59 = arith.constant 0.000000e+00 : bf16
    %84 = vector.broadcast %cst_59 : bf16 to vector<16x128xbf16>
    %85 = vector.shape_cast %8 : vector<16x1xi1> to vector<16x1xi1>
    %86 = vector.broadcast %85 : vector<16x1xi1> to vector<16x128xi1>
    %87 = arith.select %86, %83, %84 : vector<16x128xi1>, vector<16x128xbf16>
    %88 = tpu.concatenate %59, %60, %65, %70, %71, %76, %81, %82, %87 in 1 : vector<16x128xbf16>, vector<16x128xbf16>, vector<16x128xbf16>, vector<16x128xbf16>, vector<16x128xbf16>, vector<16x128xbf16>, vector<16x128xbf16>, vector<16x128xbf16>, vector<16x128xbf16> -> vector<16x1152xbf16>
    %c0_60 = arith.constant 0 : index
    %c0_61 = arith.constant 0 : index
    %89 = vector.load %arg4[%c0_60, %c0_61] : memref<1152x128xbf16, #tpu.memory_space<vmem>>, vector<1152x128xbf16>
    %cst_62 = arith.constant dense<0.000000e+00> : vector<16x128xf32>
    %90 = tpu.matmul %88, %89, %cst_62 {dimension_numbers = #tpu.dot_dimension_numbers<[1], [0], [0], [1], [0, 0, 1, 1], [], []>} : vector<16x1152xbf16>, vector<1152x128xbf16>, vector<16x128xf32> -> vector<16x128xf32>
    %cst_63 = arith.constant 0.000000e+00 : f32
    %91 = vector.broadcast %cst_63 : f32 to vector<16x128xf32>
    %92 = arith.maximumf %90, %91 : vector<16x128xf32>
    %93 = arith.truncf %92 : vector<16x128xf32> to vector<16x128xbf16>
    %c0_64 = arith.constant 0 : index
    %c0_65 = arith.constant 0 : index
    %94 = vector.load %arg5[%c0_64, %c0_65] : memref<128x128xbf16, #tpu.memory_space<vmem>>, vector<128x128xbf16>
    %cst_66 = arith.constant dense<0.000000e+00> : vector<16x128xf32>
    %95 = tpu.matmul %93, %94, %cst_66 {dimension_numbers = #tpu.dot_dimension_numbers<[1], [0], [0], [1], [0, 0, 1, 1], [], []>} : vector<16x128xbf16>, vector<128x128xbf16>, vector<16x128xf32> -> vector<16x128xf32>
    %96 = arith.addf %50, %95 : vector<16x128xf32>
    %cst_67 = arith.constant 0.000000e+00 : f32
    %97 = vector.broadcast %cst_67 : f32 to vector<16x128xf32>
    %98 = arith.maximumf %96, %97 : vector<16x128xf32>
    %99 = arith.truncf %98 : vector<16x128xf32> to vector<16x128xbf16>
    %c8_68 = arith.constant 8 : index
    %c0_69 = arith.constant 0 : index
    %100 = vector.load %arg9[%c8_68, %c0_69] : memref<32x128xbf16, #tpu.memory_space<vmem>>, vector<16x128xbf16>
    tpu.vector_store %arg9[%c8_68, %c0_69], %99 {strides = array<i32>} : memref<32x128xbf16, #tpu.memory_space<vmem>>, vector<16x128xbf16>,
    %c3_70 = arith.constant 3 : index
    %c0_71 = arith.constant 0 : index
    %101 = vector.load %arg9[%c3_70, %c0_71] : memref<32x128xbf16, #tpu.memory_space<vmem>>, vector<16x128xbf16>
    %cst_72 = arith.constant 0.000000e+00 : bf16
    %102 = vector.broadcast %cst_72 : bf16 to vector<16x128xbf16>
    %103 = vector.shape_cast %5 : vector<16x1xi1> to vector<16x1xi1>
    %104 = vector.broadcast %103 : vector<16x1xi1> to vector<16x128xi1>
    %105 = arith.select %104, %101, %102 : vector<16x128xi1>, vector<16x128xbf16>
    %c4_73 = arith.constant 4 : index
    %c0_74 = arith.constant 0 : index
    %106 = vector.load %arg9[%c4_73, %c0_74] : memref<32x128xbf16, #tpu.memory_space<vmem>>, vector<16x128xbf16>
    %c5_75 = arith.constant 5 : index
    %c0_76 = arith.constant 0 : index
    %107 = vector.load %arg9[%c5_75, %c0_76] : memref<32x128xbf16, #tpu.memory_space<vmem>>, vector<16x128xbf16>
    %cst_77 = arith.constant 0.000000e+00 : bf16
    %108 = vector.broadcast %cst_77 : bf16 to vector<16x128xbf16>
    %109 = vector.shape_cast %8 : vector<16x1xi1> to vector<16x1xi1>
    %110 = vector.broadcast %109 : vector<16x1xi1> to vector<16x128xi1>
    %111 = arith.select %110, %107, %108 : vector<16x128xi1>, vector<16x128xbf16>
    %c7_78 = arith.constant 7 : index
    %c0_79 = arith.constant 0 : index
    %112 = vector.load %arg9[%c7_78, %c0_79] : memref<32x128xbf16, #tpu.memory_space<vmem>>, vector<16x128xbf16>
    %cst_80 = arith.constant 0.000000e+00 : bf16
    %113 = vector.broadcast %cst_80 : bf16 to vector<16x128xbf16>
    %114 = vector.shape_cast %5 : vector<16x1xi1> to vector<16x1xi1>
    %115 = vector.broadcast %114 : vector<16x1xi1> to vector<16x128xi1>
    %116 = arith.select %115, %112, %113 : vector<16x128xi1>, vector<16x128xbf16>
    %c8_81 = arith.constant 8 : index
    %c0_82 = arith.constant 0 : index
    %117 = vector.load %arg9[%c8_81, %c0_82] : memref<32x128xbf16, #tpu.memory_space<vmem>>, vector<16x128xbf16>
    %c9_83 = arith.constant 9 : index
    %c0_84 = arith.constant 0 : index
    %118 = vector.load %arg9[%c9_83, %c0_84] : memref<32x128xbf16, #tpu.memory_space<vmem>>, vector<16x128xbf16>
    %cst_85 = arith.constant 0.000000e+00 : bf16
    %119 = vector.broadcast %cst_85 : bf16 to vector<16x128xbf16>
    %120 = vector.shape_cast %8 : vector<16x1xi1> to vector<16x1xi1>
    %121 = vector.broadcast %120 : vector<16x1xi1> to vector<16x128xi1>
    %122 = arith.select %121, %118, %119 : vector<16x128xi1>, vector<16x128xbf16>
    %c11_86 = arith.constant 11 : index
    %c0_87 = arith.constant 0 : index
    %123 = vector.load %arg9[%c11_86, %c0_87] : memref<32x128xbf16, #tpu.memory_space<vmem>>, vector<16x128xbf16>
    %cst_88 = arith.constant 0.000000e+00 : bf16
    %124 = vector.broadcast %cst_88 : bf16 to vector<16x128xbf16>
    %125 = vector.shape_cast %5 : vector<16x1xi1> to vector<16x1xi1>
    %126 = vector.broadcast %125 : vector<16x1xi1> to vector<16x128xi1>
    %127 = arith.select %126, %123, %124 : vector<16x128xi1>, vector<16x128xbf16>
    %c12_89 = arith.constant 12 : index
    %c0_90 = arith.constant 0 : index
    %128 = vector.load %arg9[%c12_89, %c0_90] : memref<32x128xbf16, #tpu.memory_space<vmem>>, vector<16x128xbf16>
    %c13_91 = arith.constant 13 : index
    %c0_92 = arith.constant 0 : index
    %129 = vector.load %arg9[%c13_91, %c0_92] : memref<32x128xbf16, #tpu.memory_space<vmem>>, vector<16x128xbf16>
    %cst_93 = arith.constant 0.000000e+00 : bf16
    %130 = vector.broadcast %cst_93 : bf16 to vector<16x128xbf16>
    %131 = vector.shape_cast %8 : vector<16x1xi1> to vector<16x1xi1>
    %132 = vector.broadcast %131 : vector<16x1xi1> to vector<16x128xi1>
    %133 = arith.select %132, %129, %130 : vector<16x128xi1>, vector<16x128xbf16>
    %134 = tpu.concatenate %105, %106, %111, %116, %117, %122, %127, %128, %133 in 1 : vector<16x128xbf16>, vector<16x128xbf16>, vector<16x128xbf16>, vector<16x128xbf16>, vector<16x128xbf16>, vector<16x128xbf16>, vector<16x128xbf16>, vector<16x128xbf16>, vector<16x128xbf16> -> vector<16x1152xbf16>
    %c0_94 = arith.constant 0 : index
    %c0_95 = arith.constant 0 : index
    %135 = vector.load %arg4[%c0_94, %c0_95] : memref<1152x128xbf16, #tpu.memory_space<vmem>>, vector<1152x128xbf16>
    %cst_96 = arith.constant dense<0.000000e+00> : vector<16x128xf32>
    %136 = tpu.matmul %134, %135, %cst_96 {dimension_numbers = #tpu.dot_dimension_numbers<[1], [0], [0], [1], [0, 0, 1, 1], [], []>} : vector<16x1152xbf16>, vector<1152x128xbf16>, vector<16x128xf32> -> vector<16x128xf32>
    %cst_97 = arith.constant 0.000000e+00 : f32
    %137 = vector.broadcast %cst_97 : f32 to vector<16x128xf32>
    %138 = arith.maximumf %136, %137 : vector<16x128xf32>
    %139 = arith.truncf %138 : vector<16x128xf32> to vector<16x128xbf16>
    %c0_98 = arith.constant 0 : index
    %c0_99 = arith.constant 0 : index
    %140 = vector.load %arg5[%c0_98, %c0_99] : memref<128x128xbf16, #tpu.memory_space<vmem>>, vector<128x128xbf16>
    %cst_100 = arith.constant dense<0.000000e+00> : vector<16x128xf32>
    %141 = tpu.matmul %139, %140, %cst_100 {dimension_numbers = #tpu.dot_dimension_numbers<[1], [0], [0], [1], [0, 0, 1, 1], [], []>} : vector<16x128xbf16>, vector<128x128xbf16>, vector<16x128xf32> -> vector<16x128xf32>
    %142 = arith.addf %96, %141 : vector<16x128xf32>
    %cst_101 = arith.constant 0.000000e+00 : f32
    %143 = vector.broadcast %cst_101 : f32 to vector<16x128xf32>
    %144 = arith.maximumf %142, %143 : vector<16x128xf32>
    %c0_102 = arith.constant 0 : index
    %c0_103 = arith.constant 0 : index
    %c0_104 = arith.constant 0 : index
    %145 = vector.load %arg8[%c0_102, %c0_103, %c0_104] : memref<1x16x128xf32, #tpu.memory_space<vmem>>, vector<1x16x128xf32>
    %146 = vector.shape_cast %145 : vector<1x16x128xf32> to vector<16x128xf32>
    %147 = vector.shape_cast %144 : vector<16x128xf32> to vector<1x16x128xf32>
    tpu.vector_store %arg8[%c0_102, %c0_103, %c0_104], %147 {strides = array<i32>} : memref<1x16x128xf32, #tpu.memory_space<vmem>>, vector<1x16x128xf32>,
    return
  }
  func.func @transform_0(%arg0: i32) -> (i32, i32, i32) {
    %c0_i32 = arith.constant 0 : i32
    %c0_i32_0 = arith.constant 0 : i32
    %c0_i32_1 = arith.constant 0 : i32
    return %arg0, %c0_i32, %c0_i32_0 : i32, i32, i32
  }
  func.func @transform_1(%arg0: i32) -> (i32, i32) {
    %c0_i32 = arith.constant 0 : i32
    %c0_i32_0 = arith.constant 0 : i32
    %c0_i32_1 = arith.constant 0 : i32
    return %c0_i32, %c0_i32_0 : i32, i32
  }
  func.func @transform_2(%arg0: i32) -> (i32, i32) {
    %c0_i32 = arith.constant 0 : i32
    %c0_i32_0 = arith.constant 0 : i32
    %c0_i32_1 = arith.constant 0 : i32
    return %c0_i32, %c0_i32_0 : i32, i32
  }
  func.func @transform_3(%arg0: i32) -> (i32, i32) {
    %c0_i32 = arith.constant 0 : i32
    %c0_i32_0 = arith.constant 0 : i32
    %c0_i32_1 = arith.constant 0 : i32
    return %c0_i32, %c0_i32_0 : i32, i32
  }
  func.func @transform_4(%arg0: i32) -> (i32, i32) {
    %c0_i32 = arith.constant 0 : i32
    %c0_i32_0 = arith.constant 0 : i32
    %c0_i32_1 = arith.constant 0 : i32
    return %c0_i32, %c0_i32_0 : i32, i32
  }
  func.func @transform_5(%arg0: i32) -> (i32, i32) {
    %c0_i32 = arith.constant 0 : i32
    %c0_i32_0 = arith.constant 0 : i32
    %c0_i32_1 = arith.constant 0 : i32
    return %c0_i32, %c0_i32_0 : i32, i32
  }
  func.func @transform_6(%arg0: i32) -> (i32, i32) {
    %c0_i32 = arith.constant 0 : i32
    %c0_i32_0 = arith.constant 0 : i32
    %c0_i32_1 = arith.constant 0 : i32
    return %c0_i32, %c0_i32_0 : i32, i32
  }
  func.func @transform_7(%arg0: i32) -> (i32, i32, i32) {
    %c0_i32 = arith.constant 0 : i32
    %c0_i32_0 = arith.constant 0 : i32
    %c0_i32_1 = arith.constant 0 : i32
    return %arg0, %c0_i32, %c0_i32_0 : i32, i32, i32
  }
}

</mosaic_0001>

<llo_original>
// kernel: encoder_forward.3
$region0: #{encoder_forward.3}
  #allocation0 [shape = 'u32[]', space=smem, size = 0x4, offset = 0x4, fixed_abs, tag = 'smem constant byte address 0x4 - core index']
  #allocation1 [shape = 'u32[144,128]{1,0:T(1,128)}', space=vmem, size = 0x12000, scoped, tag = 'internal scratch']
  %s0 = inlined_call_operand.vmem [shape: bf16[128,64], index: 0, kind: input, shape index: {}]
  %s1 = inlined_call_operand.vmem [shape: bf16[64,128], index: 1, kind: input, shape index: {}]
  %s2 = inlined_call_operand.vmem [shape: f32[1,128], index: 2, kind: input, shape index: {}]
  %s3 = inlined_call_operand.vmem [shape: bf16[128,128], index: 3, kind: output, shape index: {}]
  %s4 = sld [smem:[#allocation0]]
  $region22: #{encoder_forward.3} parent=0
    _
  %s6 = ssub.s32 1, %s4
  %s7 = scalar_select 0, %s6, %s4
  // Predicated region
  $region2: #{encoder_forward.3} parent=0 // pred_check
    _
  $region3: #{encoder_forward.3} parent=0 // pred_check_branch
    %9 = sbr.rel (0) target = $region5
  $region4: #{encoder_forward.3} parent=0 // pred_region
    _
  $region5: #{encoder_forward.3} parent=0 // pred_fallthru
    _
  // Predicated region
  $region6: #{encoder_forward.3} parent=0 // pred_check
    _
  $region7: #{encoder_forward.3} parent=0 // pred_check_branch
    %11 = sbr.rel (0) target = $region9
  $region8: #{encoder_forward.3} parent=0 // pred_region
    _
  $region9: #{encoder_forward.3} parent=0 // pred_fallthru
    _
  // Predicated region
  $region10: #{encoder_forward.3} parent=0 // pred_check
    _
  $region11: #{encoder_forward.3} parent=0 // pred_check_branch
    %13 = sbr.rel (0) target = $region13
  $region12: #{encoder_forward.3} parent=0 // pred_region
    _
  $region13: #{encoder_forward.3} parent=0 // pred_fallthru
    _
  %v15 = vld [vmem:[%s0] sm:$0xf]
  %v16 = vld [vmem:[%s0 + $0x4] sm:$0xf]
  %v17 = vld [vmem:[%s0 + $0x8] sm:$0xf]
  %v18 = vld [vmem:[%s0 + $0xc] sm:$0xf]
  %v19 = vld [vmem:[%s0 + $0x10] sm:$0xf]
  %v20 = vld [vmem:[%s0 + $0x14] sm:$0xf]
  %v21 = vld [vmem:[%s0 + $0x18] sm:$0xf]
  %v22 = vld [vmem:[%s0 + $0x1c] sm:$0xf]
  %v23 = vld [vmem:[%s0 + $0x20] sm:$0xf]
  %v24 = vld [vmem:[%s0 + $0x24] sm:$0xf]
  %v25 = vld [vmem:[%s0 + $0x28] sm:$0xf]
  %v26 = vld [vmem:[%s0 + $0x2c] sm:$0xf]
  %v27 = vld [vmem:[%s0 + $0x30] sm:$0xf]
  %v28 = vld [vmem:[%s0 + $0x34] sm:$0xf]
  %v29 = vld [vmem:[%s0 + $0x38] sm:$0xf]
  %v30 = vld [vmem:[%s0 + $0x3c] sm:$0xf]
  %v31 = vld [vmem:[%s1] sm:$0xf]
  %v32 = vld [vmem:[%s1 + $0x4] sm:$0xf]
  %v33 = vld [vmem:[%s1 + $0x8] sm:$0xf]
  %v34 = vld [vmem:[%s1 + $0xc] sm:$0xf]
  %v35 = vld [vmem:[%s1 + $0x10] sm:$0xf]
  %v36 = vld [vmem:[%s1 + $0x14] sm:$0xf]
  %v37 = vld [vmem:[%s1 + $0x18] sm:$0xf]
  %v38 = vld [vmem:[%s1 + $0x1c] sm:$0xf]
  %v39 = vld [vmem:[%s2] sm:$0x1]
  %v41 = vlaneseq
  %v42 = vshrl.u32 %v41, 7
  %v43 = vsub.s32 0, %v42
  %v44 = vrot.slane %v39, %v43
  %v62 = vunpack.c.l.b16 %v15
  %v63 = vunpack.c.l.b16 %v16
  %v64 = vunpack.c.l.b16 %v17
  %v65 = vunpack.c.l.b16 %v18
  %v66 = vunpack.c.l.b16 %v19
  %v67 = vunpack.c.l.b16 %v20
  %v68 = vunpack.c.l.b16 %v21
  %v69 = vunpack.c.l.b16 %v22
  %v70 = vunpack.c.l.b16 %v23
  %v71 = vunpack.c.l.b16 %v24
  %v72 = vunpack.c.l.b16 %v25
  %v73 = vunpack.c.l.b16 %v26
  %v74 = vunpack.c.l.b16 %v27
  %v75 = vunpack.c.l.b16 %v28
  %v76 = vunpack.c.l.b16 %v29
  %v77 = vunpack.c.l.b16 %v30
  %v78 = vpack.c.b16 %v63, %v62
  %v79 = vpack.c.b16 %v65, %v64
  %v80 = vpack.c.b16 %v67, %v66
  %v81 = vpack.c.b16 %v69, %v68
  %v82 = vpack.c.b16 %v71, %v70
  %v83 = vpack.c.b16 %v73, %v72
  %v84 = vpack.c.b16 %v75, %v74
  %v85 = vpack.c.b16 %v77, %v76
  %v94 = vunpack.c.l.b16 %v31
  %v95 = vunpack.c.l.b16 %v32
  %v96 = vunpack.c.l.b16 %v33
  %v97 = vunpack.c.l.b16 %v34
  %v98 = vunpack.c.l.b16 %v35
  %v99 = vunpack.c.l.b16 %v36
  %v100 = vunpack.c.l.b16 %v37
  %v101 = vunpack.c.l.b16 %v38
  %v102 = vpack.c.b16 %v95, %v94
  %v103 = vpack.c.b16 %v97, %v96
  %v104 = vpack.c.b16 %v99, %v98
  %v105 = vpack.c.b16 %v101, %v100
  %vm110 = vcmask 523264
  %v112 = vsel %vm110, %v78, 0
  %v115 = vsel %vm110, %v79, 0
  %v118 = vsel %vm110, %v80, 0
  %v121 = vsel %vm110, %v81, 0
  %v124 = vsel %vm110, %v82, 0
  %v127 = vsel %vm110, %v83, 0
  %v130 = vsel %vm110, %v84, 0
  %v133 = vsel %vm110, %v85, 0
  %135 = vmatprep.subr.bf16.mxu0 0
  %136 = vmatpush1.bf16.msra.mxu0 0
  %137 = vmatprep.subr.bf16.mxu0 0
  %138 = vmatpush1.bf16.msra.mxu0 0
  %139 = vmatprep.subr.bf16.mxu0 0
  %140 = vmatpush1.bf16.msra.mxu0 0
  %141 = vmatprep.subr.bf16.mxu0 0
  %142 = vmatpush1.bf16.msra.mxu0 0
  %143 = vmatprep.subr.bf16.mxu0 0
  %144 = vmatpush1.bf16.msra.mxu0 %v105
  %145 = vmatprep.subr.bf16.mxu0 0
  %146 = vmatpush1.bf16.msra.mxu0 %v104
  %147 = vmatprep.subr.bf16.mxu0 0
  %148 = vmatpush1.bf16.msra.mxu0 %v103
  %149 = vmatprep.subr.bf16.mxu0 0
  %150 = vmatpush1.bf16.msra.mxu0 %v102
  %151 = vmatprep.subr.bf16.mxu0 0
  %152 = vmatpush2.bf16.msra.mxu0 0
  %153 = vmatprep.subr.bf16.mxu0 0
  %154 = vmatpush2.bf16.msra.mxu0 0
  %155 = vmatprep.subr.bf16.mxu0 0
  %156 = vmatpush2.bf16.msra.mxu0 0
  %157 = vmatprep.subr.bf16.mxu0 0
  %158 = vmatpush2.bf16.msra.mxu0 0
  %159 = vmatprep.subr.bf16.mxu0 0
  %160 = vmatpush2.bf16.msra.mxu0 0
  %161 = vmatprep.subr.bf16.mxu0 0
  %162 = vmatpush2.bf16.msra.mxu0 0
  %163 = vmatprep.subr.bf16.mxu0 0
  %164 = vmatpush2.bf16.msra.mxu0 0
  %165 = vmatprep.subr.bf16.mxu0 0
  %166 = vmatpush2.bf16.msra.mxu0 0
  %167 = vmatprep.mubr.bf16.mxu0 0
  %168 = vmatmul.mubr.bf16.gmra.mxu0 %v112
  %v169 = vpop.f32.mrf.mxu0
  %v170 = vadd.f32 %v44, %v169
  %v171 = vpop.f32.mrf.mxu0
  %v172 = vpop.f32.mrf.mxu0
  %v173 = vadd.f32 %v44, %v172
  %v174 = vpop.f32.mrf.mxu0
  %175 = vmatprep.mubr.bf16.mxu0 0
  %176 = vmatmul.mubr.bf16.gmra.mxu0 %v115
  %v177 = vpop.f32.mrf.mxu0
  %v178 = vadd.f32 %v44, %v177
  %v179 = vpop.f32.mrf.mxu0
  %v180 = vpop.f32.mrf.mxu0
  %v181 = vadd.f32 %v44, %v180
  %v182 = vpop.f32.mrf.mxu0
  %183 = vmatprep.mubr.bf16.mxu0 0
  %184 = vmatmul.mubr.bf16.gmra.mxu0 %v118
  %v185 = vpop.f32.mrf.mxu0
  %v186 = vadd.f32 %v44, %v185
  %v187 = vpop.f32.mrf.mxu0
  %v188 = vpop.f32.mrf.mxu0
  %v189 = vadd.f32 %v44, %v188
  %v190 = vpop.f32.mrf.mxu0
  %191 = vmatprep.mubr.bf16.mxu0 0
  %192 = vmatmul.mubr.bf16.gmra.mxu0 %v121
  %v193 = vpop.f32.mrf.mxu0
  %v194 = vadd.f32 %v44, %v193
  %v195 = vpop.f32.mrf.mxu0
  %v196 = vpop.f32.mrf.mxu0
  %v197 = vadd.f32 %v44, %v196
  %v198 = vpop.f32.mrf.mxu0
  %199 = vmatprep.mubr.bf16.mxu0 0
  %200 = vmatmul.mubr.bf16.gmra.mxu0 %v124
  %v201 = vpop.f32.mrf.mxu0
  %v202 = vadd.f32 %v44, %v201
  %v203 = vpop.f32.mrf.mxu0
  %v204 = vpop.f32.mrf.mxu0
  %v205 = vadd.f32 %v44, %v204
  %v206 = vpop.f32.mrf.mxu0
  %207 = vmatprep.mubr.bf16.mxu0 0
  %208 = vmatmul.mubr.bf16.gmra.mxu0 %v127
  %v209 = vpop.f32.mrf.mxu0
  %v210 = vadd.f32 %v44, %v209
  %v211 = vpop.f32.mrf.mxu0
  %v212 = vpop.f32.mrf.mxu0
  %v213 = vadd.f32 %v44, %v212
  %v214 = vpop.f32.mrf.mxu0
  %215 = vmatprep.mubr.bf16.mxu0 0
  %216 = vmatmul.mubr.bf16.gmra.mxu0 %v130
  %v217 = vpop.f32.mrf.mxu0
  %v218 = vadd.f32 %v44, %v217
  %v219 = vpop.f32.mrf.mxu0
  %v220 = vpop.f32.mrf.mxu0
  %v221 = vadd.f32 %v44, %v220
  %v222 = vpop.f32.mrf.mxu0
  %223 = vmatprep.mubr.bf16.mxu0 0
  %224 = vmatmul.mubr.bf16.gmra.mxu0 %v133
  %v225 = vpop.f32.mrf.mxu0
  %v226 = vadd.f32 %v44, %v225
  %v227 = vpop.f32.mrf.mxu0
  %v228 = vpop.f32.mrf.mxu0
  %v229 = vadd.f32 %v44, %v228
  %v230 = vpop.f32.mrf.mxu0
  %231 = vdwg.mxu0
  %v232 = vmax.f32 %v170, 0.0
  %v233 = vmax.f32 %v173, 0.0
  %v234 = vmax.f32 %v178, 0.0
  %v235 = vmax.f32 %v181, 0.0
  %v236 = vmax.f32 %v186, 0.0
  %v237 = vmax.f32 %v189, 0.0
  %v238 = vmax.f32 %v194, 0.0
  %v239 = vmax.f32 %v197, 0.0
  %v240 = vmax.f32 %v202, 0.0
  %v241 = vmax.f32 %v205, 0.0
  %v242 = vmax.f32 %v210, 0.0
  %v243 = vmax.f32 %v213, 0.0
  %v244 = vmax.f32 %v218, 0.0
  %v245 = vmax.f32 %v221, 0.0
  %v246 = vmax.f32 %v226, 0.0
  %v247 = vmax.f32 %v229, 0.0
  %v248 = vpack.c.bf16 %v233, %v232
  %v249 = vpack.c.bf16 %v235, %v234
  %v250 = vpack.c.bf16 %v237, %v236
  %v251 = vpack.c.bf16 %v239, %v238
  %v252 = vpack.c.bf16 %v241, %v240
  %v253 = vpack.c.bf16 %v243, %v242
  %v254 = vpack.c.bf16 %v245, %v244
  %v255 = vpack.c.bf16 %v247, %v246
  %v264 = vunpack.c.l.b16 %v248
  %v265 = vunpack.c.h.b16 %v248
  %v266 = vunpack.c.l.b16 %v249
  %v267 = vunpack.c.h.b16 %v249
  %v268 = vunpack.c.l.b16 %v250
  %v269 = vunpack.c.h.b16 %v250
  %v270 = vunpack.c.l.b16 %v251
  %v271 = vunpack.c.h.b16 %v251
  %v272 = vunpack.c.l.b16 %v252
  %v273 = vunpack.c.h.b16 %v252
  %v274 = vunpack.c.l.b16 %v253
  %v275 = vunpack.c.h.b16 %v253
  %v276 = vunpack.c.l.b16 %v254
  %v277 = vunpack.c.h.b16 %v254
  %v278 = vunpack.c.l.b16 %v255
  %v279 = vunpack.c.h.b16 %v255
  %v280 = vpack.c.b16 %v264, %v264
  %v281 = vpack.c.b16 %v265, %v265
  %v282 = vpack.c.b16 %v266, %v266
  %v283 = vpack.c.b16 %v267, %v267
  %v284 = vpack.c.b16 %v268, %v268
  %v285 = vpack.c.b16 %v269, %v269
  %v286 = vpack.c.b16 %v270, %v270
  %v287 = vpack.c.b16 %v271, %v271
  %v288 = vpack.c.b16 %v272, %v272
  %v289 = vpack.c.b16 %v273, %v273
  %v290 = vpack.c.b16 %v274, %v274
  %v291 = vpack.c.b16 %v275, %v275
  %v292 = vpack.c.b16 %v276, %v276
  %v293 = vpack.c.b16 %v277, %v277
  %v294 = vpack.c.b16 %v278, %v278
  %v295 = vpack.c.b16 %v279, %v279
  %312 = vst [vmem:[%s3] sm:$0xf] %v280
  %313 = vst [vmem:[%s3 + $0x4] sm:$0xf] %v281
  %314 = vst [vmem:[%s3 + $0x8] sm:$0xf] %v282
  %315 = vst [vmem:[%s3 + $0xc] sm:$0xf] %v283
  %316 = vst [vmem:[%s3 + $0x10] sm:$0xf] %v284
  %317 = vst [vmem:[%s3 + $0x14] sm:$0xf] %v285
  %318 = vst [vmem:[%s3 + $0x18] sm:$0xf] %v286
  %319 = vst [vmem:[%s3 + $0x1c] sm:$0xf] %v287
  %320 = vst [vmem:[%s3 + $0x20] sm:$0xf] %v288
  %321 = vst [vmem:[%s3 + $0x24] sm:$0xf] %v289
  %322 = vst [vmem:[%s3 + $0x28] sm:$0xf] %v290
  %323 = vst [vmem:[%s3 + $0x2c] sm:$0xf] %v291
  %324 = vst [vmem:[%s3 + $0x30] sm:$0xf] %v292
  %325 = vst [vmem:[%s3 + $0x34] sm:$0xf] %v293
  %326 = vst [vmem:[%s3 + $0x38] sm:$0xf] %v294
  %327 = vst [vmem:[%s3 + $0x3c] sm:$0xf] %v295
  // Predicated region
  $region14: #{encoder_forward.3} parent=0 // pred_check
    _
  $region15: #{encoder_forward.3} parent=0 // pred_check_branch
    %329 = sbr.rel (0) target = $region17
  $region16: #{encoder_forward.3} parent=0 // pred_region
    _
  $region17: #{encoder_forward.3} parent=0 // pred_fallthru
    _
  // Predicated region
  $region18: #{encoder_forward.3} parent=0 // pred_check
    _
  $region19: #{encoder_forward.3} parent=0 // pred_check_branch
    %331 = sbr.rel (0) target = $region21
  $region20: #{encoder_forward.3} parent=0 // pred_region
    _
  $region21: #{encoder_forward.3} parent=0 // pred_fallthru
    _

// kernel: encoder_forward.4
$region0: #{encoder_forward.4}
  #allocation0 [shape = 'u32[]', space=smem, size = 0x4, offset = 0x4, fixed_abs, tag = 'smem constant byte address 0x4 - core index']
  #allocation1 [shape = 'u32[144,128]{1,0:T(1,128)}', space=vmem, size = 0x12000, scoped, tag = 'internal scratch']
  %s0 = inlined_call_operand.vmem [shape: bf16[32,256], index: 0, kind: input, shape index: {}]
  %s1 = inlined_call_operand.vmem [shape: bf16[256,128], index: 1, kind: input, shape index: {}]
  %s2 = inlined_call_operand.vmem [shape: f32[1,128], index: 2, kind: input, shape index: {}]
  %s3 = inlined_call_operand.vmem [shape: bf16[32,128], index: 3, kind: output, shape index: {}]
  %s4 = sld [smem:[#allocation0]]
  $region22: #{encoder_forward.4} parent=0
    _
  %s6 = ssub.s32 1, %s4
  %s7 = scalar_select 0, %s6, %s4
  // Predicated region
  $region2: #{encoder_forward.4} parent=0 // pred_check
    _
  $region3: #{encoder_forward.4} parent=0 // pred_check_branch
    %9 = sbr.rel (0) target = $region5
  $region4: #{encoder_forward.4} parent=0 // pred_region
    _
  $region5: #{encoder_forward.4} parent=0 // pred_fallthru
    _
  // Predicated region
  $region6: #{encoder_forward.4} parent=0 // pred_check
    _
  $region7: #{encoder_forward.4} parent=0 // pred_check_branch
    %11 = sbr.rel (0) target = $region9
  $region8: #{encoder_forward.4} parent=0 // pred_region
    _
  $region9: #{encoder_forward.4} parent=0 // pred_fallthru
    _
  // Predicated region
  $region10: #{encoder_forward.4} parent=0 // pred_check
    _
  $region11: #{encoder_forward.4} parent=0 // pred_check_branch
    %13 = sbr.rel (0) target = $region13
  $region12: #{encoder_forward.4} parent=0 // pred_region
    _
  $region13: #{encoder_forward.4} parent=0 // pred_fallthru
    _
  %v15 = vld [vmem:[%s0] sm:$0xff]
  %v16 = vld [vmem:[%s0 + $0x8] sm:$0xff]
  %v17 = vld [vmem:[%s0 + $0x10] sm:$0xff]
  %v18 = vld [vmem:[%s0 + $0x18] sm:$0xff]
  %v19 = vld [vmem:[%s1] sm:$0xf]
  %v20 = vld [vmem:[%s1 + $0x4] sm:$0xf]
  %v21 = vld [vmem:[%s1 + $0x8] sm:$0xf]
  %v22 = vld [vmem:[%s1 + $0xc] sm:$0xf]
  %v23 = vld [vmem:[%s1 + $0x10] sm:$0xf]
  %v24 = vld [vmem:[%s1 + $0x14] sm:$0xf]
  %v25 = vld [vmem:[%s1 + $0x18] sm:$0xf]
  %v26 = vld [vmem:[%s1 + $0x1c] sm:$0xf]
  %v27 = vld [vmem:[%s1 + $0x20] sm:$0xf]
  %v28 = vld [vmem:[%s1 + $0x24] sm:$0xf]
  %v29 = vld [vmem:[%s1 + $0x28] sm:$0xf]
  %v30 = vld [vmem:[%s1 + $0x2c] sm:$0xf]
  %v31 = vld [vmem:[%s1 + $0x30] sm:$0xf]
  %v32 = vld [vmem:[%s1 + $0x34] sm:$0xf]
  %v33 = vld [vmem:[%s1 + $0x38] sm:$0xf]
  %v34 = vld [vmem:[%s1 + $0x3c] sm:$0xf]
  %v35 = vld [vmem:[%s1 + $0x40] sm:$0xf]
  %v36 = vld [vmem:[%s1 + $0x44] sm:$0xf]
  %v37 = vld [vmem:[%s1 + $0x48] sm:$0xf]
  %v38 = vld [vmem:[%s1 + $0x4c] sm:$0xf]
  %v39 = vld [vmem:[%s1 + $0x50] sm:$0xf]
  %v40 = vld [vmem:[%s1 + $0x54] sm:$0xf]
  %v41 = vld [vmem:[%s1 + $0x58] sm:$0xf]
  %v42 = vld [vmem:[%s1 + $0x5c] sm:$0xf]
  %v43 = vld [vmem:[%s1 + $0x60] sm:$0xf]
  %v44 = vld [vmem:[%s1 + $0x64] sm:$0xf]
  %v45 = vld [vmem:[%s1 + $0x68] sm:$0xf]
  %v46 = vld [vmem:[%s1 + $0x6c] sm:$0xf]
  %v47 = vld [vmem:[%s1 + $0x70] sm:$0xf]
  %v48 = vld [vmem:[%s1 + $0x74] sm:$0xf]
  %v49 = vld [vmem:[%s1 + $0x78] sm:$0xf]
  %v50 = vld [vmem:[%s1 + $0x7c] sm:$0xf]
  %v51 = vld [vmem:[%s2] sm:$0x1]
  %v53 = vlaneseq
  %v54 = vshrl.u32 %v53, 7
  %v55 = vsub.s32 0, %v54
  %v56 = vrot.slane %v51, %v55
  %v62 = vunpack.c.l.b16 %v15
  %v63 = vunpack.c.h.b16 %v15
  %v64 = vunpack.c.l.b16 %v16
  %v65 = vunpack.c.h.b16 %v16
  %v66 = vunpack.c.l.b16 %v17
  %v67 = vunpack.c.h.b16 %v17
  %v68 = vunpack.c.l.b16 %v18
  %v69 = vunpack.c.h.b16 %v18
  %v70 = vpack.c.b16 %v64, %v62
  %v71 = vpack.c.b16 %v65, %v63
  %v72 = vpack.c.b16 %v68, %v66
  %v73 = vpack.c.b16 %v69, %v67
  %v110 = vunpack.c.l.b16 %v19
  %v111 = vunpack.c.l.b16 %v20
  %v112 = vunpack.c.l.b16 %v21
  %v113 = vunpack.c.l.b16 %v22
  %v114 = vunpack.c.l.b16 %v23
  %v115 = vunpack.c.l.b16 %v24
  %v116 = vunpack.c.l.b16 %v25
  %v117 = vunpack.c.l.b16 %v26
  %v118 = vunpack.c.l.b16 %v27
  %v119 = vunpack.c.l.b16 %v28
  %v120 = vunpack.c.l.b16 %v29
  %v121 = vunpack.c.l.b16 %v30
  %v122 = vunpack.c.l.b16 %v31
  %v123 = vunpack.c.l.b16 %v32
  %v124 = vunpack.c.l.b16 %v33
  %v125 = vunpack.c.l.b16 %v34
  %v126 = vunpack.c.l.b16 %v35
  %v127 = vunpack.c.l.b16 %v36
  %v128 = vunpack.c.l.b16 %v37
  %v129 = vunpack.c.l.b16 %v38
  %v130 = vunpack.c.l.b16 %v39
  %v131 = vunpack.c.l.b16 %v40
  %v132 = vunpack.c.l.b16 %v41
  %v133 = vunpack.c.l.b16 %v42
  %v134 = vunpack.c.l.b16 %v43
  %v135 = vunpack.c.l.b16 %v44
  %v136 = vunpack.c.l.b16 %v45
  %v137 = vunpack.c.l.b16 %v46
  %v138 = vunpack.c.l.b16 %v47
  %v139 = vunpack.c.l.b16 %v48
  %v140 = vunpack.c.l.b16 %v49
  %v141 = vunpack.c.l.b16 %v50
  %v142 = vpack.c.b16 %v111, %v110
  %v143 = vpack.c.b16 %v113, %v112
  %v144 = vpack.c.b16 %v115, %v114
  %v145 = vpack.c.b16 %v117, %v116
  %v146 = vpack.c.b16 %v119, %v118
  %v147 = vpack.c.b16 %v121, %v120
  %v148 = vpack.c.b16 %v123, %v122
  %v149 = vpack.c.b16 %v125, %v124
  %v150 = vpack.c.b16 %v127, %v126
  %v151 = vpack.c.b16 %v129, %v128
  %v152 = vpack.c.b16 %v131, %v130
  %v153 = vpack.c.b16 %v133, %v132
  %v154 = vpack.c.b16 %v135, %v134
  %v155 = vpack.c.b16 %v137, %v136
  %v156 = vpack.c.b16 %v139, %v138
  %v157 = vpack.c.b16 %v141, %v140
  %174 = vmatprep.subr.bf16.mxu0 0
  %175 = vmatpush1.bf16.msra.mxu0 %v149
  %176 = vmatprep.subr.bf16.mxu0 0
  %177 = vmatpush1.bf16.msra.mxu0 %v148
  %178 = vmatprep.subr.bf16.mxu0 0
  %179 = vmatpush1.bf16.msra.mxu0 %v147
  %180 = vmatprep.subr.bf16.mxu0 0
  %181 = vmatpush1.bf16.msra.mxu0 %v146
  %182 = vmatprep.subr.bf16.mxu0 0
  %183 = vmatpush1.bf16.msra.mxu0 %v145
  %184 = vmatprep.subr.bf16.mxu0 0
  %185 = vmatpush1.bf16.msra.mxu0 %v144
  %186 = vmatprep.subr.bf16.mxu0 0
  %187 = vmatpush1.bf16.msra.mxu0 %v143
  %188 = vmatprep.subr.bf16.mxu0 0
  %189 = vmatpush1.bf16.msra.mxu0 %v142
  %190 = vmatprep.subr.bf16.mxu0 0
  %191 = vmatpush2.bf16.msra.mxu0 %v157
  %192 = vmatprep.subr.bf16.mxu0 0
  %193 = vmatpush2.bf16.msra.mxu0 %v156
  %194 = vmatprep.subr.bf16.mxu0 0
  %195 = vmatpush2.bf16.msra.mxu0 %v155
  %196 = vmatprep.subr.bf16.mxu0 0
  %197 = vmatpush2.bf16.msra.mxu0 %v154
  %198 = vmatprep.subr.bf16.mxu0 0
  %199 = vmatpush2.bf16.msra.mxu0 %v153
  %200 = vmatprep.subr.bf16.mxu0 0
  %201 = vmatpush2.bf16.msra.mxu0 %v152
  %202 = vmatprep.subr.bf16.mxu0 0
  %203 = vmatpush2.bf16.msra.mxu0 %v151
  %204 = vmatprep.subr.bf16.mxu0 0
  %205 = vmatpush2.bf16.msra.mxu0 %v150
  %206 = vmatprep.mubr.bf16.mxu0 %v71
  %207 = vmatmul.mubr.bf16.gmra.mxu0 %v70
  %v208 = vpop.f32.mrf.mxu0
  %v209 = vadd.f32 %v56, %v208
  %v210 = vpop.f32.mrf.mxu0
  %v211 = vpop.f32.mrf.mxu0
  %v212 = vadd.f32 %v56, %v211
  %v213 = vpop.f32.mrf.mxu0
  %214 = vmatprep.mubr.bf16.mxu0 %v73
  %215 = vmatmul.mubr.bf16.gmra.mxu0 %v72
  %v216 = vpop.f32.mrf.mxu0
  %v217 = vadd.f32 %v56, %v216
  %v218 = vpop.f32.mrf.mxu0
  %v219 = vpop.f32.mrf.mxu0
  %v220 = vadd.f32 %v56, %v219
  %v221 = vpop.f32.mrf.mxu0
  %222 = vdwg.mxu0
  %v223 = vmax.f32 %v209, 0.0
  %v224 = vmax.f32 %v212, 0.0
  %v225 = vmax.f32 %v217, 0.0
  %v226 = vmax.f32 %v220, 0.0
  %v227 = vpack.c.bf16 %v224, %v223
  %v228 = vpack.c.bf16 %v226, %v225
  %v231 = vunpack.c.l.b16 %v227
  %v232 = vunpack.c.h.b16 %v227
  %v233 = vunpack.c.l.b16 %v228
  %v234 = vunpack.c.h.b16 %v228
  %v235 = vpack.c.b16 %v231, %v231
  %v236 = vpack.c.b16 %v232, %v232
  %v237 = vpack.c.b16 %v233, %v233
  %v238 = vpack.c.b16 %v234, %v234
  %243 = vst [vmem:[%s3] sm:$0xf] %v235
  %244 = vst [vmem:[%s3 + $0x4] sm:$0xf] %v236
  %245 = vst [vmem:[%s3 + $0x8] sm:$0xf] %v237
  %246 = vst [vmem:[%s3 + $0xc] sm:$0xf] %v238
  // Predicated region
  $region14: #{encoder_forward.4} parent=0 // pred_check
    _
  $region15: #{encoder_forward.4} parent=0 // pred_check_branch
    %248 = sbr.rel (0) target = $region17
  $region16: #{encoder_forward.4} parent=0 // pred_region
    _
  $region17: #{encoder_forward.4} parent=0 // pred_fallthru
    _
  // Predicated region
  $region18: #{encoder_forward.4} parent=0 // pred_check
    _
  $region19: #{encoder_forward.4} parent=0 // pred_check_branch
    %250 = sbr.rel (0) target = $region21
  $region20: #{encoder_forward.4} parent=0 // pred_region
    _
  $region21: #{encoder_forward.4} parent=0 // pred_fallthru
    _

// kernel: encoder_forward.5
$region0: #{encoder_forward.5}
  #allocation0 [shape = 'u32[]', space=smem, size = 0x4, offset = 0x4, fixed_abs, tag = 'smem constant byte address 0x4 - core index']
  #allocation1 [shape = 'u32[144,128]{1,0:T(1,128)}', space=vmem, size = 0x12000, scoped, tag = 'internal scratch']
  #allocation2 [shape = 'bf16[32,128]{1,0:T(8,128)(2,1)}', space=vmem, size = 0x2000, scoped, tag = 'scratch operand']
  %s0 = inlined_call_operand.vmem [shape: bf16[2,16,128], index: 0, kind: input, shape index: {}]
  %s1 = inlined_call_operand.vmem [shape: bf16[1152,128], index: 1, kind: input, shape index: {}]
  %s2 = inlined_call_operand.vmem [shape: f32[1,128], index: 2, kind: input, shape index: {}]
  %s3 = inlined_call_operand.vmem [shape: bf16[1152,128], index: 3, kind: input, shape index: {}]
  %s4 = inlined_call_operand.vmem [shape: bf16[128,128], index: 4, kind: input, shape index: {}]
  %s5 = inlined_call_operand.vmem [shape: f32[16,1], index: 5, kind: input, shape index: {}]
  %s6 = inlined_call_operand.vmem [shape: f32[16,1], index: 6, kind: input, shape index: {}]
  %s7 = inlined_call_operand.hbm [shape: f32[2,16,128], index: 7, kind: output, shape index: {}]
  %s8 = sld [smem:[#allocation0]]
  $region61: #{encoder_forward.5} parent=0
    _
  %s10 = ssub.s32 1, %s8
  %s11 = scalar_select 0, %s10, %s8
  $region1: #{encoder_forward.5} parent=0
    #allocation3 [shape = 'u8[16384]{0}', space=vmem, size = 0x4000, scoped, tag = 'output window, operand 0']
    #allocation4 [shape = 's32[2]{0}', space=sflag, size = 0x8, scoped, tag = 'scoped memory for encoder_forward.5']
    %12 = vsyncpa [#allocation4], 0
    %s13 = scalar_lea.sflag [#allocation4], 1
    %14 = vsyncpa %s13, 0
    loop: start=0, step=1, limit=4
    $region2: #{encoder_forward.5} parent=1 // loop_pre_header
      _
    $region3: #{encoder_forward.5} parent=1 // loop_header
      %s16 = sphi 0, %s20
      %p17 = scmp.ge.s32.totalorder %s16, 4
      %s26 = sphi 0, %s28
      %s29 = sphi 0, %s26
      %s30 = sphi 0, %s29
      %s46 = sphi 0, %s30
      %s50 = sphi 0, %s50
      %s52 = sphi 0, %s50
      %s53 = sphi 0, %s52
      %s67 = sphi 0, %s53
      %s71 = sphi 0, %s71
      %s73 = sphi 0, %s71
      %s74 = sphi 0, %s73
      %s88 = sphi 0, %s74
      %s92 = sphi 0, %s92
      %s94 = sphi 0, %s92
      %s95 = sphi 0, %s94
      %s109 = sphi 0, %s95
      %s113 = sphi 0, %s113
      %s115 = sphi 0, %s113
      %s116 = sphi 0, %s115
      %s130 = sphi 0, %s116
      %s134 = sphi 0, %s134
      %s136 = sphi 0, %s134
      %s137 = sphi 0, %s136
      %s151 = sphi 0, %s137
      %s155 = sphi 0, %s155
      %s157 = sphi 0, %s155
      %s158 = sphi 0, %s157
      %s172 = sphi 0, %s158
      %s178 = sphi 0, %s180
      %s181 = sphi 0, %s178
      %s182 = sphi 0, %s181
      %s198 = sphi 0, %s182
    $region4: #{encoder_forward.5} parent=1 // loop_header_branch
      %19 = sbr.rel (%p17) target = $region8
    $region5: #{encoder_forward.5} parent=1 // loop_body
      %s21 = ssub.s32 %s16, 1
      %s22 = ssub.s32 %s16, 2
      %s23 = sadd.s32 %s16, 1
      %s24 = ssub.s32 %s16, %s23
      %p25 = scmp.eq.s32.totalorder %s24, 0
      %s27 = sadd.s32 %s26, 1
      %s28 = scalar_select %p25, %s26, %s27
      %p31 = pneg %p25
      %p32 = scmp.eq.s32.totalorder %s16, 1
      %p33 = por %p31, %p32
      %p34 = scmp.ne.s32.totalorder %s26, %s29
      %p35 = scmp.eq.s32.totalorder %s16, 0
      %p36 = por %p34, %p35
      %p37 = scmp.ne.s32.totalorder %s26, %s29
      %p38 = scmp.eq.s32.totalorder %s21, 1
      %p39 = por %p37, %p38
      %p40 = scmp.ne.s32.totalorder %s29, %s30
      %p41 = scmp.eq.s32.totalorder %s21, 0
      %p42 = por %p40, %p41
      %p43 = scmp.ne.s32.totalorder %s29, %s30
      %p44 = scmp.eq.s32.totalorder %s22, 1
      %p45 = por %p43, %p44
      %p47 = scmp.ne.s32.totalorder %s30, %s46
      %p48 = scmp.eq.s32.totalorder %s22, 0
      %p49 = por %p47, %p48
      %s51 = sadd.s32 %s50, 1
      %p54 = scmp.eq.s32.totalorder %s16, 1
      %p55 = scmp.ne.s32.totalorder %s50, %s52
      %p56 = scmp.eq.s32.totalorder %s16, 0
      %p57 = por %p55, %p56
      %p58 = scmp.ne.s32.totalorder %s50, %s52
      %p59 = scmp.eq.s32.totalorder %s21, 1
      %p60 = por %p58, %p59
      %p61 = scmp.ne.s32.totalorder %s52, %s53
      %p62 = scmp.eq.s32.totalorder %s21, 0
      %p63 = por %p61, %p62
      %p64 = scmp.ne.s32.totalorder %s52, %s53
      %p65 = scmp.eq.s32.totalorder %s22, 1
      %p66 = por %p64, %p65
      %p68 = scmp.ne.s32.totalorder %s53, %s67
      %p69 = scmp.eq.s32.totalorder %s22, 0
      %p70 = por %p68, %p69
      %s72 = sadd.s32 %s71, 1
      %p75 = scmp.eq.s32.totalorder %s16, 1
      %p76 = scmp.ne.s32.totalorder %s71, %s73
      %p77 = scmp.eq.s32.totalorder %s16, 0
      %p78 = por %p76, %p77
      %p79 = scmp.ne.s32.totalorder %s71, %s73
      %p80 = scmp.eq.s32.totalorder %s21, 1
      %p81 = por %p79, %p80
      %p82 = scmp.ne.s32.totalorder %s73, %s74
      %p83 = scmp.eq.s32.totalorder %s21, 0
      %p84 = por %p82, %p83
      %p85 = scmp.ne.s32.totalorder %s73, %s74
      %p86 = scmp.eq.s32.totalorder %s22, 1
      %p87 = por %p85, %p86
      %p89 = scmp.ne.s32.totalorder %s74, %s88
      %p90 = scmp.eq.s32.totalorder %s22, 0
      %p91 = por %p89, %p90
      %s93 = sadd.s32 %s92, 1
      %p96 = scmp.eq.s32.totalorder %s16, 1
      %p97 = scmp.ne.s32.totalorder %s92, %s94
      %p98 = scmp.eq.s32.totalorder %s16, 0
      %p99 = por %p97, %p98
      %p100 = scmp.ne.s32.totalorder %s92, %s94
      %p101 = scmp.eq.s32.totalorder %s21, 1
      %p102 = por %p100, %p101
      %p103 = scmp.ne.s32.totalorder %s94, %s95
      %p104 = scmp.eq.s32.totalorder %s21, 0
      %p105 = por %p103, %p104
      %p106 = scmp.ne.s32.totalorder %s94, %s95
      %p107 = scmp.eq.s32.totalorder %s22, 1
      %p108 = por %p106, %p107
      %p110 = scmp.ne.s32.totalorder %s95, %s109
      %p111 = scmp.eq.s32.totalorder %s22, 0
      %p112 = por %p110, %p111
      %s114 = sadd.s32 %s113, 1
      %p117 = scmp.eq.s32.totalorder %s16, 1
      %p118 = scmp.ne.s32.totalorder %s113, %s115
      %p119 = scmp.eq.s32.totalorder %s16, 0
      %p120 = por %p118, %p119
      %p121 = scmp.ne.s32.totalorder %s113, %s115
      %p122 = scmp.eq.s32.totalorder %s21, 1
      %p123 = por %p121, %p122
      %p124 = scmp.ne.s32.totalorder %s115, %s116
      %p125 = scmp.eq.s32.totalorder %s21, 0
      %p126 = por %p124, %p125
      %p127 = scmp.ne.s32.totalorder %s115, %s116
      %p128 = scmp.eq.s32.totalorder %s22, 1
      %p129 = por %p127, %p128
      %p131 = scmp.ne.s32.totalorder %s116, %s130
      %p132 = scmp.eq.s32.totalorder %s22, 0
      %p133 = por %p131, %p132
      %s135 = sadd.s32 %s134, 1
      %p138 = scmp.eq.s32.totalorder %s16, 1
      %p139 = scmp.ne.s32.totalorder %s134, %s136
      %p140 = scmp.eq.s32.totalorder %s16, 0
      %p141 = por %p139, %p140
      %p142 = scmp.ne.s32.totalorder %s134, %s136
      %p143 = scmp.eq.s32.totalorder %s21, 1
      %p144 = por %p142, %p143
      %p145 = scmp.ne.s32.totalorder %s136, %s137
      %p146 = scmp.eq.s32.totalorder %s21, 0
      %p147 = por %p145, %p146
      %p148 = scmp.ne.s32.totalorder %s136, %s137
      %p149 = scmp.eq.s32.totalorder %s22, 1
      %p150 = por %p148, %p149
      %p152 = scmp.ne.s32.totalorder %s137, %s151
      %p153 = scmp.eq.s32.totalorder %s22, 0
      %p154 = por %p152, %p153
      %s156 = sadd.s32 %s155, 1
      %p159 = scmp.eq.s32.totalorder %s16, 1
      %p160 = scmp.ne.s32.totalorder %s155, %s157
      %p161 = scmp.eq.s32.totalorder %s16, 0
      %p162 = por %p160, %p161
      %p163 = scmp.ne.s32.totalorder %s155, %s157
      %p164 = scmp.eq.s32.totalorder %s21, 1
      %p165 = por %p163, %p164
      %p166 = scmp.ne.s32.totalorder %s157, %s158
      %p167 = scmp.eq.s32.totalorder %s21, 0
      %p168 = por %p166, %p167
      %p169 = scmp.ne.s32.totalorder %s157, %s158
      %p170 = scmp.eq.s32.totalorder %s22, 1
      %p171 = por %p169, %p170
      %p173 = scmp.ne.s32.totalorder %s158, %s172
      %p174 = scmp.eq.s32.totalorder %s22, 0
      %p175 = por %p173, %p174
      %s176 = ssub.s32 %s16, %s23
      %p177 = scmp.eq.s32.totalorder %s176, 0
      %s179 = sadd.s32 %s178, 1
      %s180 = scalar_select %p177, %s178, %s179
      %p183 = pneg %p177
      %p184 = scmp.eq.s32.totalorder %s16, 1
      %p185 = por %p183, %p184
      %p186 = scmp.ne.s32.totalorder %s178, %s181
      %p187 = scmp.eq.s32.totalorder %s16, 0
      %p188 = por %p186, %p187
      %p189 = scmp.ne.s32.totalorder %s178, %s181
      %p190 = scmp.eq.s32.totalorder %s21, 1
      %p191 = por %p189, %p190
      %p192 = scmp.ne.s32.totalorder %s181, %s182
      %p193 = scmp.eq.s32.totalorder %s21, 0
      %p194 = por %p192, %p193
      %p195 = scmp.ne.s32.totalorder %s181, %s182
      %p196 = scmp.eq.s32.totalorder %s22, 1
      %p197 = por %p195, %p196
      %p199 = scmp.ne.s32.totalorder %s182, %s198
      %p200 = scmp.eq.s32.totalorder %s22, 0
      %p201 = por %p199, %p200
      %p202 = scmp.le.s32.totalorder 1, %s16
      %p203 = scmp.lt.s32.totalorder %s16, 3
      %p204 = pnand %p202, %p203
      %p205 = pneg %p204
      // Predicated region
      $region9: #{encoder_forward.5} parent=5 // pred_check
        _
      $region10: #{encoder_forward.5} parent=5 // pred_check_branch
        %207 = sbr.rel (%p204) target = $region12
      $region11: #{encoder_forward.5} parent=5 // pred_region
        %s208 = ssub.s32 %s16, 1
        // Predicated region
        $region13: #{encoder_forward.5} parent=11 // pred_check
          %p209 = pneg %p63
        $region14: #{encoder_forward.5} parent=11 // pred_check_branch
          %211 = sbr.rel (%p209) target = $region16
        $region15: #{encoder_forward.5} parent=11 // pred_region
          _
        $region16: #{encoder_forward.5} parent=11 // pred_fallthru
          _
        // Predicated region
        $region17: #{encoder_forward.5} parent=11 // pred_check
          %p212 = pneg %p84
        $region18: #{encoder_forward.5} parent=11 // pred_check_branch
          %214 = sbr.rel (%p212) target = $region20
        $region19: #{encoder_forward.5} parent=11 // pred_region
          _
        $region20: #{encoder_forward.5} parent=11 // pred_fallthru
          _
        // Predicated region
        $region21: #{encoder_forward.5} parent=11 // pred_check
          %p215 = pneg %p105
        $region22: #{encoder_forward.5} parent=11 // pred_check_branch
          %217 = sbr.rel (%p215) target = $region24
        $region23: #{encoder_forward.5} parent=11 // pred_region
          _
        $region24: #{encoder_forward.5} parent=11 // pred_fallthru
          _
        // Predicated region
        $region25: #{encoder_forward.5} parent=11 // pred_check
          %p218 = pneg %p126
        $region26: #{encoder_forward.5} parent=11 // pred_check_branch
          %220 = sbr.rel (%p218) target = $region28
        $region27: #{encoder_forward.5} parent=11 // pred_region
          _
        $region28: #{encoder_forward.5} parent=11 // pred_fallthru
          _
        // Predicated region
        $region29: #{encoder_forward.5} parent=11 // pred_check
          %p221 = pneg %p147
        $region30: #{encoder_forward.5} parent=11 // pred_check_branch
          %223 = sbr.rel (%p221) target = $region32
        $region31: #{encoder_forward.5} parent=11 // pred_region
          _
        $region32: #{encoder_forward.5} parent=11 // pred_fallthru
          _
        // Predicated region
        $region33: #{encoder_forward.5} parent=11 // pred_check
          %p224 = pneg %p168
        $region34: #{encoder_forward.5} parent=11 // pred_check_branch
          %226 = sbr.rel (%p224) target = $region36
        $region35: #{encoder_forward.5} parent=11 // pred_region
          _
        $region36: #{encoder_forward.5} parent=11 // pred_fallthru
          _
      $region12: #{encoder_forward.5} parent=5 // pred_fallthru
        _
      %p227 = scmp.lt.s32.totalorder %s16, 2
      // Predicated region
      $region37: #{encoder_forward.5} parent=5 // pred_check
        %p228 = pneg %p227
      $region38: #{encoder_forward.5} parent=5 // pred_check_branch
        %230 = sbr.rel (%p228) target = $region40
      $region39: #{encoder_forward.5} parent=5 // pred_region
        // Predicated region
        $region41: #{encoder_forward.5} parent=39 // pred_check
          %p231 = pneg %p36
        $region42: #{encoder_forward.5} parent=39 // pred_check_branch
          %233 = sbr.rel (%p231) target = $region44
        $region43: #{encoder_forward.5} parent=39 // pred_region
          %p234 = scmp.lt.s32.totalorder %s16, 1
          %s235 = scalar_select %p234, %s16, 1
          %s236 = smul.addr %s235, 2
          %s237 = smul.addr %s236, 4
          %s238 = scalar_lea.vmem %s0, %s237
        $region44: #{encoder_forward.5} parent=39 // pred_fallthru
          _
      $region40: #{encoder_forward.5} parent=5 // pred_fallthru
        _
      %p239 = scmp.le.s32.totalorder 1, %s16
      %p240 = scmp.lt.s32.totalorder %s16, 3
      %p241 = pnand %p239, %p240
      %p242 = pneg %p241
      // Predicated region
      $region45: #{encoder_forward.5} parent=5 // pred_check
        _
      $region46: #{encoder_forward.5} parent=5 // pred_check_branch
        %244 = sbr.rel (%p241) target = $region48
      $region47: #{encoder_forward.5} parent=5 // pred_region
        %s245 = ssub.s32 %s16, 1
        %p246 = scmp.lt.s32.totalorder %s21, 1
        %s247 = scalar_select %p246, %s21, 1
        %s248 = smul.addr %s247, 2
        %s249 = smul.addr %s248, 4
        %s250 = scalar_lea.vmem %s0, %s249
        %p251 = pneg %p42
        %p252 = pneg %p39
        %p253 = pneg %p63
        %p254 = pneg %p60
        %p255 = pneg %p84
        %p256 = pneg %p81
        %p257 = pneg %p105
        %p258 = pneg %p102
        %p259 = pneg %p126
        %p260 = pneg %p123
        %p261 = pneg %p147
        %p262 = pneg %p144
        %p263 = pneg %p168
        %p264 = pneg %p165
        %p265 = pneg %p194
        %p266 = pneg %p191
        %s267 = sand.u32 %s181, 1
        %s268 = scalar_lea.sflag [#allocation4], %s267
        %s269 = sand.u32 %s181, 1
        %s270 = smul.addr %s269, 16
        %s271 = scalar_lea.vmem [#allocation3], %s270
        %p272 = scmp.lt.s32.totalorder %s21, 1
        %s273 = scalar_select %p272, %s21, 1
        %s274 = smul.addr %s273, 2
        %s275 = smul.addr %s274, 4
        %s276 = scalar_lea.vmem %s0, %s275
        %280 = vst [vmem:[#allocation2] sm:$0xf] 0
        %281 = vst [vmem:[#allocation2 + $0xc] sm:$0xf] 0
        %v282 = vld [vmem:[%s5] sm:$0xff]
        %v283 = vld [vmem:[%s5 + $0x8] sm:$0xff]
        %vm284 = vcmp.ne.f32.partialorder %v282, 0.0
        %vm285 = vcmp.ne.f32.partialorder %v283, 0.0
        %v286 = vld [vmem:[%s6] sm:$0xff]
        %v287 = vld [vmem:[%s6 + $0x8] sm:$0xff]
        %vm288 = vcmp.ne.f32.partialorder %v286, 0.0
        %vm289 = vcmp.ne.f32.partialorder %v287, 0.0
        %v290 = vld [vmem:[%s276] sm:$0xf]
        %v291 = vld [vmem:[%s276 + $0x4] sm:$0xf]
        %292 = vst [vmem:[#allocation2 + $0x4] sm:$0xf] %v290
        %293 = vst [vmem:[#allocation2 + $0x8] sm:$0xf] %v291
        %v294 = vld [vmem:[#allocation2] sm:$0xe]
        %v295 = vld [vmem:[#allocation2 + $0x4] sm:$0xf]
        %v296 = vld [vmem:[#allocation2 + $0x8] sm:$0x3]
        %v297 = vsel %vm284, 1, 0
        %v298 = vsel %vm285, 1, 0
        %299 = vset.pattern.permute.xlu0 0
        %300 = vperm.xlu0 %299, %v297
        %v301 = vpop.permute.xlu0 %300
        %302 = vset.pattern.permute.xlu0 0
        %303 = vperm.xlu0 %302, %v298
        %v304 = vpop.permute.xlu0 %303
        %vm305 = vcmp.eq.s32.totalorder %v301, 1
        %vm306 = vcmp.eq.s32.totalorder %v304, 1
        %vm307 = vmpackc.low %vm305, %vm305
        %vm308 = vmpackc.low %vm306, %vm306
        %v309 = vsel %vm307, 65537, 0
        %v310 = vsel %vm308, 65537, 0
        %vm311 = vsmask.f32 1280
        %vm312 = vsmask.f32 5392
        %vm313 = vmor %vm311, %vm312
        %v315 = vshrl.u32 %v309, 16
        %v317 = vrot.slane %v315, 6
        %v318 = vshll.u32 %v309, 16
        %v320 = vrot.slane %v318, 7
        %v321 = vor.u32 %v317, %v320
        %v322 = vrot.slane %v321, 4
        %v324 = vshrl.u32 %v310, 16
        %v326 = vrot.slane %v324, 6
        %v327 = vshll.u32 %v310, 16
        %v329 = vrot.slane %v327, 7
        %v330 = vor.u32 %v326, %v329
        %v331 = vsel %vm313, %v322, %v330
        %v332 = vrot.slane %v330, 4
        %vm333 = vcmp.ne.s16.totalorder %v321, 0
        %vm334 = vcmp.ne.s16.totalorder %v331, 0
        %vm335 = vcmp.ne.s16.totalorder %v332, 0
        %v336 = vsel %vm333, %v294, 0
        %v337 = vsel %vm334, %v295, 0
        %v338 = vsel %vm335, %v296, 0
        %v339 = vld [vmem:[#allocation2] sm:$0xc]
        %v340 = vld [vmem:[#allocation2 + $0x8] sm:$0x7]
        %v341 = vsel %vm288, 1, 0
        %v342 = vsel %vm289, 1, 0
        %343 = vset.pattern.permute.xlu0 0
        %344 = vperm.xlu0 %343, %v341
        %v345 = vpop.permute.xlu0 %344
        %346 = vset.pattern.permute.xlu0 0
        %347 = vperm.xlu0 %346, %v342
        %v348 = vpop.permute.xlu0 %347
        %vm349 = vcmp.eq.s32.totalorder %v345, 1
        %vm350 = vcmp.eq.s32.totalorder %v348, 1
        %vm351 = vmpackc.low %vm349, %vm349
        %vm352 = vmpackc.low %vm350, %vm350
        %v353 = vsel %vm351, 65537, 0
        %v354 = vsel %vm352, 65537, 0
        %vm355 = vsmask.f32 2304
        %vm356 = vsmask.f32 6416
        %vm357 = vmor %vm355, %vm356
        %v359 = vshrl.u32 %v353, 16
        %v361 = vrot.slane %v359, 5
        %v362 = vshll.u32 %v353, 16
        %v364 = vrot.slane %v362, 6
        %v365 = vor.u32 %v361, %v364
        %v366 = vrot.slane %v365, 4
        %v368 = vshrl.u32 %v354, 16
        %v370 = vrot.slane %v368, 5
        %v371 = vshll.u32 %v354, 16
        %v373 = vrot.slane %v371, 6
        %v374 = vor.u32 %v370, %v373
        %v375 = vsel %vm357, %v366, %v374
        %v376 = vrot.slane %v374, 4
        %vm377 = vcmp.ne.s16.totalorder %v365, 0
        %vm378 = vcmp.ne.s16.totalorder %v375, 0
        %vm379 = vcmp.ne.s16.totalorder %v376, 0
        %v380 = vsel %vm377, %v339, 0
        %v381 = vsel %vm378, %v295, 0
        %v382 = vsel %vm379, %v340, 0
        %v383 = vld [vmem:[#allocation2] sm:$0x8]
        %v384 = vld [vmem:[#allocation2 + $0x8] sm:$0xf]
        %vm385 = vsmask.f32 3328
        %vm386 = vsmask.f32 7440
        %vm387 = vmor %vm385, %vm386
        %v388 = vrot.slane %v318, 5
        %v389 = vrot.slane %v315, 4
        %v390 = vor.u32 %v389, %v388
        %v391 = vrot.slane %v390, 4
        %v392 = vrot.slane %v327, 5
        %v393 = vsel %vm387, %v391, %v392
        %v394 = vrot.slane %v324, 4
        %v395 = vor.u32 %v394, %v392
        %v396 = vrot.slane %v395, 4
        %vm397 = vcmp.ne.s16.totalorder %v388, 0
        %vm398 = vcmp.ne.s16.totalorder %v393, 0
        %vm399 = vcmp.ne.s16.totalorder %v396, 0
        %v400 = vsel %vm397, %v383, 0
        %v401 = vsel %vm398, %v295, 0
        %v402 = vsel %vm399, %v384, 0
        %v403 = vld [vmem:[#allocation2 + $0x4] sm:$0xf]
        %v404 = vld [vmem:[#allocation2 + $0x8] sm:$0xf]
        %v405 = vld [vmem:[#allocation2 + $0xc] sm:$0x1]
        %vm406 = vsmask.f32 256
        %vm407 = vsmask.f32 4368
        %vm408 = vmor %vm406, %vm407
        %v409 = vrot.slane %v359, 7
        %v410 = vor.u32 %v409, %v362
        %v411 = vrot.slane %v409, 4
        %v412 = vrot.slane %v368, 7
        %v413 = vor.u32 %v412, %v371
        %v414 = vsel %vm408, %v411, %v413
        %v415 = vrot.slane %v412, 4
        %vm416 = vcmp.ne.s16.totalorder %v410, 0
        %vm417 = vcmp.ne.s16.totalorder %v414, 0
        %vm418 = vcmp.ne.s16.totalorder %v415, 0
        %v419 = vsel %vm416, %v403, 0
        %v420 = vsel %vm417, %v404, 0
        %v421 = vsel %vm418, %v405, 0
        %v422 = vld [vmem:[#allocation2 + $0x4] sm:$0xe]
        %v423 = vld [vmem:[#allocation2 + $0xc] sm:$0x3]
        %v424 = vsel %vm333, %v422, 0
        %v425 = vsel %vm334, %v404, 0
        %v426 = vsel %vm335, %v423, 0
        %v427 = vld [vmem:[#allocation2 + $0x4] sm:$0xc]
        %v428 = vld [vmem:[#allocation2 + $0xc] sm:$0x7]
        %v429 = vsel %vm377, %v427, 0
        %v430 = vsel %vm378, %v404, 0
        %v431 = vsel %vm379, %v428, 0
        %v435 = vunpack.c.l.b16 %v336
        %v436 = vunpack.c.l.b16 %v337
        %v437 = vunpack.c.l.b16 %v338
        %v438 = vpack.c.b16 %v436, %v435
        %v439 = vpack.c.b16 %v437, %v437
        %v443 = vunpack.c.l.b16 %v339
        %v444 = vunpack.c.l.b16 %v295
        %v445 = vunpack.c.l.b16 %v296
        %v446 = vpack.c.b16 %v444, %v443
        %v447 = vpack.c.b16 %v445, %v445
        %vm448 = vsmask.f32 7424
        %v450 = vshrl.u32 %v446, 16
        %v452 = vshll.u32 %v446, 16
        %v454 = vrot.slane %v452, 1
        %v455 = vor.u32 %v450, %v454
        %v457 = vshll.u32 %v447, 16
        %v459 = vrot.slane %v457, 1
        %v460 = vsel %vm448, %v455, %v459
        %v461 = vshrl.u32 %v447, 16
        %v463 = vor.u32 %v461, %v459
        %v467 = vunpack.c.l.b16 %v380
        %v468 = vunpack.c.l.b16 %v381
        %v469 = vunpack.c.l.b16 %v382
        %v470 = vpack.c.b16 %v468, %v467
        %v471 = vpack.c.b16 %v469, %v469
        %vm472 = vcmask 1046528
        %v473 = vrot.slane %v470, 1
        %v474 = vrot.slane %v471, 1
        %v475 = vsel %vm472, %v473, %v474
        %v479 = vunpack.c.l.b16 %v400
        %v480 = vunpack.c.l.b16 %v401
        %v481 = vunpack.c.l.b16 %v402
        %v482 = vpack.c.b16 %v480, %v479
        %v483 = vpack.c.b16 %v481, %v481
        %vm484 = vcmask 1045504
        %v485 = vrot.slane %v482, 2
        %v486 = vrot.slane %v483, 2
        %v487 = vsel %vm484, %v485, %v486
        %v489 = vunpack.c.l.b16 %v384
        %v490 = vpack.c.b16 %v489, %v444
        %v492 = vshrl.u32 %v490, 16
        %v494 = vrot.slane %v492, 6
        %v495 = vshll.u32 %v490, 16
        %v497 = vrot.slane %v495, 7
        %v498 = vor.u32 %v494, %v497
        %v502 = vunpack.c.l.b16 %v419
        %v503 = vunpack.c.l.b16 %v420
        %v504 = vunpack.c.l.b16 %v421
        %v505 = vpack.c.b16 %v503, %v502
        %v506 = vpack.c.b16 %v504, %v504
        %vm507 = vcmask 1040384
        %v508 = vrot.slane %v505, 7
        %v509 = vrot.slane %v506, 7
        %v510 = vsel %vm507, %v508, %v509
        %v514 = vunpack.c.l.b16 %v424
        %v515 = vunpack.c.l.b16 %v425
        %v516 = vunpack.c.l.b16 %v426
        %v517 = vpack.c.b16 %v515, %v514
        %v518 = vpack.c.b16 %v516, %v516
        %v522 = vunpack.c.l.b16 %v427
        %v523 = vunpack.c.l.b16 %v404
        %v524 = vunpack.c.l.b16 %v423
        %v525 = vpack.c.b16 %v523, %v522
        %v526 = vpack.c.b16 %v524, %v524
        %v528 = vshrl.u32 %v525, 16
        %v530 = vshll.u32 %v525, 16
        %v532 = vrot.slane %v530, 1
        %v533 = vor.u32 %v528, %v532
        %v535 = vshll.u32 %v526, 16
        %v537 = vrot.slane %v535, 1
        %v538 = vsel %vm448, %v533, %v537
        %v539 = vshrl.u32 %v526, 16
        %v541 = vor.u32 %v539, %v537
        %v545 = vunpack.c.l.b16 %v429
        %v546 = vunpack.c.l.b16 %v430
        %v547 = vunpack.c.l.b16 %v431
        %v548 = vpack.c.b16 %v546, %v545
        %v549 = vpack.c.b16 %v547, %v547
        %v550 = vrot.slane %v548, 1
        %v551 = vrot.slane %v549, 1
        %v552 = vsel %vm472, %v550, %v551
        %v553 = vld [vmem:[%s1] sm:$0xf]
        %v554 = vld [vmem:[%s1 + $0x4] sm:$0xf]
        %v555 = vld [vmem:[%s1 + $0x8] sm:$0xf]
        %v556 = vld [vmem:[%s1 + $0xc] sm:$0xf]
        %v557 = vld [vmem:[%s1 + $0x10] sm:$0xf]
        %v558 = vld [vmem:[%s1 + $0x14] sm:$0xf]
        %v559 = vld [vmem:[%s1 + $0x18] sm:$0xf]
        %v560 = vld [vmem:[%s1 + $0x1c] sm:$0xf]
        %v561 = vld [vmem:[%s1 + $0x20] sm:$0xf]
        %v562 = vld [vmem:[%s1 + $0x24] sm:$0xf]
        %v563 = vld [vmem:[%s1 + $0x28] sm:$0xf]
        %v564 = vld [vmem:[%s1 + $0x2c] sm:$0xf]
        %v565 = vld [vmem:[%s1 + $0x30] sm:$0xf]
        %v566 = vld [vmem:[%s1 + $0x34] sm:$0xf]
        %v567 = vld [vmem:[%s1 + $0x38] sm:$0xf]
        %v568 = vld [vmem:[%s1 + $0x3c] sm:$0xf]
        %v569 = vld [vmem:[%s1 + $0x40] sm:$0xf]
        %v570 = vld [vmem:[%s1 + $0x44] sm:$0xf]
        %v571 = vld [vmem:[%s1 + $0x48] sm:$0xf]
        %v572 = vld [vmem:[%s1 + $0x4c] sm:$0xf]
        %v573 = vld [vmem:[%s1 + $0x50] sm:$0xf]
        %v574 = vld [vmem:[%s1 + $0x54] sm:$0xf]
        %v575 = vld [vmem:[%s1 + $0x58] sm:$0xf]
        %v576 = vld [vmem:[%s1 + $0x5c] sm:$0xf]
        %v577 = vld [vmem:[%s1 + $0x60] sm:$0xf]
        %v578 = vld [vmem:[%s1 + $0x64] sm:$0xf]
        %v579 = vld [vmem:[%s1 + $0x68] sm:$0xf]
        %v580 = vld [vmem:[%s1 + $0x6c] sm:$0xf]
        %v581 = vld [vmem:[%s1 + $0x70] sm:$0xf]
        %v582 = vld [vmem:[%s1 + $0x74] sm:$0xf]
        %v583 = vld [vmem:[%s1 + $0x78] sm:$0xf]
        %v584 = vld [vmem:[%s1 + $0x7c] sm:$0xf]
        %v585 = vld [vmem:[%s1 + $0x80] sm:$0xf]
        %v586 = vld [vmem:[%s1 + $0x84] sm:$0xf]
        %v587 = vld [vmem:[%s1 + $0x88] sm:$0xf]
        %v588 = vld [vmem:[%s1 + $0x8c] sm:$0xf]
        %v589 = vld [vmem:[%s1 + $0x90] sm:$0xf]
        %v590 = vld [vmem:[%s1 + $0x94] sm:$0xf]
        %v591 = vld [vmem:[%s1 + $0x98] sm:$0xf]
        %v592 = vld [vmem:[%s1 + $0x9c] sm:$0xf]
        %v593 = vld [vmem:[%s1 + $0xa0] sm:$0xf]
        %v594 = vld [vmem:[%s1 + $0xa4] sm:$0xf]
        %v595 = vld [vmem:[%s1 + $0xa8] sm:$0xf]
        %v596 = vld [vmem:[%s1 + $0xac] sm:$0xf]
        %v597 = vld [vmem:[%s1 + $0xb0] sm:$0xf]
        %v598 = vld [vmem:[%s1 + $0xb4] sm:$0xf]
        %v599 = vld [vmem:[%s1 + $0xb8] sm:$0xf]
        %v600 = vld [vmem:[%s1 + $0xbc] sm:$0xf]
        %v601 = vld [vmem:[%s1 + $0xc0] sm:$0xf]
        %v602 = vld [vmem:[%s1 + $0xc4] sm:$0xf]
        %v603 = vld [vmem:[%s1 + $0xc8] sm:$0xf]
        %v604 = vld [vmem:[%s1 + $0xcc] sm:$0xf]
        %v605 = vld [vmem:[%s1 + $0xd0] sm:$0xf]
        %v606 = vld [vmem:[%s1 + $0xd4] sm:$0xf]
        %v607 = vld [vmem:[%s1 + $0xd8] sm:$0xf]
        %v608 = vld [vmem:[%s1 + $0xdc] sm:$0xf]
        %v609 = vld [vmem:[%s1 + $0xe0] sm:$0xf]
        %v610 = vld [vmem:[%s1 + $0xe4] sm:$0xf]
        %v611 = vld [vmem:[%s1 + $0xe8] sm:$0xf]
        %v612 = vld [vmem:[%s1 + $0xec] sm:$0xf]
        %v613 = vld [vmem:[%s1 + $0xf0] sm:$0xf]
        %v614 = vld [vmem:[%s1 + $0xf4] sm:$0xf]
        %v615 = vld [vmem:[%s1 + $0xf8] sm:$0xf]
        %v616 = vld [vmem:[%s1 + $0xfc] sm:$0xf]
        %v617 = vld [vmem:[%s1 + $0x100] sm:$0xf]
        %v618 = vld [vmem:[%s1 + $0x104] sm:$0xf]
        %v619 = vld [vmem:[%s1 + $0x108] sm:$0xf]
        %v620 = vld [vmem:[%s1 + $0x10c] sm:$0xf]
        %v621 = vld [vmem:[%s1 + $0x110] sm:$0xf]
        %v622 = vld [vmem:[%s1 + $0x114] sm:$0xf]
        %v623 = vld [vmem:[%s1 + $0x118] sm:$0xf]
        %v624 = vld [vmem:[%s1 + $0x11c] sm:$0xf]
        %v625 = vld [vmem:[%s1 + $0x120] sm:$0xf]
        %v626 = vld [vmem:[%s1 + $0x124] sm:$0xf]
        %v627 = vld [vmem:[%s1 + $0x128] sm:$0xf]
        %v628 = vld [vmem:[%s1 + $0x12c] sm:$0xf]
        %v629 = vld [vmem:[%s1 + $0x130] sm:$0xf]
        %v630 = vld [vmem:[%s1 + $0x134] sm:$0xf]
        %v631 = vld [vmem:[%s1 + $0x138] sm:$0xf]
        %v632 = vld [vmem:[%s1 + $0x13c] sm:$0xf]
        %v633 = vld [vmem:[%s1 + $0x140] sm:$0xf]
        %v634 = vld [vmem:[%s1 + $0x144] sm:$0xf]
        %v635 = vld [vmem:[%s1 + $0x148] sm:$0xf]
        %v636 = vld [vmem:[%s1 + $0x14c] sm:$0xf]
        %v637 = vld [vmem:[%s1 + $0x150] sm:$0xf]
        %v638 = vld [vmem:[%s1 + $0x154] sm:$0xf]
        %v639 = vld [vmem:[%s1 + $0x158] sm:$0xf]
        %v640 = vld [vmem:[%s1 + $0x15c] sm:$0xf]
        %v641 = vld [vmem:[%s1 + $0x160] sm:$0xf]
        %v642 = vld [vmem:[%s1 + $0x164] sm:$0xf]
        %v643 = vld [vmem:[%s1 + $0x168] sm:$0xf]
        %v644 = vld [vmem:[%s1 + $0x16c] sm:$0xf]
        %v645 = vld [vmem:[%s1 + $0x170] sm:$0xf]
        %v646 = vld [vmem:[%s1 + $0x174] sm:$0xf]
        %v647 = vld [vmem:[%s1 + $0x178] sm:$0xf]
        %v648 = vld [vmem:[%s1 + $0x17c] sm:$0xf]
        %v649 = vld [vmem:[%s1 + $0x180] sm:$0xf]
        %v650 = vld [vmem:[%s1 + $0x184] sm:$0xf]
        %v651 = vld [vmem:[%s1 + $0x188] sm:$0xf]
        %v652 = vld [vmem:[%s1 + $0x18c] sm:$0xf]
        %v653 = vld [vmem:[%s1 + $0x190] sm:$0xf]
        %v654 = vld [vmem:[%s1 + $0x194] sm:$0xf]
        %v655 = vld [vmem:[%s1 + $0x198] sm:$0xf]
        %v656 = vld [vmem:[%s1 + $0x19c] sm:$0xf]
        %v657 = vld [vmem:[%s1 + $0x1a0] sm:$0xf]
        %v658 = vld [vmem:[%s1 + $0x1a4] sm:$0xf]
        %v659 = vld [vmem:[%s1 + $0x1a8] sm:$0xf]
        %v660 = vld [vmem:[%s1 + $0x1ac] sm:$0xf]
        %v661 = vld [vmem:[%s1 + $0x1b0] sm:$0xf]
        %v662 = vld [vmem:[%s1 + $0x1b4] sm:$0xf]
        %v663 = vld [vmem:[%s1 + $0x1b8] sm:$0xf]
        %v664 = vld [vmem:[%s1 + $0x1bc] sm:$0xf]
        %v665 = vld [vmem:[%s1 + $0x1c0] sm:$0xf]
        %v666 = vld [vmem:[%s1 + $0x1c4] sm:$0xf]
        %v667 = vld [vmem:[%s1 + $0x1c8] sm:$0xf]
        %v668 = vld [vmem:[%s1 + $0x1cc] sm:$0xf]
        %v669 = vld [vmem:[%s1 + $0x1d0] sm:$0xf]
        %v670 = vld [vmem:[%s1 + $0x1d4] sm:$0xf]
        %v671 = vld [vmem:[%s1 + $0x1d8] sm:$0xf]
        %v672 = vld [vmem:[%s1 + $0x1dc] sm:$0xf]
        %v673 = vld [vmem:[%s1 + $0x1e0] sm:$0xf]
        %v674 = vld [vmem:[%s1 + $0x1e4] sm:$0xf]
        %v675 = vld [vmem:[%s1 + $0x1e8] sm:$0xf]
        %v676 = vld [vmem:[%s1 + $0x1ec] sm:$0xf]
        %v677 = vld [vmem:[%s1 + $0x1f0] sm:$0xf]
        %v678 = vld [vmem:[%s1 + $0x1f4] sm:$0xf]
        %v679 = vld [vmem:[%s1 + $0x1f8] sm:$0xf]
        %v680 = vld [vmem:[%s1 + $0x1fc] sm:$0xf]
        %v681 = vld [vmem:[%s1 + $0x200] sm:$0xf]
        %v682 = vld [vmem:[%s1 + $0x204] sm:$0xf]
        %v683 = vld [vmem:[%s1 + $0x208] sm:$0xf]
        %v684 = vld [vmem:[%s1 + $0x20c] sm:$0xf]
        %v685 = vld [vmem:[%s1 + $0x210] sm:$0xf]
        %v686 = vld [vmem:[%s1 + $0x214] sm:$0xf]
        %v687 = vld [vmem:[%s1 + $0x218] sm:$0xf]
        %v688 = vld [vmem:[%s1 + $0x21c] sm:$0xf]
        %v689 = vld [vmem:[%s1 + $0x220] sm:$0xf]
        %v690 = vld [vmem:[%s1 + $0x224] sm:$0xf]
        %v691 = vld [vmem:[%s1 + $0x228] sm:$0xf]
        %v692 = vld [vmem:[%s1 + $0x22c] sm:$0xf]
        %v693 = vld [vmem:[%s1 + $0x230] sm:$0xf]
        %v694 = vld [vmem:[%s1 + $0x234] sm:$0xf]
        %v695 = vld [vmem:[%s1 + $0x238] sm:$0xf]
        %v696 = vld [vmem:[%s1 + $0x23c] sm:$0xf]
        %v697 = vld [vmem:[%s2] sm:$0x1]
        %v699 = vlaneseq
        %v700 = vshrl.u32 %v699, 7
        %v701 = vsub.s32 0, %v700
        %v702 = vrot.slane %v697, %v701
        %vm704 = vsmask.f32 6400
        %v706 = vshrl.u32 %v438, 16
        %v708 = vrot.slane %v706, 1
        %v709 = vshll.u32 %v438, 16
        %v711 = vrot.slane %v709, 2
        %v712 = vor.u32 %v708, %v711
        %v714 = vshrl.u32 %v439, 16
        %v716 = vrot.slane %v714, 1
        %v717 = vshll.u32 %v439, 16
        %v719 = vrot.slane %v717, 2
        %v720 = vor.u32 %v716, %v719
        %v721 = vsel %vm704, %v712, %v720
        %v723 = vshrl.u32 %v460, 16
        %v725 = vrot.slane %v723, 1
        %v726 = vshll.u32 %v460, 16
        %v728 = vrot.slane %v726, 2
        %v729 = vor.u32 %v725, %v728
        %v731 = vshrl.u32 %v463, 16
        %v733 = vrot.slane %v731, 1
        %v734 = vshll.u32 %v463, 16
        %v736 = vrot.slane %v734, 2
        %v737 = vor.u32 %v733, %v736
        %v738 = vsel %vm704, %v729, %v737
        %v740 = vshrl.u32 %v475, 16
        %v742 = vrot.slane %v740, 1
        %v743 = vshll.u32 %v475, 16
        %v745 = vrot.slane %v743, 2
        %v746 = vor.u32 %v742, %v745
        %v748 = vshrl.u32 %v474, 16
        %v750 = vrot.slane %v748, 1
        %v751 = vshll.u32 %v474, 16
        %v753 = vrot.slane %v751, 2
        %v754 = vor.u32 %v750, %v753
        %v755 = vsel %vm704, %v746, %v754
        %v757 = vshrl.u32 %v487, 16
        %v759 = vrot.slane %v757, 1
        %v760 = vshll.u32 %v487, 16
        %v762 = vrot.slane %v760, 2
        %v763 = vor.u32 %v759, %v762
        %v765 = vshrl.u32 %v486, 16
        %v767 = vrot.slane %v765, 1
        %v768 = vshll.u32 %v486, 16
        %v770 = vrot.slane %v768, 2
        %v771 = vor.u32 %v767, %v770
        %v772 = vsel %vm704, %v763, %v771
        %v774 = vshrl.u32 %v498, 16
        %v776 = vrot.slane %v774, 1
        %v777 = vshll.u32 %v498, 16
        %v779 = vrot.slane %v777, 2
        %v780 = vor.u32 %v776, %v779
        %v781 = vsel %vm704, %v780, %v780
        %v783 = vshrl.u32 %v508, 16
        %v785 = vrot.slane %v783, 1
        %v786 = vshll.u32 %v508, 16
        %v788 = vrot.slane %v786, 2
        %v789 = vor.u32 %v785, %v788
        %v791 = vshrl.u32 %v510, 16
        %v793 = vrot.slane %v791, 1
        %v794 = vshll.u32 %v510, 16
        %v796 = vrot.slane %v794, 2
        %v797 = vor.u32 %v793, %v796
        %v798 = vsel %vm704, %v789, %v797
        %v800 = vshrl.u32 %v517, 16
        %v802 = vrot.slane %v800, 1
        %v803 = vshll.u32 %v517, 16
        %v805 = vrot.slane %v803, 2
        %v806 = vor.u32 %v802, %v805
        %v808 = vshrl.u32 %v518, 16
        %v810 = vrot.slane %v808, 1
        %v811 = vshll.u32 %v518, 16
        %v813 = vrot.slane %v811, 2
        %v814 = vor.u32 %v810, %v813
        %v815 = vsel %vm704, %v806, %v814
        %v817 = vshrl.u32 %v538, 16
        %v819 = vrot.slane %v817, 1
        %v820 = vshll.u32 %v538, 16
        %v822 = vrot.slane %v820, 2
        %v823 = vor.u32 %v819, %v822
        %v825 = vshrl.u32 %v541, 16
        %v827 = vrot.slane %v825, 1
        %v828 = vshll.u32 %v541, 16
        %v830 = vrot.slane %v828, 2
        %v831 = vor.u32 %v827, %v830
        %v832 = vsel %vm704, %v823, %v831
        %v834 = vshrl.u32 %v552, 16
        %v836 = vrot.slane %v834, 1
        %v837 = vshll.u32 %v552, 16
        %v839 = vrot.slane %v837, 2
        %v840 = vor.u32 %v836, %v839
        %v842 = vshrl.u32 %v551, 16
        %v844 = vrot.slane %v842, 1
        %v845 = vshll.u32 %v551, 16
        %v847 = vrot.slane %v845, 2
        %v848 = vor.u32 %v844, %v847
        %v849 = vsel %vm704, %v840, %v848
        %v1003 = vunpack.c.l.b16 %v553
        %v1004 = vunpack.c.l.b16 %v554
        %v1005 = vunpack.c.l.b16 %v555
        %v1006 = vunpack.c.l.b16 %v556
        %v1007 = vunpack.c.l.b16 %v557
        %v1008 = vunpack.c.l.b16 %v558
        %v1009 = vunpack.c.l.b16 %v559
        %v1010 = vunpack.c.l.b16 %v560
        %v1011 = vunpack.c.l.b16 %v561
        %v1012 = vunpack.c.l.b16 %v562
        %v1013 = vunpack.c.l.b16 %v563
        %v1014 = vunpack.c.l.b16 %v564
        %v1015 = vunpack.c.l.b16 %v565
        %v1016 = vunpack.c.l.b16 %v566
        %v1017 = vunpack.c.l.b16 %v567
        %v1018 = vunpack.c.l.b16 %v568
        %v1019 = vunpack.c.l.b16 %v569
        %v1020 = vunpack.c.l.b16 %v570
        %v1021 = vunpack.c.l.b16 %v571
        %v1022 = vunpack.c.l.b16 %v572
        %v1023 = vunpack.c.l.b16 %v573
        %v1024 = vunpack.c.l.b16 %v574
        %v1025 = vunpack.c.l.b16 %v575
        %v1026 = vunpack.c.l.b16 %v576
        %v1027 = vunpack.c.l.b16 %v577
        %v1028 = vunpack.c.l.b16 %v578
        %v1029 = vunpack.c.l.b16 %v579
        %v1030 = vunpack.c.l.b16 %v580
        %v1031 = vunpack.c.l.b16 %v581
        %v1032 = vunpack.c.l.b16 %v582
        %v1033 = vunpack.c.l.b16 %v583
        %v1034 = vunpack.c.l.b16 %v584
        %v1035 = vunpack.c.l.b16 %v585
        %v1036 = vunpack.c.l.b16 %v586
        %v1037 = vunpack.c.l.b16 %v587
        %v1038 = vunpack.c.l.b16 %v588
        %v1039 = vunpack.c.l.b16 %v589
        %v1040 = vunpack.c.l.b16 %v590
        %v1041 = vunpack.c.l.b16 %v591
        %v1042 = vunpack.c.l.b16 %v592
        %v1043 = vunpack.c.l.b16 %v593
        %v1044 = vunpack.c.l.b16 %v594
        %v1045 = vunpack.c.l.b16 %v595
        %v1046 = vunpack.c.l.b16 %v596
        %v1047 = vunpack.c.l.b16 %v597
        %v1048 = vunpack.c.l.b16 %v598
        %v1049 = vunpack.c.l.b16 %v599
        %v1050 = vunpack.c.l.b16 %v600
        %v1051 = vunpack.c.l.b16 %v601
        %v1052 = vunpack.c.l.b16 %v602
        %v1053 = vunpack.c.l.b16 %v603
        %v1054 = vunpack.c.l.b16 %v604
        %v1055 = vunpack.c.l.b16 %v605
        %v1056 = vunpack.c.l.b16 %v606
        %v1057 = vunpack.c.l.b16 %v607
        %v1058 = vunpack.c.l.b16 %v608
        %v1059 = vunpack.c.l.b16 %v609
        %v1060 = vunpack.c.l.b16 %v610
        %v1061 = vunpack.c.l.b16 %v611
        %v1062 = vunpack.c.l.b16 %v612
        %v1063 = vunpack.c.l.b16 %v613
        %v1064 = vunpack.c.l.b16 %v614
        %v1065 = vunpack.c.l.b16 %v615
        %v1066 = vunpack.c.l.b16 %v616
        %v1067 = vunpack.c.l.b16 %v617
        %v1068 = vunpack.c.l.b16 %v618
        %v1069 = vunpack.c.l.b16 %v619
        %v1070 = vunpack.c.l.b16 %v620
        %v1071 = vunpack.c.l.b16 %v621
        %v1072 = vunpack.c.l.b16 %v622
        %v1073 = vunpack.c.l.b16 %v623
        %v1074 = vunpack.c.l.b16 %v624
        %v1075 = vunpack.c.l.b16 %v625
        %v1076 = vunpack.c.l.b16 %v626
        %v1077 = vunpack.c.l.b16 %v627
        %v1078 = vunpack.c.l.b16 %v628
        %v1079 = vunpack.c.l.b16 %v629
        %v1080 = vunpack.c.l.b16 %v630
        %v1081 = vunpack.c.l.b16 %v631
        %v1082 = vunpack.c.l.b16 %v632
        %v1083 = vunpack.c.l.b16 %v633
        %v1084 = vunpack.c.l.b16 %v634
        %v1085 = vunpack.c.l.b16 %v635
        %v1086 = vunpack.c.l.b16 %v636
        %v1087 = vunpack.c.l.b16 %v637
        %v1088 = vunpack.c.l.b16 %v638
        %v1089 = vunpack.c.l.b16 %v639
        %v1090 = vunpack.c.l.b16 %v640
        %v1091 = vunpack.c.l.b16 %v641
        %v1092 = vunpack.c.l.b16 %v642
        %v1093 = vunpack.c.l.b16 %v643
        %v1094 = vunpack.c.l.b16 %v644
        %v1095 = vunpack.c.l.b16 %v645
        %v1096 = vunpack.c.l.b16 %v646
        %v1097 = vunpack.c.l.b16 %v647
        %v1098 = vunpack.c.l.b16 %v648
        %v1099 = vunpack.c.l.b16 %v649
        %v1100 = vunpack.c.l.b16 %v650
        %v1101 = vunpack.c.l.b16 %v651
        %v1102 = vunpack.c.l.b16 %v652
        %v1103 = vunpack.c.l.b16 %v653
        %v1104 = vunpack.c.l.b16 %v654
        %v1105 = vunpack.c.l.b16 %v655
        %v1106 = vunpack.c.l.b16 %v656
        %v1107 = vunpack.c.l.b16 %v657
        %v1108 = vunpack.c.l.b16 %v658
        %v1109 = vunpack.c.l.b16 %v659
        %v1110 = vunpack.c.l.b16 %v660
        %v1111 = vunpack.c.l.b16 %v661
        %v1112 = vunpack.c.l.b16 %v662
        %v1113 = vunpack.c.l.b16 %v663
        %v1114 = vunpack.c.l.b16 %v664
        %v1115 = vunpack.c.l.b16 %v665
        %v1116 = vunpack.c.l.b16 %v666
        %v1117 = vunpack.c.l.b16 %v667
        %v1118 = vunpack.c.l.b16 %v668
        %v1119 = vunpack.c.l.b16 %v669
        %v1120 = vunpack.c.l.b16 %v670
        %v1121 = vunpack.c.l.b16 %v671
        %v1122 = vunpack.c.l.b16 %v672
        %v1123 = vunpack.c.l.b16 %v673
        %v1124 = vunpack.c.l.b16 %v674
        %v1125 = vunpack.c.l.b16 %v675
        %v1126 = vunpack.c.l.b16 %v676
        %v1127 = vunpack.c.l.b16 %v677
        %v1128 = vunpack.c.l.b16 %v678
        %v1129 = vunpack.c.l.b16 %v679
        %v1130 = vunpack.c.l.b16 %v680
        %v1131 = vunpack.c.l.b16 %v681
        %v1132 = vunpack.c.l.b16 %v682
        %v1133 = vunpack.c.l.b16 %v683
        %v1134 = vunpack.c.l.b16 %v684
        %v1135 = vunpack.c.l.b16 %v685
        %v1136 = vunpack.c.l.b16 %v686
        %v1137 = vunpack.c.l.b16 %v687
        %v1138 = vunpack.c.l.b16 %v688
        %v1139 = vunpack.c.l.b16 %v689
        %v1140 = vunpack.c.l.b16 %v690
        %v1141 = vunpack.c.l.b16 %v691
        %v1142 = vunpack.c.l.b16 %v692
        %v1143 = vunpack.c.l.b16 %v693
        %v1144 = vunpack.c.l.b16 %v694
        %v1145 = vunpack.c.l.b16 %v695
        %v1146 = vunpack.c.l.b16 %v696
        %v1147 = vpack.c.b16 %v1004, %v1003
        %v1148 = vpack.c.b16 %v1006, %v1005
        %v1149 = vpack.c.b16 %v1008, %v1007
        %v1150 = vpack.c.b16 %v1010, %v1009
        %v1151 = vpack.c.b16 %v1012, %v1011
        %v1152 = vpack.c.b16 %v1014, %v1013
        %v1153 = vpack.c.b16 %v1016, %v1015
        %v1154 = vpack.c.b16 %v1018, %v1017
        %v1155 = vpack.c.b16 %v1020, %v1019
        %v1156 = vpack.c.b16 %v1022, %v1021
        %v1157 = vpack.c.b16 %v1024, %v1023
        %v1158 = vpack.c.b16 %v1026, %v1025
        %v1159 = vpack.c.b16 %v1028, %v1027
        %v1160 = vpack.c.b16 %v1030, %v1029
        %v1161 = vpack.c.b16 %v1032, %v1031
        %v1162 = vpack.c.b16 %v1034, %v1033
        %v1163 = vpack.c.b16 %v1036, %v1035
        %v1164 = vpack.c.b16 %v1038, %v1037
        %v1165 = vpack.c.b16 %v1040, %v1039
        %v1166 = vpack.c.b16 %v1042, %v1041
        %v1167 = vpack.c.b16 %v1044, %v1043
        %v1168 = vpack.c.b16 %v1046, %v1045
        %v1169 = vpack.c.b16 %v1048, %v1047
        %v1170 = vpack.c.b16 %v1050, %v1049
        %v1171 = vpack.c.b16 %v1052, %v1051
        %v1172 = vpack.c.b16 %v1054, %v1053
        %v1173 = vpack.c.b16 %v1056, %v1055
        %v1174 = vpack.c.b16 %v1058, %v1057
        %v1175 = vpack.c.b16 %v1060, %v1059
        %v1176 = vpack.c.b16 %v1062, %v1061
        %v1177 = vpack.c.b16 %v1064, %v1063
        %v1178 = vpack.c.b16 %v1066, %v1065
        %v1179 = vpack.c.b16 %v1068, %v1067
        %v1180 = vpack.c.b16 %v1070, %v1069
        %v1181 = vpack.c.b16 %v1072, %v1071
        %v1182 = vpack.c.b16 %v1074, %v1073
        %v1183 = vpack.c.b16 %v1076, %v1075
        %v1184 = vpack.c.b16 %v1078, %v1077
        %v1185 = vpack.c.b16 %v1080, %v1079
        %v1186 = vpack.c.b16 %v1082, %v1081
        %v1187 = vpack.c.b16 %v1084, %v1083
        %v1188 = vpack.c.b16 %v1086, %v1085
        %v1189 = vpack.c.b16 %v1088, %v1087
        %v1190 = vpack.c.b16 %v1090, %v1089
        %v1191 = vpack.c.b16 %v1092, %v1091
        %v1192 = vpack.c.b16 %v1094, %v1093
        %v1193 = vpack.c.b16 %v1096, %v1095
        %v1194 = vpack.c.b16 %v1098, %v1097
        %v1195 = vpack.c.b16 %v1100, %v1099
        %v1196 = vpack.c.b16 %v1102, %v1101
        %v1197 = vpack.c.b16 %v1104, %v1103
        %v1198 = vpack.c.b16 %v1106, %v1105
        %v1199 = vpack.c.b16 %v1108, %v1107
        %v1200 = vpack.c.b16 %v1110, %v1109
        %v1201 = vpack.c.b16 %v1112, %v1111
        %v1202 = vpack.c.b16 %v1114, %v1113
        %v1203 = vpack.c.b16 %v1116, %v1115
        %v1204 = vpack.c.b16 %v1118, %v1117
        %v1205 = vpack.c.b16 %v1120, %v1119
        %v1206 = vpack.c.b16 %v1122, %v1121
        %v1207 = vpack.c.b16 %v1124, %v1123
        %v1208 = vpack.c.b16 %v1126, %v1125
        %v1209 = vpack.c.b16 %v1128, %v1127
        %v1210 = vpack.c.b16 %v1130, %v1129
        %v1211 = vpack.c.b16 %v1132, %v1131
        %v1212 = vpack.c.b16 %v1134, %v1133
        %v1213 = vpack.c.b16 %v1136, %v1135
        %v1214 = vpack.c.b16 %v1138, %v1137
        %v1215 = vpack.c.b16 %v1140, %v1139
        %v1216 = vpack.c.b16 %v1142, %v1141
        %v1217 = vpack.c.b16 %v1144, %v1143
        %v1218 = vpack.c.b16 %v1146, %v1145
        %1291 = vmatprep.subr.bf16.mxu0 0
        %1292 = vmatpush1.bf16.msra.mxu0 %v1154
        %1293 = vmatprep.subr.bf16.mxu0 0
        %1294 = vmatpush1.bf16.msra.mxu0 %v1153
        %1295 = vmatprep.subr.bf16.mxu0 0
        %1296 = vmatpush1.bf16.msra.mxu0 %v1152
        %1297 = vmatprep.subr.bf16.mxu0 0
        %1298 = vmatpush1.bf16.msra.mxu0 %v1151
        %1299 = vmatprep.subr.bf16.mxu0 0
        %1300 = vmatpush1.bf16.msra.mxu0 %v1150
        %1301 = vmatprep.subr.bf16.mxu0 0
        %1302 = vmatpush1.bf16.msra.mxu0 %v1149
        %1303 = vmatprep.subr.bf16.mxu0 0
        %1304 = vmatpush1.bf16.msra.mxu0 %v1148
        %1305 = vmatprep.subr.bf16.mxu0 0
        %1306 = vmatpush1.bf16.msra.mxu0 %v1147
        %1307 = vmatprep.subr.bf16.mxu0 0
        %1308 = vmatpush2.bf16.msra.mxu0 %v1162
        %1309 = vmatprep.subr.bf16.mxu0 0
        %1310 = vmatpush2.bf16.msra.mxu0 %v1161
        %1311 = vmatprep.subr.bf16.mxu0 0
        %1312 = vmatpush2.bf16.msra.mxu0 %v1160
        %1313 = vmatprep.subr.bf16.mxu0 0
        %1314 = vmatpush2.bf16.msra.mxu0 %v1159
        %1315 = vmatprep.subr.bf16.mxu0 0
        %1316 = vmatpush2.bf16.msra.mxu0 %v1158
        %1317 = vmatprep.subr.bf16.mxu0 0
        %1318 = vmatpush2.bf16.msra.mxu0 %v1157
        %1319 = vmatprep.subr.bf16.mxu0 0
        %1320 = vmatpush2.bf16.msra.mxu0 %v1156
        %1321 = vmatprep.subr.bf16.mxu0 0
        %1322 = vmatpush2.bf16.msra.mxu0 %v1155
        %1323 = vmatprep.mubr.bf16.mxu0 %v738
        %1324 = vmatmul.mubr.bf16.gmra.mxu0 %v721
        %v1325 = vpop.f32.mrf.mxu0
        %v1326 = vadd.f32 %v702, %v1325
        %v1327 = vpop.f32.mrf.mxu0
        %v1328 = vpop.f32.mrf.mxu0
        %v1329 = vadd.f32 %v702, %v1328
        %v1330 = vpop.f32.mrf.mxu0
        %1331 = vdwg.mxu0
        %1332 = vmatprep.subr.bf16.mxu0 0
        %1333 = vmatpush1.bf16.msra.mxu0 %v1170
        %1334 = vmatprep.subr.bf16.mxu0 0
        %1335 = vmatpush1.bf16.msra.mxu0 %v1169
        %1336 = vmatprep.subr.bf16.mxu0 0
        %1337 = vmatpush1.bf16.msra.mxu0 %v1168
        %1338 = vmatprep.subr.bf16.mxu0 0
        %1339 = vmatpush1.bf16.msra.mxu0 %v1167
        %1340 = vmatprep.subr.bf16.mxu0 0
        %1341 = vmatpush1.bf16.msra.mxu0 %v1166
        %1342 = vmatprep.subr.bf16.mxu0 0
        %1343 = vmatpush1.bf16.msra.mxu0 %v1165
        %1344 = vmatprep.subr.bf16.mxu0 0
        %1345 = vmatpush1.bf16.msra.mxu0 %v1164
        %1346 = vmatprep.subr.bf16.mxu0 0
        %1347 = vmatpush1.bf16.msra.mxu0 %v1163
        %1348 = vmatprep.subr.bf16.mxu0 0
        %1349 = vmatpush2.bf16.msra.mxu0 %v1178
        %1350 = vmatprep.subr.bf16.mxu0 0
        %1351 = vmatpush2.bf16.msra.mxu0 %v1177
        %1352 = vmatprep.subr.bf16.mxu0 0
        %1353 = vmatpush2.bf16.msra.mxu0 %v1176
        %1354 = vmatprep.subr.bf16.mxu0 0
        %1355 = vmatpush2.bf16.msra.mxu0 %v1175
        %1356 = vmatprep.subr.bf16.mxu0 0
        %1357 = vmatpush2.bf16.msra.mxu0 %v1174
        %1358 = vmatprep.subr.bf16.mxu0 0
        %1359 = vmatpush2.bf16.msra.mxu0 %v1173
        %1360 = vmatprep.subr.bf16.mxu0 0
        %1361 = vmatpush2.bf16.msra.mxu0 %v1172
        %1362 = vmatprep.subr.bf16.mxu0 0
        %1363 = vmatpush2.bf16.msra.mxu0 %v1171
        %1364 = vmatprep.mubr.bf16.mxu0 %v772
        %1365 = vmatmul.mubr.bf16.gmra.mxu0 %v755
        %v1366 = vpop.f32.mrf.mxu0
        %v1367 = vadd.f32 %v1326, %v1366
        %v1368 = vpop.f32.mrf.mxu0
        %v1369 = vpop.f32.mrf.mxu0
        %v1370 = vadd.f32 %v1329, %v1369
        %v1371 = vpop.f32.mrf.mxu0
        %1372 = vdwg.mxu0
        %1373 = vmatprep.subr.bf16.mxu0 0
        %1374 = vmatpush1.bf16.msra.mxu0 %v1186
        %1375 = vmatprep.subr.bf16.mxu0 0
        %1376 = vmatpush1.bf16.msra.mxu0 %v1185
        %1377 = vmatprep.subr.bf16.mxu0 0
        %1378 = vmatpush1.bf16.msra.mxu0 %v1184
        %1379 = vmatprep.subr.bf16.mxu0 0
        %1380 = vmatpush1.bf16.msra.mxu0 %v1183
        %1381 = vmatprep.subr.bf16.mxu0 0
        %1382 = vmatpush1.bf16.msra.mxu0 %v1182
        %1383 = vmatprep.subr.bf16.mxu0 0
        %1384 = vmatpush1.bf16.msra.mxu0 %v1181
        %1385 = vmatprep.subr.bf16.mxu0 0
        %1386 = vmatpush1.bf16.msra.mxu0 %v1180
        %1387 = vmatprep.subr.bf16.mxu0 0
        %1388 = vmatpush1.bf16.msra.mxu0 %v1179
        %1389 = vmatprep.subr.bf16.mxu0 0
        %1390 = vmatpush2.bf16.msra.mxu0 %v1194
        %1391 = vmatprep.subr.bf16.mxu0 0
        %1392 = vmatpush2.bf16.msra.mxu0 %v1193
        %1393 = vmatprep.subr.bf16.mxu0 0
        %1394 = vmatpush2.bf16.msra.mxu0 %v1192
        %1395 = vmatprep.subr.bf16.mxu0 0
        %1396 = vmatpush2.bf16.msra.mxu0 %v1191
        %1397 = vmatprep.subr.bf16.mxu0 0
        %1398 = vmatpush2.bf16.msra.mxu0 %v1190
        %1399 = vmatprep.subr.bf16.mxu0 0
        %1400 = vmatpush2.bf16.msra.mxu0 %v1189
        %1401 = vmatprep.subr.bf16.mxu0 0
        %1402 = vmatpush2.bf16.msra.mxu0 %v1188
        %1403 = vmatprep.subr.bf16.mxu0 0
        %1404 = vmatpush2.bf16.msra.mxu0 %v1187
        %1405 = vmatprep.mubr.bf16.mxu0 %v798
        %1406 = vmatmul.mubr.bf16.gmra.mxu0 %v781
        %v1407 = vpop.f32.mrf.mxu0
        %v1408 = vadd.f32 %v1367, %v1407
        %v1409 = vpop.f32.mrf.mxu0
        %v1410 = vpop.f32.mrf.mxu0
        %v1411 = vadd.f32 %v1370, %v1410
        %v1412 = vpop.f32.mrf.mxu0
        %1413 = vdwg.mxu0
        %1414 = vmatprep.subr.bf16.mxu0 0
        %1415 = vmatpush1.bf16.msra.mxu0 %v1202
        %1416 = vmatprep.subr.bf16.mxu0 0
        %1417 = vmatpush1.bf16.msra.mxu0 %v1201
        %1418 = vmatprep.subr.bf16.mxu0 0
        %1419 = vmatpush1.bf16.msra.mxu0 %v1200
        %1420 = vmatprep.subr.bf16.mxu0 0
        %1421 = vmatpush1.bf16.msra.mxu0 %v1199
        %1422 = vmatprep.subr.bf16.mxu0 0
        %1423 = vmatpush1.bf16.msra.mxu0 %v1198
        %1424 = vmatprep.subr.bf16.mxu0 0
        %1425 = vmatpush1.bf16.msra.mxu0 %v1197
        %1426 = vmatprep.subr.bf16.mxu0 0
        %1427 = vmatpush1.bf16.msra.mxu0 %v1196
        %1428 = vmatprep.subr.bf16.mxu0 0
        %1429 = vmatpush1.bf16.msra.mxu0 %v1195
        %1430 = vmatprep.subr.bf16.mxu0 0
        %1431 = vmatpush2.bf16.msra.mxu0 %v1210
        %1432 = vmatprep.subr.bf16.mxu0 0
        %1433 = vmatpush2.bf16.msra.mxu0 %v1209
        %1434 = vmatprep.subr.bf16.mxu0 0
        %1435 = vmatpush2.bf16.msra.mxu0 %v1208
        %1436 = vmatprep.subr.bf16.mxu0 0
        %1437 = vmatpush2.bf16.msra.mxu0 %v1207
        %1438 = vmatprep.subr.bf16.mxu0 0
        %1439 = vmatpush2.bf16.msra.mxu0 %v1206
        %1440 = vmatprep.subr.bf16.mxu0 0
        %1441 = vmatpush2.bf16.msra.mxu0 %v1205
        %1442 = vmatprep.subr.bf16.mxu0 0
        %1443 = vmatpush2.bf16.msra.mxu0 %v1204
        %1444 = vmatprep.subr.bf16.mxu0 0
        %1445 = vmatpush2.bf16.msra.mxu0 %v1203
        %1446 = vmatprep.mubr.bf16.mxu0 %v832
        %1447 = vmatmul.mubr.bf16.gmra.mxu0 %v815
        %v1448 = vpop.f32.mrf.mxu0
        %v1449 = vadd.f32 %v1408, %v1448
        %v1450 = vpop.f32.mrf.mxu0
        %v1451 = vpop.f32.mrf.mxu0
        %v1452 = vadd.f32 %v1411, %v1451
        %v1453 = vpop.f32.mrf.mxu0
        %1454 = vdwg.mxu0
        %1455 = vmatprep.subr.bf16.mxu0 0
        %1456 = vmatpush1.bf16.msra.mxu0 %v1218
        %1457 = vmatprep.subr.bf16.mxu0 0
        %1458 = vmatpush1.bf16.msra.mxu0 %v1217
        %1459 = vmatprep.subr.bf16.mxu0 0
        %1460 = vmatpush1.bf16.msra.mxu0 %v1216
        %1461 = vmatprep.subr.bf16.mxu0 0
        %1462 = vmatpush1.bf16.msra.mxu0 %v1215
        %1463 = vmatprep.subr.bf16.mxu0 0
        %1464 = vmatpush1.bf16.msra.mxu0 %v1214
        %1465 = vmatprep.subr.bf16.mxu0 0
        %1466 = vmatpush1.bf16.msra.mxu0 %v1213
        %1467 = vmatprep.subr.bf16.mxu0 0
        %1468 = vmatpush1.bf16.msra.mxu0 %v1212
        %1469 = vmatprep.subr.bf16.mxu0 0
        %1470 = vmatpush1.bf16.msra.mxu0 %v1211
        %1471 = vmatprep.subr.bf16.mxu0 0
        %1472 = vmatpush2.bf16.msra.mxu0 0
        %1473 = vmatprep.subr.bf16.mxu0 0
        %1474 = vmatpush2.bf16.msra.mxu0 0
        %1475 = vmatprep.subr.bf16.mxu0 0
        %1476 = vmatpush2.bf16.msra.mxu0 0
        %1477 = vmatprep.subr.bf16.mxu0 0
        %1478 = vmatpush2.bf16.msra.mxu0 0
        %1479 = vmatprep.subr.bf16.mxu0 0
        %1480 = vmatpush2.bf16.msra.mxu0 0
        %1481 = vmatprep.subr.bf16.mxu0 0
        %1482 = vmatpush2.bf16.msra.mxu0 0
        %1483 = vmatprep.subr.bf16.mxu0 0
        %1484 = vmatpush2.bf16.msra.mxu0 0
        %1485 = vmatprep.subr.bf16.mxu0 0
        %1486 = vmatpush2.bf16.msra.mxu0 0
        %1487 = vmatprep.mubr.bf16.mxu0 0
        %1488 = vmatmul.mubr.bf16.gmra.mxu0 %v849
        %v1489 = vpop.f32.mrf.mxu0
        %v1490 = vadd.f32 %v1449, %v1489
        %v1491 = vpop.f32.mrf.mxu0
        %v1492 = vpop.f32.mrf.mxu0
        %v1493 = vadd.f32 %v1452, %v1492
        %v1494 = vpop.f32.mrf.mxu0
        %1495 = vdwg.mxu0
        %v1496 = vmax.f32 %v1490, 0.0
        %v1497 = vmax.f32 %v1493, 0.0
        %v1498 = vpack.c.bf16 %v1497, %v1496
        %v1500 = vunpack.c.l.b16 %v1498
        %v1501 = vunpack.c.h.b16 %v1498
        %v1502 = vpack.c.b16 %v1500, %v1500
        %v1503 = vpack.c.b16 %v1501, %v1501
        %1506 = vst [vmem:[#allocation2 + $0x4] sm:$0xf] %v1502
        %1507 = vst [vmem:[#allocation2 + $0x8] sm:$0xf] %v1503
        %v1508 = vld [vmem:[#allocation2] sm:$0xe]
        %v1509 = vld [vmem:[#allocation2 + $0x4] sm:$0xf]
        %v1510 = vld [vmem:[#allocation2 + $0x8] sm:$0x3]
        %v1511 = vsel %vm333, %v1508, 0
        %v1512 = vsel %vm334, %v1509, 0
        %v1513 = vsel %vm335, %v1510, 0
        %v1514 = vld [vmem:[#allocation2] sm:$0xc]
        %v1515 = vld [vmem:[#allocation2 + $0x8] sm:$0x7]
        %v1516 = vsel %vm377, %v1514, 0
        %v1517 = vsel %vm378, %v1509, 0
        %v1518 = vsel %vm379, %v1515, 0
        %v1519 = vld [vmem:[#allocation2] sm:$0x8]
        %v1520 = vld [vmem:[#allocation2 + $0x8] sm:$0xf]
        %v1521 = vsel %vm397, %v1519, 0
        %v1522 = vsel %vm398, %v1509, 0
        %v1523 = vsel %vm399, %v1520, 0
        %v1524 = vld [vmem:[#allocation2 + $0x4] sm:$0xf]
        %v1525 = vld [vmem:[#allocation2 + $0x8] sm:$0xf]
        %v1526 = vld [vmem:[#allocation2 + $0xc] sm:$0x1]
        %v1527 = vsel %vm416, %v1524, 0
        %v1528 = vsel %vm417, %v1525, 0
        %v1529 = vsel %vm418, %v1526, 0
        %v1530 = vld [vmem:[#allocation2 + $0x4] sm:$0xe]
        %v1531 = vld [vmem:[#allocation2 + $0xc] sm:$0x3]
        %v1532 = vsel %vm333, %v1530, 0
        %v1533 = vsel %vm334, %v1525, 0
        %v1534 = vsel %vm335, %v1531, 0
        %v1535 = vld [vmem:[#allocation2 + $0x4] sm:$0xc]
        %v1536 = vld [vmem:[#allocation2 + $0xc] sm:$0x7]
        %v1537 = vsel %vm377, %v1535, 0
        %v1538 = vsel %vm378, %v1525, 0
        %v1539 = vsel %vm379, %v1536, 0
        %v1543 = vunpack.c.l.b16 %v1511
        %v1544 = vunpack.c.l.b16 %v1512
        %v1545 = vunpack.c.l.b16 %v1513
        %v1546 = vpack.c.b16 %v1544, %v1543
        %v1547 = vpack.c.b16 %v1545, %v1545
        %v1551 = vunpack.c.l.b16 %v1514
        %v1552 = vunpack.c.l.b16 %v1509
        %v1553 = vunpack.c.l.b16 %v1510
        %v1554 = vpack.c.b16 %v1552, %v1551
        %v1555 = vpack.c.b16 %v1553, %v1553
        %v1557 = vshrl.u32 %v1554, 16
        %v1559 = vshll.u32 %v1554, 16
        %v1561 = vrot.slane %v1559, 1
        %v1562 = vor.u32 %v1557, %v1561
        %v1564 = vshll.u32 %v1555, 16
        %v1566 = vrot.slane %v1564, 1
        %v1567 = vsel %vm448, %v1562, %v1566
        %v1568 = vshrl.u32 %v1555, 16
        %v1570 = vor.u32 %v1568, %v1566
        %v1574 = vunpack.c.l.b16 %v1516
        %v1575 = vunpack.c.l.b16 %v1517
        %v1576 = vunpack.c.l.b16 %v1518
        %v1577 = vpack.c.b16 %v1575, %v1574
        %v1578 = vpack.c.b16 %v1576, %v1576
        %v1579 = vrot.slane %v1577, 1
        %v1580 = vrot.slane %v1578, 1
        %v1581 = vsel %vm472, %v1579, %v1580
        %v1585 = vunpack.c.l.b16 %v1521
        %v1586 = vunpack.c.l.b16 %v1522
        %v1587 = vunpack.c.l.b16 %v1523
        %v1588 = vpack.c.b16 %v1586, %v1585
        %v1589 = vpack.c.b16 %v1587, %v1587
        %v1590 = vrot.slane %v1588, 2
        %v1591 = vrot.slane %v1589, 2
        %v1592 = vsel %vm484, %v1590, %v1591
        %v1594 = vunpack.c.l.b16 %v1520
        %v1595 = vpack.c.b16 %v1594, %v1552
        %v1597 = vshrl.u32 %v1595, 16
        %v1599 = vrot.slane %v1597, 6
        %v1600 = vshll.u32 %v1595, 16
        %v1602 = vrot.slane %v1600, 7
        %v1603 = vor.u32 %v1599, %v1602
        %v1607 = vunpack.c.l.b16 %v1527
        %v1608 = vunpack.c.l.b16 %v1528
        %v1609 = vunpack.c.l.b16 %v1529
        %v1610 = vpack.c.b16 %v1608, %v1607
        %v1611 = vpack.c.b16 %v1609, %v1609
        %v1612 = vrot.slane %v1610, 7
        %v1613 = vrot.slane %v1611, 7
        %v1614 = vsel %vm507, %v1612, %v1613
        %v1618 = vunpack.c.l.b16 %v1532
        %v1619 = vunpack.c.l.b16 %v1533
        %v1620 = vunpack.c.l.b16 %v1534
        %v1621 = vpack.c.b16 %v1619, %v1618
        %v1622 = vpack.c.b16 %v1620, %v1620
        %v1626 = vunpack.c.l.b16 %v1535
        %v1627 = vunpack.c.l.b16 %v1525
        %v1628 = vunpack.c.l.b16 %v1531
        %v1629 = vpack.c.b16 %v1627, %v1626
        %v1630 = vpack.c.b16 %v1628, %v1628
        %v1632 = vshrl.u32 %v1629, 16
        %v1634 = vshll.u32 %v1629, 16
        %v1636 = vrot.slane %v1634, 1
        %v1637 = vor.u32 %v1632, %v1636
        %v1639 = vshll.u32 %v1630, 16
        %v1641 = vrot.slane %v1639, 1
        %v1642 = vsel %vm448, %v1637, %v1641
        %v1643 = vshrl.u32 %v1630, 16
        %v1645 = vor.u32 %v1643, %v1641
        %v1649 = vunpack.c.l.b16 %v1537
        %v1650 = vunpack.c.l.b16 %v1538
        %v1651 = vunpack.c.l.b16 %v1539
        %v1652 = vpack.c.b16 %v1650, %v1649
        %v1653 = vpack.c.b16 %v1651, %v1651
        %v1654 = vrot.slane %v1652, 1
        %v1655 = vrot.slane %v1653, 1
        %v1656 = vsel %vm472, %v1654, %v1655
        %v1657 = vld [vmem:[%s3] sm:$0xf]
        %v1658 = vld [vmem:[%s3 + $0x4] sm:$0xf]
        %v1659 = vld [vmem:[%s3 + $0x8] sm:$0xf]
        %v1660 = vld [vmem:[%s3 + $0xc] sm:$0xf]
        %v1661 = vld [vmem:[%s3 + $0x10] sm:$0xf]
        %v1662 = vld [vmem:[%s3 + $0x14] sm:$0xf]
        %v1663 = vld [vmem:[%s3 + $0x18] sm:$0xf]
        %v1664 = vld [vmem:[%s3 + $0x1c] sm:$0xf]
        %v1665 = vld [vmem:[%s3 + $0x20] sm:$0xf]
        %v1666 = vld [vmem:[%s3 + $0x24] sm:$0xf]
        %v1667 = vld [vmem:[%s3 + $0x28] sm:$0xf]
        %v1668 = vld [vmem:[%s3 + $0x2c] sm:$0xf]
        %v1669 = vld [vmem:[%s3 + $0x30] sm:$0xf]
        %v1670 = vld [vmem:[%s3 + $0x34] sm:$0xf]
        %v1671 = vld [vmem:[%s3 + $0x38] sm:$0xf]
        %v1672 = vld [vmem:[%s3 + $0x3c] sm:$0xf]
        %v1673 = vld [vmem:[%s3 + $0x40] sm:$0xf]
        %v1674 = vld [vmem:[%s3 + $0x44] sm:$0xf]
        %v1675 = vld [vmem:[%s3 + $0x48] sm:$0xf]
        %v1676 = vld [vmem:[%s3 + $0x4c] sm:$0xf]
        %v1677 = vld [vmem:[%s3 + $0x50] sm:$0xf]
        %v1678 = vld [vmem:[%s3 + $0x54] sm:$0xf]
        %v1679 = vld [vmem:[%s3 + $0x58] sm:$0xf]
        %v1680 = vld [vmem:[%s3 + $0x5c] sm:$0xf]
        %v1681 = vld [vmem:[%s3 + $0x60] sm:$0xf]
        %v1682 = vld [vmem:[%s3 + $0x64] sm:$0xf]
        %v1683 = vld [vmem:[%s3 + $0x68] sm:$0xf]
        %v1684 = vld [vmem:[%s3 + $0x6c] sm:$0xf]
        %v1685 = vld [vmem:[%s3 + $0x70] sm:$0xf]
        %v1686 = vld [vmem:[%s3 + $0x74] sm:$0xf]
        %v1687 = vld [vmem:[%s3 + $0x78] sm:$0xf]
        %v1688 = vld [vmem:[%s3 + $0x7c] sm:$0xf]
        %v1689 = vld [vmem:[%s3 + $0x80] sm:$0xf]
        %v1690 = vld [vmem:[%s3 + $0x84] sm:$0xf]
        %v1691 = vld [vmem:[%s3 + $0x88] sm:$0xf]
        %v1692 = vld [vmem:[%s3 + $0x8c] sm:$0xf]
        %v1693 = vld [vmem:[%s3 + $0x90] sm:$0xf]
        %v1694 = vld [vmem:[%s3 + $0x94] sm:$0xf]
        %v1695 = vld [vmem:[%s3 + $0x98] sm:$0xf]
        %v1696 = vld [vmem:[%s3 + $0x9c] sm:$0xf]
        %v1697 = vld [vmem:[%s3 + $0xa0] sm:$0xf]
        %v1698 = vld [vmem:[%s3 + $0xa4] sm:$0xf]
        %v1699 = vld [vmem:[%s3 + $0xa8] sm:$0xf]
        %v1700 = vld [vmem:[%s3 + $0xac] sm:$0xf]
        %v1701 = vld [vmem:[%s3 + $0xb0] sm:$0xf]
        %v1702 = vld [vmem:[%s3 + $0xb4] sm:$0xf]
        %v1703 = vld [vmem:[%s3 + $0xb8] sm:$0xf]
        %v1704 = vld [vmem:[%s3 + $0xbc] sm:$0xf]
        %v1705 = vld [vmem:[%s3 + $0xc0] sm:$0xf]
        %v1706 = vld [vmem:[%s3 + $0xc4] sm:$0xf]
        %v1707 = vld [vmem:[%s3 + $0xc8] sm:$0xf]
        %v1708 = vld [vmem:[%s3 + $0xcc] sm:$0xf]
        %v1709 = vld [vmem:[%s3 + $0xd0] sm:$0xf]
        %v1710 = vld [vmem:[%s3 + $0xd4] sm:$0xf]
        %v1711 = vld [vmem:[%s3 + $0xd8] sm:$0xf]
        %v1712 = vld [vmem:[%s3 + $0xdc] sm:$0xf]
        %v1713 = vld [vmem:[%s3 + $0xe0] sm:$0xf]
        %v1714 = vld [vmem:[%s3 + $0xe4] sm:$0xf]
        %v1715 = vld [vmem:[%s3 + $0xe8] sm:$0xf]
        %v1716 = vld [vmem:[%s3 + $0xec] sm:$0xf]
        %v1717 = vld [vmem:[%s3 + $0xf0] sm:$0xf]
        %v1718 = vld [vmem:[%s3 + $0xf4] sm:$0xf]
        %v1719 = vld [vmem:[%s3 + $0xf8] sm:$0xf]
        %v1720 = vld [vmem:[%s3 + $0xfc] sm:$0xf]
        %v1721 = vld [vmem:[%s3 + $0x100] sm:$0xf]
        %v1722 = vld [vmem:[%s3 + $0x104] sm:$0xf]
        %v1723 = vld [vmem:[%s3 + $0x108] sm:$0xf]
        %v1724 = vld [vmem:[%s3 + $0x10c] sm:$0xf]
        %v1725 = vld [vmem:[%s3 + $0x110] sm:$0xf]
        %v1726 = vld [vmem:[%s3 + $0x114] sm:$0xf]
        %v1727 = vld [vmem:[%s3 + $0x118] sm:$0xf]
        %v1728 = vld [vmem:[%s3 + $0x11c] sm:$0xf]
        %v1729 = vld [vmem:[%s3 + $0x120] sm:$0xf]
        %v1730 = vld [vmem:[%s3 + $0x124] sm:$0xf]
        %v1731 = vld [vmem:[%s3 + $0x128] sm:$0xf]
        %v1732 = vld [vmem:[%s3 + $0x12c] sm:$0xf]
        %v1733 = vld [vmem:[%s3 + $0x130] sm:$0xf]
        %v1734 = vld [vmem:[%s3 + $0x134] sm:$0xf]
        %v1735 = vld [vmem:[%s3 + $0x138] sm:$0xf]
        %v1736 = vld [vmem:[%s3 + $0x13c] sm:$0xf]
        %v1737 = vld [vmem:[%s3 + $0x140] sm:$0xf]
        %v1738 = vld [vmem:[%s3 + $0x144] sm:$0xf]
        %v1739 = vld [vmem:[%s3 + $0x148] sm:$0xf]
        %v1740 = vld [vmem:[%s3 + $0x14c] sm:$0xf]
        %v1741 = vld [vmem:[%s3 + $0x150] sm:$0xf]
        %v1742 = vld [vmem:[%s3 + $0x154] sm:$0xf]
        %v1743 = vld [vmem:[%s3 + $0x158] sm:$0xf]
        %v1744 = vld [vmem:[%s3 + $0x15c] sm:$0xf]
        %v1745 = vld [vmem:[%s3 + $0x160] sm:$0xf]
        %v1746 = vld [vmem:[%s3 + $0x164] sm:$0xf]
        %v1747 = vld [vmem:[%s3 + $0x168] sm:$0xf]
        %v1748 = vld [vmem:[%s3 + $0x16c] sm:$0xf]
        %v1749 = vld [vmem:[%s3 + $0x170] sm:$0xf]
        %v1750 = vld [vmem:[%s3 + $0x174] sm:$0xf]
        %v1751 = vld [vmem:[%s3 + $0x178] sm:$0xf]
        %v1752 = vld [vmem:[%s3 + $0x17c] sm:$0xf]
        %v1753 = vld [vmem:[%s3 + $0x180] sm:$0xf]
        %v1754 = vld [vmem:[%s3 + $0x184] sm:$0xf]
        %v1755 = vld [vmem:[%s3 + $0x188] sm:$0xf]
        %v1756 = vld [vmem:[%s3 + $0x18c] sm:$0xf]
        %v1757 = vld [vmem:[%s3 + $0x190] sm:$0xf]
        %v1758 = vld [vmem:[%s3 + $0x194] sm:$0xf]
        %v1759 = vld [vmem:[%s3 + $0x198] sm:$0xf]
        %v1760 = vld [vmem:[%s3 + $0x19c] sm:$0xf]
        %v1761 = vld [vmem:[%s3 + $0x1a0] sm:$0xf]
        %v1762 = vld [vmem:[%s3 + $0x1a4] sm:$0xf]
        %v1763 = vld [vmem:[%s3 + $0x1a8] sm:$0xf]
        %v1764 = vld [vmem:[%s3 + $0x1ac] sm:$0xf]
        %v1765 = vld [vmem:[%s3 + $0x1b0] sm:$0xf]
        %v1766 = vld [vmem:[%s3 + $0x1b4] sm:$0xf]
        %v1767 = vld [vmem:[%s3 + $0x1b8] sm:$0xf]
        %v1768 = vld [vmem:[%s3 + $0x1bc] sm:$0xf]
        %v1769 = vld [vmem:[%s3 + $0x1c0] sm:$0xf]
        %v1770 = vld [vmem:[%s3 + $0x1c4] sm:$0xf]
        %v1771 = vld [vmem:[%s3 + $0x1c8] sm:$0xf]
        %v1772 = vld [vmem:[%s3 + $0x1cc] sm:$0xf]
        %v1773 = vld [vmem:[%s3 + $0x1d0] sm:$0xf]
        %v1774 = vld [vmem:[%s3 + $0x1d4] sm:$0xf]
        %v1775 = vld [vmem:[%s3 + $0x1d8] sm:$0xf]
        %v1776 = vld [vmem:[%s3 + $0x1dc] sm:$0xf]
        %v1777 = vld [vmem:[%s3 + $0x1e0] sm:$0xf]
        %v1778 = vld [vmem:[%s3 + $0x1e4] sm:$0xf]
        %v1779 = vld [vmem:[%s3 + $0x1e8] sm:$0xf]
        %v1780 = vld [vmem:[%s3 + $0x1ec] sm:$0xf]
        %v1781 = vld [vmem:[%s3 + $0x1f0] sm:$0xf]
        %v1782 = vld [vmem:[%s3 + $0x1f4] sm:$0xf]
        %v1783 = vld [vmem:[%s3 + $0x1f8] sm:$0xf]
        %v1784 = vld [vmem:[%s3 + $0x1fc] sm:$0xf]
        %v1785 = vld [vmem:[%s3 + $0x200] sm:$0xf]
        %v1786 = vld [vmem:[%s3 + $0x204] sm:$0xf]
        %v1787 = vld [vmem:[%s3 + $0x208] sm:$0xf]
        %v1788 = vld [vmem:[%s3 + $0x20c] sm:$0xf]
        %v1789 = vld [vmem:[%s3 + $0x210] sm:$0xf]
        %v1790 = vld [vmem:[%s3 + $0x214] sm:$0xf]
        %v1791 = vld [vmem:[%s3 + $0x218] sm:$0xf]
        %v1792 = vld [vmem:[%s3 + $0x21c] sm:$0xf]
        %v1793 = vld [vmem:[%s3 + $0x220] sm:$0xf]
        %v1794 = vld [vmem:[%s3 + $0x224] sm:$0xf]
        %v1795 = vld [vmem:[%s3 + $0x228] sm:$0xf]
        %v1796 = vld [vmem:[%s3 + $0x22c] sm:$0xf]
        %v1797 = vld [vmem:[%s3 + $0x230] sm:$0xf]
        %v1798 = vld [vmem:[%s3 + $0x234] sm:$0xf]
        %v1799 = vld [vmem:[%s3 + $0x238] sm:$0xf]
        %v1800 = vld [vmem:[%s3 + $0x23c] sm:$0xf]
        %v1802 = vshrl.u32 %v1546, 16
        %v1804 = vrot.slane %v1802, 1
        %v1805 = vshll.u32 %v1546, 16
        %v1807 = vrot.slane %v1805, 2
        %v1808 = vor.u32 %v1804, %v1807
        %v1810 = vshrl.u32 %v1547, 16
        %v1812 = vrot.slane %v1810, 1
        %v1813 = vshll.u32 %v1547, 16
        %v1815 = vrot.slane %v1813, 2
        %v1816 = vor.u32 %v1812, %v1815
        %v1817 = vsel %vm704, %v1808, %v1816
        %v1819 = vshrl.u32 %v1567, 16
        %v1821 = vrot.slane %v1819, 1
        %v1822 = vshll.u32 %v1567, 16
        %v1824 = vrot.slane %v1822, 2
        %v1825 = vor.u32 %v1821, %v1824
        %v1827 = vshrl.u32 %v1570, 16
        %v1829 = vrot.slane %v1827, 1
        %v1830 = vshll.u32 %v1570, 16
        %v1832 = vrot.slane %v1830, 2
        %v1833 = vor.u32 %v1829, %v1832
        %v1834 = vsel %vm704, %v1825, %v1833
        %v1836 = vshrl.u32 %v1581, 16
        %v1838 = vrot.slane %v1836, 1
        %v1839 = vshll.u32 %v1581, 16
        %v1841 = vrot.slane %v1839, 2
        %v1842 = vor.u32 %v1838, %v1841
        %v1844 = vshrl.u32 %v1580, 16
        %v1846 = vrot.slane %v1844, 1
        %v1847 = vshll.u32 %v1580, 16
        %v1849 = vrot.slane %v1847, 2
        %v1850 = vor.u32 %v1846, %v1849
        %v1851 = vsel %vm704, %v1842, %v1850
        %v1853 = vshrl.u32 %v1592, 16
        %v1855 = vrot.slane %v1853, 1
        %v1856 = vshll.u32 %v1592, 16
        %v1858 = vrot.slane %v1856, 2
        %v1859 = vor.u32 %v1855, %v1858
        %v1861 = vshrl.u32 %v1591, 16
        %v1863 = vrot.slane %v1861, 1
        %v1864 = vshll.u32 %v1591, 16
        %v1866 = vrot.slane %v1864, 2
        %v1867 = vor.u32 %v1863, %v1866
        %v1868 = vsel %vm704, %v1859, %v1867
        %v1870 = vshrl.u32 %v1603, 16
        %v1872 = vrot.slane %v1870, 1
        %v1873 = vshll.u32 %v1603, 16
        %v1875 = vrot.slane %v1873, 2
        %v1876 = vor.u32 %v1872, %v1875
        %v1877 = vsel %vm704, %v1876, %v1876
        %v1879 = vshrl.u32 %v1612, 16
        %v1881 = vrot.slane %v1879, 1
        %v1882 = vshll.u32 %v1612, 16
        %v1884 = vrot.slane %v1882, 2
        %v1885 = vor.u32 %v1881, %v1884
        %v1887 = vshrl.u32 %v1614, 16
        %v1889 = vrot.slane %v1887, 1
        %v1890 = vshll.u32 %v1614, 16
        %v1892 = vrot.slane %v1890, 2
        %v1893 = vor.u32 %v1889, %v1892
        %v1894 = vsel %vm704, %v1885, %v1893
        %v1896 = vshrl.u32 %v1621, 16
        %v1898 = vrot.slane %v1896, 1
        %v1899 = vshll.u32 %v1621, 16
        %v1901 = vrot.slane %v1899, 2
        %v1902 = vor.u32 %v1898, %v1901
        %v1904 = vshrl.u32 %v1622, 16
        %v1906 = vrot.slane %v1904, 1
        %v1907 = vshll.u32 %v1622, 16
        %v1909 = vrot.slane %v1907, 2
        %v1910 = vor.u32 %v1906, %v1909
        %v1911 = vsel %vm704, %v1902, %v1910
        %v1913 = vshrl.u32 %v1642, 16
        %v1915 = vrot.slane %v1913, 1
        %v1916 = vshll.u32 %v1642, 16
        %v1918 = vrot.slane %v1916, 2
        %v1919 = vor.u32 %v1915, %v1918
        %v1921 = vshrl.u32 %v1645, 16
        %v1923 = vrot.slane %v1921, 1
        %v1924 = vshll.u32 %v1645, 16
        %v1926 = vrot.slane %v1924, 2
        %v1927 = vor.u32 %v1923, %v1926
        %v1928 = vsel %vm704, %v1919, %v1927
        %v1930 = vshrl.u32 %v1656, 16
        %v1932 = vrot.slane %v1930, 1
        %v1933 = vshll.u32 %v1656, 16
        %v1935 = vrot.slane %v1933, 2
        %v1936 = vor.u32 %v1932, %v1935
        %v1938 = vshrl.u32 %v1655, 16
        %v1940 = vrot.slane %v1938, 1
        %v1941 = vshll.u32 %v1655, 16
        %v1943 = vrot.slane %v1941, 2
        %v1944 = vor.u32 %v1940, %v1943
        %v1945 = vsel %vm704, %v1936, %v1944
        %v2099 = vunpack.c.l.b16 %v1657
        %v2100 = vunpack.c.l.b16 %v1658
        %v2101 = vunpack.c.l.b16 %v1659
        %v2102 = vunpack.c.l.b16 %v1660
        %v2103 = vunpack.c.l.b16 %v1661
        %v2104 = vunpack.c.l.b16 %v1662
        %v2105 = vunpack.c.l.b16 %v1663
        %v2106 = vunpack.c.l.b16 %v1664
        %v2107 = vunpack.c.l.b16 %v1665
        %v2108 = vunpack.c.l.b16 %v1666
        %v2109 = vunpack.c.l.b16 %v1667
        %v2110 = vunpack.c.l.b16 %v1668
        %v2111 = vunpack.c.l.b16 %v1669
        %v2112 = vunpack.c.l.b16 %v1670
        %v2113 = vunpack.c.l.b16 %v1671
        %v2114 = vunpack.c.l.b16 %v1672
        %v2115 = vunpack.c.l.b16 %v1673
        %v2116 = vunpack.c.l.b16 %v1674
        %v2117 = vunpack.c.l.b16 %v1675
        %v2118 = vunpack.c.l.b16 %v1676
        %v2119 = vunpack.c.l.b16 %v1677
        %v2120 = vunpack.c.l.b16 %v1678
        %v2121 = vunpack.c.l.b16 %v1679
        %v2122 = vunpack.c.l.b16 %v1680
        %v2123 = vunpack.c.l.b16 %v1681
        %v2124 = vunpack.c.l.b16 %v1682
        %v2125 = vunpack.c.l.b16 %v1683
        %v2126 = vunpack.c.l.b16 %v1684
        %v2127 = vunpack.c.l.b16 %v1685
        %v2128 = vunpack.c.l.b16 %v1686
        %v2129 = vunpack.c.l.b16 %v1687
        %v2130 = vunpack.c.l.b16 %v1688
        %v2131 = vunpack.c.l.b16 %v1689
        %v2132 = vunpack.c.l.b16 %v1690
        %v2133 = vunpack.c.l.b16 %v1691
        %v2134 = vunpack.c.l.b16 %v1692
        %v2135 = vunpack.c.l.b16 %v1693
        %v2136 = vunpack.c.l.b16 %v1694
        %v2137 = vunpack.c.l.b16 %v1695
        %v2138 = vunpack.c.l.b16 %v1696
        %v2139 = vunpack.c.l.b16 %v1697
        %v2140 = vunpack.c.l.b16 %v1698
        %v2141 = vunpack.c.l.b16 %v1699
        %v2142 = vunpack.c.l.b16 %v1700
        %v2143 = vunpack.c.l.b16 %v1701
        %v2144 = vunpack.c.l.b16 %v1702
        %v2145 = vunpack.c.l.b16 %v1703
        %v2146 = vunpack.c.l.b16 %v1704
        %v2147 = vunpack.c.l.b16 %v1705
        %v2148 = vunpack.c.l.b16 %v1706
        %v2149 = vunpack.c.l.b16 %v1707
        %v2150 = vunpack.c.l.b16 %v1708
        %v2151 = vunpack.c.l.b16 %v1709
        %v2152 = vunpack.c.l.b16 %v1710
        %v2153 = vunpack.c.l.b16 %v1711
        %v2154 = vunpack.c.l.b16 %v1712
        %v2155 = vunpack.c.l.b16 %v1713
        %v2156 = vunpack.c.l.b16 %v1714
        %v2157 = vunpack.c.l.b16 %v1715
        %v2158 = vunpack.c.l.b16 %v1716
        %v2159 = vunpack.c.l.b16 %v1717
        %v2160 = vunpack.c.l.b16 %v1718
        %v2161 = vunpack.c.l.b16 %v1719
        %v2162 = vunpack.c.l.b16 %v1720
        %v2163 = vunpack.c.l.b16 %v1721
        %v2164 = vunpack.c.l.b16 %v1722
        %v2165 = vunpack.c.l.b16 %v1723
        %v2166 = vunpack.c.l.b16 %v1724
        %v2167 = vunpack.c.l.b16 %v1725
        %v2168 = vunpack.c.l.b16 %v1726
        %v2169 = vunpack.c.l.b16 %v1727
        %v2170 = vunpack.c.l.b16 %v1728
        %v2171 = vunpack.c.l.b16 %v1729
        %v2172 = vunpack.c.l.b16 %v1730
        %v2173 = vunpack.c.l.b16 %v1731
        %v2174 = vunpack.c.l.b16 %v1732
        %v2175 = vunpack.c.l.b16 %v1733
        %v2176 = vunpack.c.l.b16 %v1734
        %v2177 = vunpack.c.l.b16 %v1735
        %v2178 = vunpack.c.l.b16 %v1736
        %v2179 = vunpack.c.l.b16 %v1737
        %v2180 = vunpack.c.l.b16 %v1738
        %v2181 = vunpack.c.l.b16 %v1739
        %v2182 = vunpack.c.l.b16 %v1740
        %v2183 = vunpack.c.l.b16 %v1741
        %v2184 = vunpack.c.l.b16 %v1742
        %v2185 = vunpack.c.l.b16 %v1743
        %v2186 = vunpack.c.l.b16 %v1744
        %v2187 = vunpack.c.l.b16 %v1745
        %v2188 = vunpack.c.l.b16 %v1746
        %v2189 = vunpack.c.l.b16 %v1747
        %v2190 = vunpack.c.l.b16 %v1748
        %v2191 = vunpack.c.l.b16 %v1749
        %v2192 = vunpack.c.l.b16 %v1750
        %v2193 = vunpack.c.l.b16 %v1751
        %v2194 = vunpack.c.l.b16 %v1752
        %v2195 = vunpack.c.l.b16 %v1753
        %v2196 = vunpack.c.l.b16 %v1754
        %v2197 = vunpack.c.l.b16 %v1755
        %v2198 = vunpack.c.l.b16 %v1756
        %v2199 = vunpack.c.l.b16 %v1757
        %v2200 = vunpack.c.l.b16 %v1758
        %v2201 = vunpack.c.l.b16 %v1759
        %v2202 = vunpack.c.l.b16 %v1760
        %v2203 = vunpack.c.l.b16 %v1761
        %v2204 = vunpack.c.l.b16 %v1762
        %v2205 = vunpack.c.l.b16 %v1763
        %v2206 = vunpack.c.l.b16 %v1764
        %v2207 = vunpack.c.l.b16 %v1765
        %v2208 = vunpack.c.l.b16 %v1766
        %v2209 = vunpack.c.l.b16 %v1767
        %v2210 = vunpack.c.l.b16 %v1768
        %v2211 = vunpack.c.l.b16 %v1769
        %v2212 = vunpack.c.l.b16 %v1770
        %v2213 = vunpack.c.l.b16 %v1771
        %v2214 = vunpack.c.l.b16 %v1772
        %v2215 = vunpack.c.l.b16 %v1773
        %v2216 = vunpack.c.l.b16 %v1774
        %v2217 = vunpack.c.l.b16 %v1775
        %v2218 = vunpack.c.l.b16 %v1776
        %v2219 = vunpack.c.l.b16 %v1777
        %v2220 = vunpack.c.l.b16 %v1778
        %v2221 = vunpack.c.l.b16 %v1779
        %v2222 = vunpack.c.l.b16 %v1780
        %v2223 = vunpack.c.l.b16 %v1781
        %v2224 = vunpack.c.l.b16 %v1782
        %v2225 = vunpack.c.l.b16 %v1783
        %v2226 = vunpack.c.l.b16 %v1784
        %v2227 = vunpack.c.l.b16 %v1785
        %v2228 = vunpack.c.l.b16 %v1786
        %v2229 = vunpack.c.l.b16 %v1787
        %v2230 = vunpack.c.l.b16 %v1788
        %v2231 = vunpack.c.l.b16 %v1789
        %v2232 = vunpack.c.l.b16 %v1790
        %v2233 = vunpack.c.l.b16 %v1791
        %v2234 = vunpack.c.l.b16 %v1792
        %v2235 = vunpack.c.l.b16 %v1793
        %v2236 = vunpack.c.l.b16 %v1794
        %v2237 = vunpack.c.l.b16 %v1795
        %v2238 = vunpack.c.l.b16 %v1796
        %v2239 = vunpack.c.l.b16 %v1797
        %v2240 = vunpack.c.l.b16 %v1798
        %v2241 = vunpack.c.l.b16 %v1799
        %v2242 = vunpack.c.l.b16 %v1800
        %v2243 = vpack.c.b16 %v2100, %v2099
        %v2244 = vpack.c.b16 %v2102, %v2101
        %v2245 = vpack.c.b16 %v2104, %v2103
        %v2246 = vpack.c.b16 %v2106, %v2105
        %v2247 = vpack.c.b16 %v2108, %v2107
        %v2248 = vpack.c.b16 %v2110, %v2109
        %v2249 = vpack.c.b16 %v2112, %v2111
        %v2250 = vpack.c.b16 %v2114, %v2113
        %v2251 = vpack.c.b16 %v2116, %v2115
        %v2252 = vpack.c.b16 %v2118, %v2117
        %v2253 = vpack.c.b16 %v2120, %v2119
        %v2254 = vpack.c.b16 %v2122, %v2121
        %v2255 = vpack.c.b16 %v2124, %v2123
        %v2256 = vpack.c.b16 %v2126, %v2125
        %v2257 = vpack.c.b16 %v2128, %v2127
        %v2258 = vpack.c.b16 %v2130, %v2129
        %v2259 = vpack.c.b16 %v2132, %v2131
        %v2260 = vpack.c.b16 %v2134, %v2133
        %v2261 = vpack.c.b16 %v2136, %v2135
        %v2262 = vpack.c.b16 %v2138, %v2137
        %v2263 = vpack.c.b16 %v2140, %v2139
        %v2264 = vpack.c.b16 %v2142, %v2141
        %v2265 = vpack.c.b16 %v2144, %v2143
        %v2266 = vpack.c.b16 %v2146, %v2145
        %v2267 = vpack.c.b16 %v2148, %v2147
        %v2268 = vpack.c.b16 %v2150, %v2149
        %v2269 = vpack.c.b16 %v2152, %v2151
        %v2270 = vpack.c.b16 %v2154, %v2153
        %v2271 = vpack.c.b16 %v2156, %v2155
        %v2272 = vpack.c.b16 %v2158, %v2157
        %v2273 = vpack.c.b16 %v2160, %v2159
        %v2274 = vpack.c.b16 %v2162, %v2161
        %v2275 = vpack.c.b16 %v2164, %v2163
        %v2276 = vpack.c.b16 %v2166, %v2165
        %v2277 = vpack.c.b16 %v2168, %v2167
        %v2278 = vpack.c.b16 %v2170, %v2169
        %v2279 = vpack.c.b16 %v2172, %v2171
        %v2280 = vpack.c.b16 %v2174, %v2173
        %v2281 = vpack.c.b16 %v2176, %v2175
        %v2282 = vpack.c.b16 %v2178, %v2177
        %v2283 = vpack.c.b16 %v2180, %v2179
        %v2284 = vpack.c.b16 %v2182, %v2181
        %v2285 = vpack.c.b16 %v2184, %v2183
        %v2286 = vpack.c.b16 %v2186, %v2185
        %v2287 = vpack.c.b16 %v2188, %v2187
        %v2288 = vpack.c.b16 %v2190, %v2189
        %v2289 = vpack.c.b16 %v2192, %v2191
        %v2290 = vpack.c.b16 %v2194, %v2193
        %v2291 = vpack.c.b16 %v2196, %v2195
        %v2292 = vpack.c.b16 %v2198, %v2197
        %v2293 = vpack.c.b16 %v2200, %v2199
        %v2294 = vpack.c.b16 %v2202, %v2201
        %v2295 = vpack.c.b16 %v2204, %v2203
        %v2296 = vpack.c.b16 %v2206, %v2205
        %v2297 = vpack.c.b16 %v2208, %v2207
        %v2298 = vpack.c.b16 %v2210, %v2209
        %v2299 = vpack.c.b16 %v2212, %v2211
        %v2300 = vpack.c.b16 %v2214, %v2213
        %v2301 = vpack.c.b16 %v2216, %v2215
        %v2302 = vpack.c.b16 %v2218, %v2217
        %v2303 = vpack.c.b16 %v2220, %v2219
        %v2304 = vpack.c.b16 %v2222, %v2221
        %v2305 = vpack.c.b16 %v2224, %v2223
        %v2306 = vpack.c.b16 %v2226, %v2225
        %v2307 = vpack.c.b16 %v2228, %v2227
        %v2308 = vpack.c.b16 %v2230, %v2229
        %v2309 = vpack.c.b16 %v2232, %v2231
        %v2310 = vpack.c.b16 %v2234, %v2233
        %v2311 = vpack.c.b16 %v2236, %v2235
        %v2312 = vpack.c.b16 %v2238, %v2237
        %v2313 = vpack.c.b16 %v2240, %v2239
        %v2314 = vpack.c.b16 %v2242, %v2241
        %2387 = vmatprep.subr.bf16.mxu0 0
        %2388 = vmatpush1.bf16.msra.mxu0 %v2250
        %2389 = vmatprep.subr.bf16.mxu0 0
        %2390 = vmatpush1.bf16.msra.mxu0 %v2249
        %2391 = vmatprep.subr.bf16.mxu0 0
        %2392 = vmatpush1.bf16.msra.mxu0 %v2248
        %2393 = vmatprep.subr.bf16.mxu0 0
        %2394 = vmatpush1.bf16.msra.mxu0 %v2247
        %2395 = vmatprep.subr.bf16.mxu0 0
        %2396 = vmatpush1.bf16.msra.mxu0 %v2246
        %2397 = vmatprep.subr.bf16.mxu0 0
        %2398 = vmatpush1.bf16.msra.mxu0 %v2245
        %2399 = vmatprep.subr.bf16.mxu0 0
        %2400 = vmatpush1.bf16.msra.mxu0 %v2244
        %2401 = vmatprep.subr.bf16.mxu0 0
        %2402 = vmatpush1.bf16.msra.mxu0 %v2243
        %2403 = vmatprep.subr.bf16.mxu0 0
        %2404 = vmatpush2.bf16.msra.mxu0 %v2258
        %2405 = vmatprep.subr.bf16.mxu0 0
        %2406 = vmatpush2.bf16.msra.mxu0 %v2257
        %2407 = vmatprep.subr.bf16.mxu0 0
        %2408 = vmatpush2.bf16.msra.mxu0 %v2256
        %2409 = vmatprep.subr.bf16.mxu0 0
        %2410 = vmatpush2.bf16.msra.mxu0 %v2255
        %2411 = vmatprep.subr.bf16.mxu0 0
        %2412 = vmatpush2.bf16.msra.mxu0 %v2254
        %2413 = vmatprep.subr.bf16.mxu0 0
        %2414 = vmatpush2.bf16.msra.mxu0 %v2253
        %2415 = vmatprep.subr.bf16.mxu0 0
        %2416 = vmatpush2.bf16.msra.mxu0 %v2252
        %2417 = vmatprep.subr.bf16.mxu0 0
        %2418 = vmatpush2.bf16.msra.mxu0 %v2251
        %2419 = vmatprep.mubr.bf16.mxu0 %v1834
        %2420 = vmatmul.mubr.bf16.gmra.mxu0 %v1817
        %v2421 = vpop.f32.mrf.mxu0
        %v2422 = vadd.f32 0.0, %v2421
        %v2423 = vpop.f32.mrf.mxu0
        %v2424 = vpop.f32.mrf.mxu0
        %v2425 = vadd.f32 0.0, %v2424
        %v2426 = vpop.f32.mrf.mxu0
        %2427 = vdwg.mxu0
        %2428 = vmatprep.subr.bf16.mxu0 0
        %2429 = vmatpush1.bf16.msra.mxu0 %v2266
        %2430 = vmatprep.subr.bf16.mxu0 0
        %2431 = vmatpush1.bf16.msra.mxu0 %v2265
        %2432 = vmatprep.subr.bf16.mxu0 0
        %2433 = vmatpush1.bf16.msra.mxu0 %v2264
        %2434 = vmatprep.subr.bf16.mxu0 0
        %2435 = vmatpush1.bf16.msra.mxu0 %v2263
        %2436 = vmatprep.subr.bf16.mxu0 0
        %2437 = vmatpush1.bf16.msra.mxu0 %v2262
        %2438 = vmatprep.subr.bf16.mxu0 0
        %2439 = vmatpush1.bf16.msra.mxu0 %v2261
        %2440 = vmatprep.subr.bf16.mxu0 0
        %2441 = vmatpush1.bf16.msra.mxu0 %v2260
        %2442 = vmatprep.subr.bf16.mxu0 0
        %2443 = vmatpush1.bf16.msra.mxu0 %v2259
        %2444 = vmatprep.subr.bf16.mxu0 0
        %2445 = vmatpush2.bf16.msra.mxu0 %v2274
        %2446 = vmatprep.subr.bf16.mxu0 0
        %2447 = vmatpush2.bf16.msra.mxu0 %v2273
        %2448 = vmatprep.subr.bf16.mxu0 0
        %2449 = vmatpush2.bf16.msra.mxu0 %v2272
        %2450 = vmatprep.subr.bf16.mxu0 0
        %2451 = vmatpush2.bf16.msra.mxu0 %v2271
        %2452 = vmatprep.subr.bf16.mxu0 0
        %2453 = vmatpush2.bf16.msra.mxu0 %v2270
        %2454 = vmatprep.subr.bf16.mxu0 0
        %2455 = vmatpush2.bf16.msra.mxu0 %v2269
        %2456 = vmatprep.subr.bf16.mxu0 0
        %2457 = vmatpush2.bf16.msra.mxu0 %v2268
        %2458 = vmatprep.subr.bf16.mxu0 0
        %2459 = vmatpush2.bf16.msra.mxu0 %v2267
        %2460 = vmatprep.mubr.bf16.mxu0 %v1868
        %2461 = vmatmul.mubr.bf16.gmra.mxu0 %v1851
        %v2462 = vpop.f32.mrf.mxu0
        %v2463 = vadd.f32 %v2422, %v2462
        %v2464 = vpop.f32.mrf.mxu0
        %v2465 = vpop.f32.mrf.mxu0
        %v2466 = vadd.f32 %v2425, %v2465
        %v2467 = vpop.f32.mrf.mxu0
        %2468 = vdwg.mxu0
        %2469 = vmatprep.subr.bf16.mxu0 0
        %2470 = vmatpush1.bf16.msra.mxu0 %v2282
        %2471 = vmatprep.subr.bf16.mxu0 0
        %2472 = vmatpush1.bf16.msra.mxu0 %v2281
        %2473 = vmatprep.subr.bf16.mxu0 0
        %2474 = vmatpush1.bf16.msra.mxu0 %v2280
        %2475 = vmatprep.subr.bf16.mxu0 0
        %2476 = vmatpush1.bf16.msra.mxu0 %v2279
        %2477 = vmatprep.subr.bf16.mxu0 0
        %2478 = vmatpush1.bf16.msra.mxu0 %v2278
        %2479 = vmatprep.subr.bf16.mxu0 0
        %2480 = vmatpush1.bf16.msra.mxu0 %v2277
        %2481 = vmatprep.subr.bf16.mxu0 0
        %2482 = vmatpush1.bf16.msra.mxu0 %v2276
        %2483 = vmatprep.subr.bf16.mxu0 0
        %2484 = vmatpush1.bf16.msra.mxu0 %v2275
        %2485 = vmatprep.subr.bf16.mxu0 0
        %2486 = vmatpush2.bf16.msra.mxu0 %v2290
        %2487 = vmatprep.subr.bf16.mxu0 0
        %2488 = vmatpush2.bf16.msra.mxu0 %v2289
        %2489 = vmatprep.subr.bf16.mxu0 0
        %2490 = vmatpush2.bf16.msra.mxu0 %v2288
        %2491 = vmatprep.subr.bf16.mxu0 0
        %2492 = vmatpush2.bf16.msra.mxu0 %v2287
        %2493 = vmatprep.subr.bf16.mxu0 0
        %2494 = vmatpush2.bf16.msra.mxu0 %v2286
        %2495 = vmatprep.subr.bf16.mxu0 0
        %2496 = vmatpush2.bf16.msra.mxu0 %v2285
        %2497 = vmatprep.subr.bf16.mxu0 0
        %2498 = vmatpush2.bf16.msra.mxu0 %v2284
        %2499 = vmatprep.subr.bf16.mxu0 0
        %2500 = vmatpush2.bf16.msra.mxu0 %v2283
        %2501 = vmatprep.mubr.bf16.mxu0 %v1894
        %2502 = vmatmul.mubr.bf16.gmra.mxu0 %v1877
        %v2503 = vpop.f32.mrf.mxu0
        %v2504 = vadd.f32 %v2463, %v2503
        %v2505 = vpop.f32.mrf.mxu0
        %v2506 = vpop.f32.mrf.mxu0
        %v2507 = vadd.f32 %v2466, %v2506
        %v2508 = vpop.f32.mrf.mxu0
        %2509 = vdwg.mxu0
        %2510 = vmatprep.subr.bf16.mxu0 0
        %2511 = vmatpush1.bf16.msra.mxu0 %v2298
        %2512 = vmatprep.subr.bf16.mxu0 0
        %2513 = vmatpush1.bf16.msra.mxu0 %v2297
        %2514 = vmatprep.subr.bf16.mxu0 0
        %2515 = vmatpush1.bf16.msra.mxu0 %v2296
        %2516 = vmatprep.subr.bf16.mxu0 0
        %2517 = vmatpush1.bf16.msra.mxu0 %v2295
        %2518 = vmatprep.subr.bf16.mxu0 0
        %2519 = vmatpush1.bf16.msra.mxu0 %v2294
        %2520 = vmatprep.subr.bf16.mxu0 0
        %2521 = vmatpush1.bf16.msra.mxu0 %v2293
        %2522 = vmatprep.subr.bf16.mxu0 0
        %2523 = vmatpush1.bf16.msra.mxu0 %v2292
        %2524 = vmatprep.subr.bf16.mxu0 0
        %2525 = vmatpush1.bf16.msra.mxu0 %v2291
        %2526 = vmatprep.subr.bf16.mxu0 0
        %2527 = vmatpush2.bf16.msra.mxu0 %v2306
        %2528 = vmatprep.subr.bf16.mxu0 0
        %2529 = vmatpush2.bf16.msra.mxu0 %v2305
        %2530 = vmatprep.subr.bf16.mxu0 0
        %2531 = vmatpush2.bf16.msra.mxu0 %v2304
        %2532 = vmatprep.subr.bf16.mxu0 0
        %2533 = vmatpush2.bf16.msra.mxu0 %v2303
        %2534 = vmatprep.subr.bf16.mxu0 0
        %2535 = vmatpush2.bf16.msra.mxu0 %v2302
        %2536 = vmatprep.subr.bf16.mxu0 0
        %2537 = vmatpush2.bf16.msra.mxu0 %v2301
        %2538 = vmatprep.subr.bf16.mxu0 0
        %2539 = vmatpush2.bf16.msra.mxu0 %v2300
        %2540 = vmatprep.subr.bf16.mxu0 0
        %2541 = vmatpush2.bf16.msra.mxu0 %v2299
        %2542 = vmatprep.mubr.bf16.mxu0 %v1928
        %2543 = vmatmul.mubr.bf16.gmra.mxu0 %v1911
        %v2544 = vpop.f32.mrf.mxu0
        %v2545 = vadd.f32 %v2504, %v2544
        %v2546 = vpop.f32.mrf.mxu0
        %v2547 = vpop.f32.mrf.mxu0
        %v2548 = vadd.f32 %v2507, %v2547
        %v2549 = vpop.f32.mrf.mxu0
        %2550 = vdwg.mxu0
        %2551 = vmatprep.subr.bf16.mxu0 0
        %2552 = vmatpush1.bf16.msra.mxu0 %v2314
        %2553 = vmatprep.subr.bf16.mxu0 0
        %2554 = vmatpush1.bf16.msra.mxu0 %v2313
        %2555 = vmatprep.subr.bf16.mxu0 0
        %2556 = vmatpush1.bf16.msra.mxu0 %v2312
        %2557 = vmatprep.subr.bf16.mxu0 0
        %2558 = vmatpush1.bf16.msra.mxu0 %v2311
        %2559 = vmatprep.subr.bf16.mxu0 0
        %2560 = vmatpush1.bf16.msra.mxu0 %v2310
        %2561 = vmatprep.subr.bf16.mxu0 0
        %2562 = vmatpush1.bf16.msra.mxu0 %v2309
        %2563 = vmatprep.subr.bf16.mxu0 0
        %2564 = vmatpush1.bf16.msra.mxu0 %v2308
        %2565 = vmatprep.subr.bf16.mxu0 0
        %2566 = vmatpush1.bf16.msra.mxu0 %v2307
        %2567 = vmatprep.subr.bf16.mxu0 0
        %2568 = vmatpush2.bf16.msra.mxu0 0
        %2569 = vmatprep.subr.bf16.mxu0 0
        %2570 = vmatpush2.bf16.msra.mxu0 0
        %2571 = vmatprep.subr.bf16.mxu0 0
        %2572 = vmatpush2.bf16.msra.mxu0 0
        %2573 = vmatprep.subr.bf16.mxu0 0
        %2574 = vmatpush2.bf16.msra.mxu0 0
        %2575 = vmatprep.subr.bf16.mxu0 0
        %2576 = vmatpush2.bf16.msra.mxu0 0
        %2577 = vmatprep.subr.bf16.mxu0 0
        %2578 = vmatpush2.bf16.msra.mxu0 0
        %2579 = vmatprep.subr.bf16.mxu0 0
        %2580 = vmatpush2.bf16.msra.mxu0 0
        %2581 = vmatprep.subr.bf16.mxu0 0
        %2582 = vmatpush2.bf16.msra.mxu0 0
        %2583 = vmatprep.mubr.bf16.mxu0 0
        %2584 = vmatmul.mubr.bf16.gmra.mxu0 %v1945
        %v2585 = vpop.f32.mrf.mxu0
        %v2586 = vadd.f32 %v2545, %v2585
        %v2587 = vpop.f32.mrf.mxu0
        %v2588 = vpop.f32.mrf.mxu0
        %v2589 = vadd.f32 %v2548, %v2588
        %v2590 = vpop.f32.mrf.mxu0
        %2591 = vdwg.mxu0
        %v2592 = vmax.f32 %v2586, 0.0
        %v2593 = vmax.f32 %v2589, 0.0
        %v2594 = vpack.c.bf16 %v2593, %v2592
        %v2595 = vld [vmem:[%s4] sm:$0xf]
        %v2596 = vld [vmem:[%s4 + $0x4] sm:$0xf]
        %v2597 = vld [vmem:[%s4 + $0x8] sm:$0xf]
        %v2598 = vld [vmem:[%s4 + $0xc] sm:$0xf]
        %v2599 = vld [vmem:[%s4 + $0x10] sm:$0xf]
        %v2600 = vld [vmem:[%s4 + $0x14] sm:$0xf]
        %v2601 = vld [vmem:[%s4 + $0x18] sm:$0xf]
        %v2602 = vld [vmem:[%s4 + $0x1c] sm:$0xf]
        %v2603 = vld [vmem:[%s4 + $0x20] sm:$0xf]
        %v2604 = vld [vmem:[%s4 + $0x24] sm:$0xf]
        %v2605 = vld [vmem:[%s4 + $0x28] sm:$0xf]
        %v2606 = vld [vmem:[%s4 + $0x2c] sm:$0xf]
        %v2607 = vld [vmem:[%s4 + $0x30] sm:$0xf]
        %v2608 = vld [vmem:[%s4 + $0x34] sm:$0xf]
        %v2609 = vld [vmem:[%s4 + $0x38] sm:$0xf]
        %v2610 = vld [vmem:[%s4 + $0x3c] sm:$0xf]
        %v2627 = vunpack.c.l.b16 %v2595
        %v2628 = vunpack.c.l.b16 %v2596
        %v2629 = vunpack.c.l.b16 %v2597
        %v2630 = vunpack.c.l.b16 %v2598
        %v2631 = vunpack.c.l.b16 %v2599
        %v2632 = vunpack.c.l.b16 %v2600
        %v2633 = vunpack.c.l.b16 %v2601
        %v2634 = vunpack.c.l.b16 %v2602
        %v2635 = vunpack.c.l.b16 %v2603
        %v2636 = vunpack.c.l.b16 %v2604
        %v2637 = vunpack.c.l.b16 %v2605
        %v2638 = vunpack.c.l.b16 %v2606
        %v2639 = vunpack.c.l.b16 %v2607
        %v2640 = vunpack.c.l.b16 %v2608
        %v2641 = vunpack.c.l.b16 %v2609
        %v2642 = vunpack.c.l.b16 %v2610
        %v2643 = vpack.c.b16 %v2628, %v2627
        %v2644 = vpack.c.b16 %v2630, %v2629
        %v2645 = vpack.c.b16 %v2632, %v2631
        %v2646 = vpack.c.b16 %v2634, %v2633
        %v2647 = vpack.c.b16 %v2636, %v2635
        %v2648 = vpack.c.b16 %v2638, %v2637
        %v2649 = vpack.c.b16 %v2640, %v2639
        %v2650 = vpack.c.b16 %v2642, %v2641
        %2659 = vmatprep.subr.bf16.mxu0 0
        %2660 = vmatpush1.bf16.msra.mxu0 %v2650
        %2661 = vmatprep.subr.bf16.mxu0 0
        %2662 = vmatpush1.bf16.msra.mxu0 %v2649
        %2663 = vmatprep.subr.bf16.mxu0 0
        %2664 = vmatpush1.bf16.msra.mxu0 %v2648
        %2665 = vmatprep.subr.bf16.mxu0 0
        %2666 = vmatpush1.bf16.msra.mxu0 %v2647
        %2667 = vmatprep.subr.bf16.mxu0 0
        %2668 = vmatpush1.bf16.msra.mxu0 %v2646
        %2669 = vmatprep.subr.bf16.mxu0 0
        %2670 = vmatpush1.bf16.msra.mxu0 %v2645
        %2671 = vmatprep.subr.bf16.mxu0 0
        %2672 = vmatpush1.bf16.msra.mxu0 %v2644
        %2673 = vmatprep.subr.bf16.mxu0 0
        %2674 = vmatpush1.bf16.msra.mxu0 %v2643
        %2675 = vmatprep.subr.bf16.mxu0 0
        %2676 = vmatpush2.bf16.msra.mxu0 0
        %2677 = vmatprep.subr.bf16.mxu0 0
        %2678 = vmatpush2.bf16.msra.mxu0 0
        %2679 = vmatprep.subr.bf16.mxu0 0
        %2680 = vmatpush2.bf16.msra.mxu0 0
        %2681 = vmatprep.subr.bf16.mxu0 0
        %2682 = vmatpush2.bf16.msra.mxu0 0
        %2683 = vmatprep.subr.bf16.mxu0 0
        %2684 = vmatpush2.bf16.msra.mxu0 0
        %2685 = vmatprep.subr.bf16.mxu0 0
        %2686 = vmatpush2.bf16.msra.mxu0 0
        %2687 = vmatprep.subr.bf16.mxu0 0
        %2688 = vmatpush2.bf16.msra.mxu0 0
        %2689 = vmatprep.subr.bf16.mxu0 0
        %2690 = vmatpush2.bf16.msra.mxu0 0
        %2691 = vmatprep.mubr.bf16.mxu0 0
        %2692 = vmatmul.mubr.bf16.gmra.mxu0 %v2594
        %v2693 = vpop.f32.mrf.mxu0
        %v2694 = vadd.f32 0.0, %v2693
        %v2695 = vpop.f32.mrf.mxu0
        %v2696 = vpop.f32.mrf.mxu0
        %v2697 = vadd.f32 0.0, %v2696
        %v2698 = vpop.f32.mrf.mxu0
        %2699 = vdwg.mxu0
        %v2700 = vadd.f32 %v1490, %v2694
        %v2701 = vadd.f32 %v1493, %v2697
        %v2702 = vmax.f32 %v2700, 0.0
        %v2703 = vmax.f32 %v2701, 0.0
        %v2704 = vpack.c.bf16 %v2703, %v2702
        %v2706 = vunpack.c.l.b16 %v2704
        %v2707 = vunpack.c.h.b16 %v2704
        %v2708 = vpack.c.b16 %v2706, %v2706
        %v2709 = vpack.c.b16 %v2707, %v2707
        %2712 = vst [vmem:[#allocation2 + $0x4] sm:$0xf] %v2708
        %2713 = vst [vmem:[#allocation2 + $0x8] sm:$0xf] %v2709
        %v2714 = vld [vmem:[#allocation2] sm:$0xe]
        %v2715 = vld [vmem:[#allocation2 + $0x4] sm:$0xf]
        %v2716 = vld [vmem:[#allocation2 + $0x8] sm:$0x3]
        %v2717 = vsel %vm333, %v2714, 0
        %v2718 = vsel %vm334, %v2715, 0
        %v2719 = vsel %vm335, %v2716, 0
        %v2720 = vld [vmem:[#allocation2] sm:$0xc]
        %v2721 = vld [vmem:[#allocation2 + $0x8] sm:$0x7]
        %v2722 = vsel %vm377, %v2720, 0
        %v2723 = vsel %vm378, %v2715, 0
        %v2724 = vsel %vm379, %v2721, 0
        %v2725 = vld [vmem:[#allocation2] sm:$0x8]
        %v2726 = vld [vmem:[#allocation2 + $0x8] sm:$0xf]
        %v2727 = vsel %vm397, %v2725, 0
        %v2728 = vsel %vm398, %v2715, 0
        %v2729 = vsel %vm399, %v2726, 0
        %v2730 = vld [vmem:[#allocation2 + $0x4] sm:$0xf]
        %v2731 = vld [vmem:[#allocation2 + $0x8] sm:$0xf]
        %v2732 = vld [vmem:[#allocation2 + $0xc] sm:$0x1]
        %v2733 = vsel %vm416, %v2730, 0
        %v2734 = vsel %vm417, %v2731, 0
        %v2735 = vsel %vm418, %v2732, 0
        %v2736 = vld [vmem:[#allocation2 + $0x4] sm:$0xe]
        %v2737 = vld [vmem:[#allocation2 + $0xc] sm:$0x3]
        %v2738 = vsel %vm333, %v2736, 0
        %v2739 = vsel %vm334, %v2731, 0
        %v2740 = vsel %vm335, %v2737, 0
        %v2741 = vld [vmem:[#allocation2 + $0x4] sm:$0xc]
        %v2742 = vld [vmem:[#allocation2 + $0xc] sm:$0x7]
        %v2743 = vsel %vm377, %v2741, 0
        %v2744 = vsel %vm378, %v2731, 0
        %v2745 = vsel %vm379, %v2742, 0
        %v2749 = vunpack.c.l.b16 %v2717
        %v2750 = vunpack.c.l.b16 %v2718
        %v2751 = vunpack.c.l.b16 %v2719
        %v2752 = vpack.c.b16 %v2750, %v2749
        %v2753 = vpack.c.b16 %v2751, %v2751
        %v2757 = vunpack.c.l.b16 %v2720
        %v2758 = vunpack.c.l.b16 %v2715
        %v2759 = vunpack.c.l.b16 %v2716
        %v2760 = vpack.c.b16 %v2758, %v2757
        %v2761 = vpack.c.b16 %v2759, %v2759
        %v2763 = vshrl.u32 %v2760, 16
        %v2765 = vshll.u32 %v2760, 16
        %v2767 = vrot.slane %v2765, 1
        %v2768 = vor.u32 %v2763, %v2767
        %v2770 = vshll.u32 %v2761, 16
        %v2772 = vrot.slane %v2770, 1
        %v2773 = vsel %vm448, %v2768, %v2772
        %v2774 = vshrl.u32 %v2761, 16
        %v2776 = vor.u32 %v2774, %v2772
        %v2780 = vunpack.c.l.b16 %v2722
        %v2781 = vunpack.c.l.b16 %v2723
        %v2782 = vunpack.c.l.b16 %v2724
        %v2783 = vpack.c.b16 %v2781, %v2780
        %v2784 = vpack.c.b16 %v2782, %v2782
        %v2785 = vrot.slane %v2783, 1
        %v2786 = vrot.slane %v2784, 1
        %v2787 = vsel %vm472, %v2785, %v2786
        %v2791 = vunpack.c.l.b16 %v2727
        %v2792 = vunpack.c.l.b16 %v2728
        %v2793 = vunpack.c.l.b16 %v2729
        %v2794 = vpack.c.b16 %v2792, %v2791
        %v2795 = vpack.c.b16 %v2793, %v2793
        %v2796 = vrot.slane %v2794, 2
        %v2797 = vrot.slane %v2795, 2
        %v2798 = vsel %vm484, %v2796, %v2797
        %v2800 = vunpack.c.l.b16 %v2726
        %v2801 = vpack.c.b16 %v2800, %v2758
        %v2803 = vshrl.u32 %v2801, 16
        %v2805 = vrot.slane %v2803, 6
        %v2806 = vshll.u32 %v2801, 16
        %v2808 = vrot.slane %v2806, 7
        %v2809 = vor.u32 %v2805, %v2808
        %v2813 = vunpack.c.l.b16 %v2733
        %v2814 = vunpack.c.l.b16 %v2734
        %v2815 = vunpack.c.l.b16 %v2735
        %v2816 = vpack.c.b16 %v2814, %v2813
        %v2817 = vpack.c.b16 %v2815, %v2815
        %v2818 = vrot.slane %v2816, 7
        %v2819 = vrot.slane %v2817, 7
        %v2820 = vsel %vm507, %v2818, %v2819
        %v2824 = vunpack.c.l.b16 %v2738
        %v2825 = vunpack.c.l.b16 %v2739
        %v2826 = vunpack.c.l.b16 %v2740
        %v2827 = vpack.c.b16 %v2825, %v2824
        %v2828 = vpack.c.b16 %v2826, %v2826
        %v2832 = vunpack.c.l.b16 %v2741
        %v2833 = vunpack.c.l.b16 %v2731
        %v2834 = vunpack.c.l.b16 %v2737
        %v2835 = vpack.c.b16 %v2833, %v2832
        %v2836 = vpack.c.b16 %v2834, %v2834
        %v2838 = vshrl.u32 %v2835, 16
        %v2840 = vshll.u32 %v2835, 16
        %v2842 = vrot.slane %v2840, 1
        %v2843 = vor.u32 %v2838, %v2842
        %v2845 = vshll.u32 %v2836, 16
        %v2847 = vrot.slane %v2845, 1
        %v2848 = vsel %vm448, %v2843, %v2847
        %v2849 = vshrl.u32 %v2836, 16
        %v2851 = vor.u32 %v2849, %v2847
        %v2855 = vunpack.c.l.b16 %v2743
        %v2856 = vunpack.c.l.b16 %v2744
        %v2857 = vunpack.c.l.b16 %v2745
        %v2858 = vpack.c.b16 %v2856, %v2855
        %v2859 = vpack.c.b16 %v2857, %v2857
        %v2860 = vrot.slane %v2858, 1
        %v2861 = vrot.slane %v2859, 1
        %v2862 = vsel %vm472, %v2860, %v2861
        %v2863 = vld [vmem:[%s3] sm:$0xf]
        %v2864 = vld [vmem:[%s3 + $0x4] sm:$0xf]
        %v2865 = vld [vmem:[%s3 + $0x8] sm:$0xf]
        %v2866 = vld [vmem:[%s3 + $0xc] sm:$0xf]
        %v2867 = vld [vmem:[%s3 + $0x10] sm:$0xf]
        %v2868 = vld [vmem:[%s3 + $0x14] sm:$0xf]
        %v2869 = vld [vmem:[%s3 + $0x18] sm:$0xf]
        %v2870 = vld [vmem:[%s3 + $0x1c] sm:$0xf]
        %v2871 = vld [vmem:[%s3 + $0x20] sm:$0xf]
        %v2872 = vld [vmem:[%s3 + $0x24] sm:$0xf]
        %v2873 = vld [vmem:[%s3 + $0x28] sm:$0xf]
        %v2874 = vld [vmem:[%s3 + $0x2c] sm:$0xf]
        %v2875 = vld [vmem:[%s3 + $0x30] sm:$0xf]
        %v2876 = vld [vmem:[%s3 + $0x34] sm:$0xf]
        %v2877 = vld [vmem:[%s3 + $0x38] sm:$0xf]
        %v2878 = vld [vmem:[%s3 + $0x3c] sm:$0xf]
        %v2879 = vld [vmem:[%s3 + $0x40] sm:$0xf]
        %v2880 = vld [vmem:[%s3 + $0x44] sm:$0xf]
        %v2881 = vld [vmem:[%s3 + $0x48] sm:$0xf]
        %v2882 = vld [vmem:[%s3 + $0x4c] sm:$0xf]
        %v2883 = vld [vmem:[%s3 + $0x50] sm:$0xf]
        %v2884 = vld [vmem:[%s3 + $0x54] sm:$0xf]
        %v2885 = vld [vmem:[%s3 + $0x58] sm:$0xf]
        %v2886 = vld [vmem:[%s3 + $0x5c] sm:$0xf]
        %v2887 = vld [vmem:[%s3 + $0x60] sm:$0xf]
        %v2888 = vld [vmem:[%s3 + $0x64] sm:$0xf]
        %v2889 = vld [vmem:[%s3 + $0x68] sm:$0xf]
        %v2890 = vld [vmem:[%s3 + $0x6c] sm:$0xf]
        %v2891 = vld [vmem:[%s3 + $0x70] sm:$0xf]
        %v2892 = vld [vmem:[%s3 + $0x74] sm:$0xf]
        %v2893 = vld [vmem:[%s3 + $0x78] sm:$0xf]
        %v2894 = vld [vmem:[%s3 + $0x7c] sm:$0xf]
        %v2895 = vld [vmem:[%s3 + $0x80] sm:$0xf]
        %v2896 = vld [vmem:[%s3 + $0x84] sm:$0xf]
        %v2897 = vld [vmem:[%s3 + $0x88] sm:$0xf]
        %v2898 = vld [vmem:[%s3 + $0x8c] sm:$0xf]
        %v2899 = vld [vmem:[%s3 + $0x90] sm:$0xf]
        %v2900 = vld [vmem:[%s3 + $0x94] sm:$0xf]
        %v2901 = vld [vmem:[%s3 + $0x98] sm:$0xf]
        %v2902 = vld [vmem:[%s3 + $0x9c] sm:$0xf]
        %v2903 = vld [vmem:[%s3 + $0xa0] sm:$0xf]
        %v2904 = vld [vmem:[%s3 + $0xa4] sm:$0xf]
        %v2905 = vld [vmem:[%s3 + $0xa8] sm:$0xf]
        %v2906 = vld [vmem:[%s3 + $0xac] sm:$0xf]
        %v2907 = vld [vmem:[%s3 + $0xb0] sm:$0xf]
        %v2908 = vld [vmem:[%s3 + $0xb4] sm:$0xf]
        %v2909 = vld [vmem:[%s3 + $0xb8] sm:$0xf]
        %v2910 = vld [vmem:[%s3 + $0xbc] sm:$0xf]
        %v2911 = vld [vmem:[%s3 + $0xc0] sm:$0xf]
        %v2912 = vld [vmem:[%s3 + $0xc4] sm:$0xf]
        %v2913 = vld [vmem:[%s3 + $0xc8] sm:$0xf]
        %v2914 = vld [vmem:[%s3 + $0xcc] sm:$0xf]
        %v2915 = vld [vmem:[%s3 + $0xd0] sm:$0xf]
        %v2916 = vld [vmem:[%s3 + $0xd4] sm:$0xf]
        %v2917 = vld [vmem:[%s3 + $0xd8] sm:$0xf]
        %v2918 = vld [vmem:[%s3 + $0xdc] sm:$0xf]
        %v2919 = vld [vmem:[%s3 + $0xe0] sm:$0xf]
        %v2920 = vld [vmem:[%s3 + $0xe4] sm:$0xf]
        %v2921 = vld [vmem:[%s3 + $0xe8] sm:$0xf]
        %v2922 = vld [vmem:[%s3 + $0xec] sm:$0xf]
        %v2923 = vld [vmem:[%s3 + $0xf0] sm:$0xf]
        %v2924 = vld [vmem:[%s3 + $0xf4] sm:$0xf]
        %v2925 = vld [vmem:[%s3 + $0xf8] sm:$0xf]
        %v2926 = vld [vmem:[%s3 + $0xfc] sm:$0xf]
        %v2927 = vld [vmem:[%s3 + $0x100] sm:$0xf]
        %v2928 = vld [vmem:[%s3 + $0x104] sm:$0xf]
        %v2929 = vld [vmem:[%s3 + $0x108] sm:$0xf]
        %v2930 = vld [vmem:[%s3 + $0x10c] sm:$0xf]
        %v2931 = vld [vmem:[%s3 + $0x110] sm:$0xf]
        %v2932 = vld [vmem:[%s3 + $0x114] sm:$0xf]
        %v2933 = vld [vmem:[%s3 + $0x118] sm:$0xf]
        %v2934 = vld [vmem:[%s3 + $0x11c] sm:$0xf]
        %v2935 = vld [vmem:[%s3 + $0x120] sm:$0xf]
        %v2936 = vld [vmem:[%s3 + $0x124] sm:$0xf]
        %v2937 = vld [vmem:[%s3 + $0x128] sm:$0xf]
        %v2938 = vld [vmem:[%s3 + $0x12c] sm:$0xf]
        %v2939 = vld [vmem:[%s3 + $0x130] sm:$0xf]
        %v2940 = vld [vmem:[%s3 + $0x134] sm:$0xf]
        %v2941 = vld [vmem:[%s3 + $0x138] sm:$0xf]
        %v2942 = vld [vmem:[%s3 + $0x13c] sm:$0xf]
        %v2943 = vld [vmem:[%s3 + $0x140] sm:$0xf]
        %v2944 = vld [vmem:[%s3 + $0x144] sm:$0xf]
        %v2945 = vld [vmem:[%s3 + $0x148] sm:$0xf]
        %v2946 = vld [vmem:[%s3 + $0x14c] sm:$0xf]
        %v2947 = vld [vmem:[%s3 + $0x150] sm:$0xf]
        %v2948 = vld [vmem:[%s3 + $0x154] sm:$0xf]
        %v2949 = vld [vmem:[%s3 + $0x158] sm:$0xf]
        %v2950 = vld [vmem:[%s3 + $0x15c] sm:$0xf]
        %v2951 = vld [vmem:[%s3 + $0x160] sm:$0xf]
        %v2952 = vld [vmem:[%s3 + $0x164] sm:$0xf]
        %v2953 = vld [vmem:[%s3 + $0x168] sm:$0xf]
        %v2954 = vld [vmem:[%s3 + $0x16c] sm:$0xf]
        %v2955 = vld [vmem:[%s3 + $0x170] sm:$0xf]
        %v2956 = vld [vmem:[%s3 + $0x174] sm:$0xf]
        %v2957 = vld [vmem:[%s3 + $0x178] sm:$0xf]
        %v2958 = vld [vmem:[%s3 + $0x17c] sm:$0xf]
        %v2959 = vld [vmem:[%s3 + $0x180] sm:$0xf]
        %v2960 = vld [vmem:[%s3 + $0x184] sm:$0xf]
        %v2961 = vld [vmem:[%s3 + $0x188] sm:$0xf]
        %v2962 = vld [vmem:[%s3 + $0x18c] sm:$0xf]
        %v2963 = vld [vmem:[%s3 + $0x190] sm:$0xf]
        %v2964 = vld [vmem:[%s3 + $0x194] sm:$0xf]
        %v2965 = vld [vmem:[%s3 + $0x198] sm:$0xf]
        %v2966 = vld [vmem:[%s3 + $0x19c] sm:$0xf]
        %v2967 = vld [vmem:[%s3 + $0x1a0] sm:$0xf]
        %v2968 = vld [vmem:[%s3 + $0x1a4] sm:$0xf]
        %v2969 = vld [vmem:[%s3 + $0x1a8] sm:$0xf]
        %v2970 = vld [vmem:[%s3 + $0x1ac] sm:$0xf]
        %v2971 = vld [vmem:[%s3 + $0x1b0] sm:$0xf]
        %v2972 = vld [vmem:[%s3 + $0x1b4] sm:$0xf]
        %v2973 = vld [vmem:[%s3 + $0x1b8] sm:$0xf]
        %v2974 = vld [vmem:[%s3 + $0x1bc] sm:$0xf]
        %v2975 = vld [vmem:[%s3 + $0x1c0] sm:$0xf]
        %v2976 = vld [vmem:[%s3 + $0x1c4] sm:$0xf]
        %v2977 = vld [vmem:[%s3 + $0x1c8] sm:$0xf]
        %v2978 = vld [vmem:[%s3 + $0x1cc] sm:$0xf]
        %v2979 = vld [vmem:[%s3 + $0x1d0] sm:$0xf]
        %v2980 = vld [vmem:[%s3 + $0x1d4] sm:$0xf]
        %v2981 = vld [vmem:[%s3 + $0x1d8] sm:$0xf]
        %v2982 = vld [vmem:[%s3 + $0x1dc] sm:$0xf]
        %v2983 = vld [vmem:[%s3 + $0x1e0] sm:$0xf]
        %v2984 = vld [vmem:[%s3 + $0x1e4] sm:$0xf]
        %v2985 = vld [vmem:[%s3 + $0x1e8] sm:$0xf]
        %v2986 = vld [vmem:[%s3 + $0x1ec] sm:$0xf]
        %v2987 = vld [vmem:[%s3 + $0x1f0] sm:$0xf]
        %v2988 = vld [vmem:[%s3 + $0x1f4] sm:$0xf]
        %v2989 = vld [vmem:[%s3 + $0x1f8] sm:$0xf]
        %v2990 = vld [vmem:[%s3 + $0x1fc] sm:$0xf]
        %v2991 = vld [vmem:[%s3 + $0x200] sm:$0xf]
        %v2992 = vld [vmem:[%s3 + $0x204] sm:$0xf]
        %v2993 = vld [vmem:[%s3 + $0x208] sm:$0xf]
        %v2994 = vld [vmem:[%s3 + $0x20c] sm:$0xf]
        %v2995 = vld [vmem:[%s3 + $0x210] sm:$0xf]
        %v2996 = vld [vmem:[%s3 + $0x214] sm:$0xf]
        %v2997 = vld [vmem:[%s3 + $0x218] sm:$0xf]
        %v2998 = vld [vmem:[%s3 + $0x21c] sm:$0xf]
        %v2999 = vld [vmem:[%s3 + $0x220] sm:$0xf]
        %v3000 = vld [vmem:[%s3 + $0x224] sm:$0xf]
        %v3001 = vld [vmem:[%s3 + $0x228] sm:$0xf]
        %v3002 = vld [vmem:[%s3 + $0x22c] sm:$0xf]
        %v3003 = vld [vmem:[%s3 + $0x230] sm:$0xf]
        %v3004 = vld [vmem:[%s3 + $0x234] sm:$0xf]
        %v3005 = vld [vmem:[%s3 + $0x238] sm:$0xf]
        %v3006 = vld [vmem:[%s3 + $0x23c] sm:$0xf]
        %v3008 = vshrl.u32 %v2752, 16
        %v3010 = vrot.slane %v3008, 1
        %v3011 = vshll.u32 %v2752, 16
        %v3013 = vrot.slane %v3011, 2
        %v3014 = vor.u32 %v3010, %v3013
        %v3016 = vshrl.u32 %v2753, 16
        %v3018 = vrot.slane %v3016, 1
        %v3019 = vshll.u32 %v2753, 16
        %v3021 = vrot.slane %v3019, 2
        %v3022 = vor.u32 %v3018, %v3021
        %v3023 = vsel %vm704, %v3014, %v3022
        %v3025 = vshrl.u32 %v2773, 16
        %v3027 = vrot.slane %v3025, 1
        %v3028 = vshll.u32 %v2773, 16
        %v3030 = vrot.slane %v3028, 2
        %v3031 = vor.u32 %v3027, %v3030
        %v3033 = vshrl.u32 %v2776, 16
        %v3035 = vrot.slane %v3033, 1
        %v3036 = vshll.u32 %v2776, 16
        %v3038 = vrot.slane %v3036, 2
        %v3039 = vor.u32 %v3035, %v3038
        %v3040 = vsel %vm704, %v3031, %v3039
        %v3042 = vshrl.u32 %v2787, 16
        %v3044 = vrot.slane %v3042, 1
        %v3045 = vshll.u32 %v2787, 16
        %v3047 = vrot.slane %v3045, 2
        %v3048 = vor.u32 %v3044, %v3047
        %v3050 = vshrl.u32 %v2786, 16
        %v3052 = vrot.slane %v3050, 1
        %v3053 = vshll.u32 %v2786, 16
        %v3055 = vrot.slane %v3053, 2
        %v3056 = vor.u32 %v3052, %v3055
        %v3057 = vsel %vm704, %v3048, %v3056
        %v3059 = vshrl.u32 %v2798, 16
        %v3061 = vrot.slane %v3059, 1
        %v3062 = vshll.u32 %v2798, 16
        %v3064 = vrot.slane %v3062, 2
        %v3065 = vor.u32 %v3061, %v3064
        %v3067 = vshrl.u32 %v2797, 16
        %v3069 = vrot.slane %v3067, 1
        %v3070 = vshll.u32 %v2797, 16
        %v3072 = vrot.slane %v3070, 2
        %v3073 = vor.u32 %v3069, %v3072
        %v3074 = vsel %vm704, %v3065, %v3073
        %v3076 = vshrl.u32 %v2809, 16
        %v3078 = vrot.slane %v3076, 1
        %v3079 = vshll.u32 %v2809, 16
        %v3081 = vrot.slane %v3079, 2
        %v3082 = vor.u32 %v3078, %v3081
        %v3083 = vsel %vm704, %v3082, %v3082
        %v3085 = vshrl.u32 %v2818, 16
        %v3087 = vrot.slane %v3085, 1
        %v3088 = vshll.u32 %v2818, 16
        %v3090 = vrot.slane %v3088, 2
        %v3091 = vor.u32 %v3087, %v3090
        %v3093 = vshrl.u32 %v2820, 16
        %v3095 = vrot.slane %v3093, 1
        %v3096 = vshll.u32 %v2820, 16
        %v3098 = vrot.slane %v3096, 2
        %v3099 = vor.u32 %v3095, %v3098
        %v3100 = vsel %vm704, %v3091, %v3099
        %v3102 = vshrl.u32 %v2827, 16
        %v3104 = vrot.slane %v3102, 1
        %v3105 = vshll.u32 %v2827, 16
        %v3107 = vrot.slane %v3105, 2
        %v3108 = vor.u32 %v3104, %v3107
        %v3110 = vshrl.u32 %v2828, 16
        %v3112 = vrot.slane %v3110, 1
        %v3113 = vshll.u32 %v2828, 16
        %v3115 = vrot.slane %v3113, 2
        %v3116 = vor.u32 %v3112, %v3115
        %v3117 = vsel %vm704, %v3108, %v3116
        %v3119 = vshrl.u32 %v2848, 16
        %v3121 = vrot.slane %v3119, 1
        %v3122 = vshll.u32 %v2848, 16
        %v3124 = vrot.slane %v3122, 2
        %v3125 = vor.u32 %v3121, %v3124
        %v3127 = vshrl.u32 %v2851, 16
        %v3129 = vrot.slane %v3127, 1
        %v3130 = vshll.u32 %v2851, 16
        %v3132 = vrot.slane %v3130, 2
        %v3133 = vor.u32 %v3129, %v3132
        %v3134 = vsel %vm704, %v3125, %v3133
        %v3136 = vshrl.u32 %v2862, 16
        %v3138 = vrot.slane %v3136, 1
        %v3139 = vshll.u32 %v2862, 16
        %v3141 = vrot.slane %v3139, 2
        %v3142 = vor.u32 %v3138, %v3141
        %v3144 = vshrl.u32 %v2861, 16
        %v3146 = vrot.slane %v3144, 1
        %v3147 = vshll.u32 %v2861, 16
        %v3149 = vrot.slane %v3147, 2
        %v3150 = vor.u32 %v3146, %v3149
        %v3151 = vsel %vm704, %v3142, %v3150
        %v3305 = vunpack.c.l.b16 %v2863
        %v3306 = vunpack.c.l.b16 %v2864
        %v3307 = vunpack.c.l.b16 %v2865
        %v3308 = vunpack.c.l.b16 %v2866
        %v3309 = vunpack.c.l.b16 %v2867
        %v3310 = vunpack.c.l.b16 %v2868
        %v3311 = vunpack.c.l.b16 %v2869
        %v3312 = vunpack.c.l.b16 %v2870
        %v3313 = vunpack.c.l.b16 %v2871
        %v3314 = vunpack.c.l.b16 %v2872
        %v3315 = vunpack.c.l.b16 %v2873
        %v3316 = vunpack.c.l.b16 %v2874
        %v3317 = vunpack.c.l.b16 %v2875
        %v3318 = vunpack.c.l.b16 %v2876
        %v3319 = vunpack.c.l.b16 %v2877
        %v3320 = vunpack.c.l.b16 %v2878
        %v3321 = vunpack.c.l.b16 %v2879
        %v3322 = vunpack.c.l.b16 %v2880
        %v3323 = vunpack.c.l.b16 %v2881
        %v3324 = vunpack.c.l.b16 %v2882
        %v3325 = vunpack.c.l.b16 %v2883
        %v3326 = vunpack.c.l.b16 %v2884
        %v3327 = vunpack.c.l.b16 %v2885
        %v3328 = vunpack.c.l.b16 %v2886
        %v3329 = vunpack.c.l.b16 %v2887
        %v3330 = vunpack.c.l.b16 %v2888
        %v3331 = vunpack.c.l.b16 %v2889
        %v3332 = vunpack.c.l.b16 %v2890
        %v3333 = vunpack.c.l.b16 %v2891
        %v3334 = vunpack.c.l.b16 %v2892
        %v3335 = vunpack.c.l.b16 %v2893
        %v3336 = vunpack.c.l.b16 %v2894
        %v3337 = vunpack.c.l.b16 %v2895
        %v3338 = vunpack.c.l.b16 %v2896
        %v3339 = vunpack.c.l.b16 %v2897
        %v3340 = vunpack.c.l.b16 %v2898
        %v3341 = vunpack.c.l.b16 %v2899
        %v3342 = vunpack.c.l.b16 %v2900
        %v3343 = vunpack.c.l.b16 %v2901
        %v3344 = vunpack.c.l.b16 %v2902
        %v3345 = vunpack.c.l.b16 %v2903
        %v3346 = vunpack.c.l.b16 %v2904
        %v3347 = vunpack.c.l.b16 %v2905
        %v3348 = vunpack.c.l.b16 %v2906
        %v3349 = vunpack.c.l.b16 %v2907
        %v3350 = vunpack.c.l.b16 %v2908
        %v3351 = vunpack.c.l.b16 %v2909
        %v3352 = vunpack.c.l.b16 %v2910
        %v3353 = vunpack.c.l.b16 %v2911
        %v3354 = vunpack.c.l.b16 %v2912
        %v3355 = vunpack.c.l.b16 %v2913
        %v3356 = vunpack.c.l.b16 %v2914
        %v3357 = vunpack.c.l.b16 %v2915
        %v3358 = vunpack.c.l.b16 %v2916
        %v3359 = vunpack.c.l.b16 %v2917
        %v3360 = vunpack.c.l.b16 %v2918
        %v3361 = vunpack.c.l.b16 %v2919
        %v3362 = vunpack.c.l.b16 %v2920
        %v3363 = vunpack.c.l.b16 %v2921
        %v3364 = vunpack.c.l.b16 %v2922
        %v3365 = vunpack.c.l.b16 %v2923
        %v3366 = vunpack.c.l.b16 %v2924
        %v3367 = vunpack.c.l.b16 %v2925
        %v3368 = vunpack.c.l.b16 %v2926
        %v3369 = vunpack.c.l.b16 %v2927
        %v3370 = vunpack.c.l.b16 %v2928
        %v3371 = vunpack.c.l.b16 %v2929
        %v3372 = vunpack.c.l.b16 %v2930
        %v3373 = vunpack.c.l.b16 %v2931
        %v3374 = vunpack.c.l.b16 %v2932
        %v3375 = vunpack.c.l.b16 %v2933
        %v3376 = vunpack.c.l.b16 %v2934
        %v3377 = vunpack.c.l.b16 %v2935
        %v3378 = vunpack.c.l.b16 %v2936
        %v3379 = vunpack.c.l.b16 %v2937
        %v3380 = vunpack.c.l.b16 %v2938
        %v3381 = vunpack.c.l.b16 %v2939
        %v3382 = vunpack.c.l.b16 %v2940
        %v3383 = vunpack.c.l.b16 %v2941
        %v3384 = vunpack.c.l.b16 %v2942
        %v3385 = vunpack.c.l.b16 %v2943
        %v3386 = vunpack.c.l.b16 %v2944
        %v3387 = vunpack.c.l.b16 %v2945
        %v3388 = vunpack.c.l.b16 %v2946
        %v3389 = vunpack.c.l.b16 %v2947
        %v3390 = vunpack.c.l.b16 %v2948
        %v3391 = vunpack.c.l.b16 %v2949
        %v3392 = vunpack.c.l.b16 %v2950
        %v3393 = vunpack.c.l.b16 %v2951
        %v3394 = vunpack.c.l.b16 %v2952
        %v3395 = vunpack.c.l.b16 %v2953
        %v3396 = vunpack.c.l.b16 %v2954
        %v3397 = vunpack.c.l.b16 %v2955
        %v3398 = vunpack.c.l.b16 %v2956
        %v3399 = vunpack.c.l.b16 %v2957
        %v3400 = vunpack.c.l.b16 %v2958
        %v3401 = vunpack.c.l.b16 %v2959
        %v3402 = vunpack.c.l.b16 %v2960
        %v3403 = vunpack.c.l.b16 %v2961
        %v3404 = vunpack.c.l.b16 %v2962
        %v3405 = vunpack.c.l.b16 %v2963
        %v3406 = vunpack.c.l.b16 %v2964
        %v3407 = vunpack.c.l.b16 %v2965
        %v3408 = vunpack.c.l.b16 %v2966
        %v3409 = vunpack.c.l.b16 %v2967
        %v3410 = vunpack.c.l.b16 %v2968
        %v3411 = vunpack.c.l.b16 %v2969
        %v3412 = vunpack.c.l.b16 %v2970
        %v3413 = vunpack.c.l.b16 %v2971
        %v3414 = vunpack.c.l.b16 %v2972
        %v3415 = vunpack.c.l.b16 %v2973
        %v3416 = vunpack.c.l.b16 %v2974
        %v3417 = vunpack.c.l.b16 %v2975
        %v3418 = vunpack.c.l.b16 %v2976
        %v3419 = vunpack.c.l.b16 %v2977
        %v3420 = vunpack.c.l.b16 %v2978
        %v3421 = vunpack.c.l.b16 %v2979
        %v3422 = vunpack.c.l.b16 %v2980
        %v3423 = vunpack.c.l.b16 %v2981
        %v3424 = vunpack.c.l.b16 %v2982
        %v3425 = vunpack.c.l.b16 %v2983
        %v3426 = vunpack.c.l.b16 %v2984
        %v3427 = vunpack.c.l.b16 %v2985
        %v3428 = vunpack.c.l.b16 %v2986
        %v3429 = vunpack.c.l.b16 %v2987
        %v3430 = vunpack.c.l.b16 %v2988
        %v3431 = vunpack.c.l.b16 %v2989
        %v3432 = vunpack.c.l.b16 %v2990
        %v3433 = vunpack.c.l.b16 %v2991
        %v3434 = vunpack.c.l.b16 %v2992
        %v3435 = vunpack.c.l.b16 %v2993
        %v3436 = vunpack.c.l.b16 %v2994
        %v3437 = vunpack.c.l.b16 %v2995
        %v3438 = vunpack.c.l.b16 %v2996
        %v3439 = vunpack.c.l.b16 %v2997
        %v3440 = vunpack.c.l.b16 %v2998
        %v3441 = vunpack.c.l.b16 %v2999
        %v3442 = vunpack.c.l.b16 %v3000
        %v3443 = vunpack.c.l.b16 %v3001
        %v3444 = vunpack.c.l.b16 %v3002
        %v3445 = vunpack.c.l.b16 %v3003
        %v3446 = vunpack.c.l.b16 %v3004
        %v3447 = vunpack.c.l.b16 %v3005
        %v3448 = vunpack.c.l.b16 %v3006
        %v3449 = vpack.c.b16 %v3306, %v3305
        %v3450 = vpack.c.b16 %v3308, %v3307
        %v3451 = vpack.c.b16 %v3310, %v3309
        %v3452 = vpack.c.b16 %v3312, %v3311
        %v3453 = vpack.c.b16 %v3314, %v3313
        %v3454 = vpack.c.b16 %v3316, %v3315
        %v3455 = vpack.c.b16 %v3318, %v3317
        %v3456 = vpack.c.b16 %v3320, %v3319
        %v3457 = vpack.c.b16 %v3322, %v3321
        %v3458 = vpack.c.b16 %v3324, %v3323
        %v3459 = vpack.c.b16 %v3326, %v3325
        %v3460 = vpack.c.b16 %v3328, %v3327
        %v3461 = vpack.c.b16 %v3330, %v3329
        %v3462 = vpack.c.b16 %v3332, %v3331
        %v3463 = vpack.c.b16 %v3334, %v3333
        %v3464 = vpack.c.b16 %v3336, %v3335
        %v3465 = vpack.c.b16 %v3338, %v3337
        %v3466 = vpack.c.b16 %v3340, %v3339
        %v3467 = vpack.c.b16 %v3342, %v3341
        %v3468 = vpack.c.b16 %v3344, %v3343
        %v3469 = vpack.c.b16 %v3346, %v3345
        %v3470 = vpack.c.b16 %v3348, %v3347
        %v3471 = vpack.c.b16 %v3350, %v3349
        %v3472 = vpack.c.b16 %v3352, %v3351
        %v3473 = vpack.c.b16 %v3354, %v3353
        %v3474 = vpack.c.b16 %v3356, %v3355
        %v3475 = vpack.c.b16 %v3358, %v3357
        %v3476 = vpack.c.b16 %v3360, %v3359
        %v3477 = vpack.c.b16 %v3362, %v3361
        %v3478 = vpack.c.b16 %v3364, %v3363
        %v3479 = vpack.c.b16 %v3366, %v3365
        %v3480 = vpack.c.b16 %v3368, %v3367
        %v3481 = vpack.c.b16 %v3370, %v3369
        %v3482 = vpack.c.b16 %v3372, %v3371
        %v3483 = vpack.c.b16 %v3374, %v3373
        %v3484 = vpack.c.b16 %v3376, %v3375
        %v3485 = vpack.c.b16 %v3378, %v3377
        %v3486 = vpack.c.b16 %v3380, %v3379
        %v3487 = vpack.c.b16 %v3382, %v3381
        %v3488 = vpack.c.b16 %v3384, %v3383
        %v3489 = vpack.c.b16 %v3386, %v3385
        %v3490 = vpack.c.b16 %v3388, %v3387
        %v3491 = vpack.c.b16 %v3390, %v3389
        %v3492 = vpack.c.b16 %v3392, %v3391
        %v3493 = vpack.c.b16 %v3394, %v3393
        %v3494 = vpack.c.b16 %v3396, %v3395
        %v3495 = vpack.c.b16 %v3398, %v3397
        %v3496 = vpack.c.b16 %v3400, %v3399
        %v3497 = vpack.c.b16 %v3402, %v3401
        %v3498 = vpack.c.b16 %v3404, %v3403
        %v3499 = vpack.c.b16 %v3406, %v3405
        %v3500 = vpack.c.b16 %v3408, %v3407
        %v3501 = vpack.c.b16 %v3410, %v3409
        %v3502 = vpack.c.b16 %v3412, %v3411
        %v3503 = vpack.c.b16 %v3414, %v3413
        %v3504 = vpack.c.b16 %v3416, %v3415
        %v3505 = vpack.c.b16 %v3418, %v3417
        %v3506 = vpack.c.b16 %v3420, %v3419
        %v3507 = vpack.c.b16 %v3422, %v3421
        %v3508 = vpack.c.b16 %v3424, %v3423
        %v3509 = vpack.c.b16 %v3426, %v3425
        %v3510 = vpack.c.b16 %v3428, %v3427
        %v3511 = vpack.c.b16 %v3430, %v3429
        %v3512 = vpack.c.b16 %v3432, %v3431
        %v3513 = vpack.c.b16 %v3434, %v3433
        %v3514 = vpack.c.b16 %v3436, %v3435
        %v3515 = vpack.c.b16 %v3438, %v3437
        %v3516 = vpack.c.b16 %v3440, %v3439
        %v3517 = vpack.c.b16 %v3442, %v3441
        %v3518 = vpack.c.b16 %v3444, %v3443
        %v3519 = vpack.c.b16 %v3446, %v3445
        %v3520 = vpack.c.b16 %v3448, %v3447
        %3593 = vmatprep.subr.bf16.mxu0 0
        %3594 = vmatpush1.bf16.msra.mxu0 %v3456
        %3595 = vmatprep.subr.bf16.mxu0 0
        %3596 = vmatpush1.bf16.msra.mxu0 %v3455
        %3597 = vmatprep.subr.bf16.mxu0 0
        %3598 = vmatpush1.bf16.msra.mxu0 %v3454
        %3599 = vmatprep.subr.bf16.mxu0 0
        %3600 = vmatpush1.bf16.msra.mxu0 %v3453
        %3601 = vmatprep.subr.bf16.mxu0 0
        %3602 = vmatpush1.bf16.msra.mxu0 %v3452
        %3603 = vmatprep.subr.bf16.mxu0 0
        %3604 = vmatpush1.bf16.msra.mxu0 %v3451
        %3605 = vmatprep.subr.bf16.mxu0 0
        %3606 = vmatpush1.bf16.msra.mxu0 %v3450
        %3607 = vmatprep.subr.bf16.mxu0 0
        %3608 = vmatpush1.bf16.msra.mxu0 %v3449
        %3609 = vmatprep.subr.bf16.mxu0 0
        %3610 = vmatpush2.bf16.msra.mxu0 %v3464
        %3611 = vmatprep.subr.bf16.mxu0 0
        %3612 = vmatpush2.bf16.msra.mxu0 %v3463
        %3613 = vmatprep.subr.bf16.mxu0 0
        %3614 = vmatpush2.bf16.msra.mxu0 %v3462
        %3615 = vmatprep.subr.bf16.mxu0 0
        %3616 = vmatpush2.bf16.msra.mxu0 %v3461
        %3617 = vmatprep.subr.bf16.mxu0 0
        %3618 = vmatpush2.bf16.msra.mxu0 %v3460
        %3619 = vmatprep.subr.bf16.mxu0 0
        %3620 = vmatpush2.bf16.msra.mxu0 %v3459
        %3621 = vmatprep.subr.bf16.mxu0 0
        %3622 = vmatpush2.bf16.msra.mxu0 %v3458
        %3623 = vmatprep.subr.bf16.mxu0 0
        %3624 = vmatpush2.bf16.msra.mxu0 %v3457
        %3625 = vmatprep.mubr.bf16.mxu0 %v3040
        %3626 = vmatmul.mubr.bf16.gmra.mxu0 %v3023
        %v3627 = vpop.f32.mrf.mxu0
        %v3628 = vadd.f32 0.0, %v3627
        %v3629 = vpop.f32.mrf.mxu0
        %v3630 = vpop.f32.mrf.mxu0
        %v3631 = vadd.f32 0.0, %v3630
        %v3632 = vpop.f32.mrf.mxu0
        %3633 = vdwg.mxu0
        %3634 = vmatprep.subr.bf16.mxu0 0
        %3635 = vmatpush1.bf16.msra.mxu0 %v3472
        %3636 = vmatprep.subr.bf16.mxu0 0
        %3637 = vmatpush1.bf16.msra.mxu0 %v3471
        %3638 = vmatprep.subr.bf16.mxu0 0
        %3639 = vmatpush1.bf16.msra.mxu0 %v3470
        %3640 = vmatprep.subr.bf16.mxu0 0
        %3641 = vmatpush1.bf16.msra.mxu0 %v3469
        %3642 = vmatprep.subr.bf16.mxu0 0
        %3643 = vmatpush1.bf16.msra.mxu0 %v3468
        %3644 = vmatprep.subr.bf16.mxu0 0
        %3645 = vmatpush1.bf16.msra.mxu0 %v3467
        %3646 = vmatprep.subr.bf16.mxu0 0
        %3647 = vmatpush1.bf16.msra.mxu0 %v3466
        %3648 = vmatprep.subr.bf16.mxu0 0
        %3649 = vmatpush1.bf16.msra.mxu0 %v3465
        %3650 = vmatprep.subr.bf16.mxu0 0
        %3651 = vmatpush2.bf16.msra.mxu0 %v3480
        %3652 = vmatprep.subr.bf16.mxu0 0
        %3653 = vmatpush2.bf16.msra.mxu0 %v3479
        %3654 = vmatprep.subr.bf16.mxu0 0
        %3655 = vmatpush2.bf16.msra.mxu0 %v3478
        %3656 = vmatprep.subr.bf16.mxu0 0
        %3657 = vmatpush2.bf16.msra.mxu0 %v3477
        %3658 = vmatprep.subr.bf16.mxu0 0
        %3659 = vmatpush2.bf16.msra.mxu0 %v3476
        %3660 = vmatprep.subr.bf16.mxu0 0
        %3661 = vmatpush2.bf16.msra.mxu0 %v3475
        %3662 = vmatprep.subr.bf16.mxu0 0
        %3663 = vmatpush2.bf16.msra.mxu0 %v3474
        %3664 = vmatprep.subr.bf16.mxu0 0
        %3665 = vmatpush2.bf16.msra.mxu0 %v3473
        %3666 = vmatprep.mubr.bf16.mxu0 %v3074
        %3667 = vmatmul.mubr.bf16.gmra.mxu0 %v3057
        %v3668 = vpop.f32.mrf.mxu0
        %v3669 = vadd.f32 %v3628, %v3668
        %v3670 = vpop.f32.mrf.mxu0
        %v3671 = vpop.f32.mrf.mxu0
        %v3672 = vadd.f32 %v3631, %v3671
        %v3673 = vpop.f32.mrf.mxu0
        %3674 = vdwg.mxu0
        %3675 = vmatprep.subr.bf16.mxu0 0
        %3676 = vmatpush1.bf16.msra.mxu0 %v3488
        %3677 = vmatprep.subr.bf16.mxu0 0
        %3678 = vmatpush1.bf16.msra.mxu0 %v3487
        %3679 = vmatprep.subr.bf16.mxu0 0
        %3680 = vmatpush1.bf16.msra.mxu0 %v3486
        %3681 = vmatprep.subr.bf16.mxu0 0
        %3682 = vmatpush1.bf16.msra.mxu0 %v3485
        %3683 = vmatprep.subr.bf16.mxu0 0
        %3684 = vmatpush1.bf16.msra.mxu0 %v3484
        %3685 = vmatprep.subr.bf16.mxu0 0
        %3686 = vmatpush1.bf16.msra.mxu0 %v3483
        %3687 = vmatprep.subr.bf16.mxu0 0
        %3688 = vmatpush1.bf16.msra.mxu0 %v3482
        %3689 = vmatprep.subr.bf16.mxu0 0
        %3690 = vmatpush1.bf16.msra.mxu0 %v3481
        %3691 = vmatprep.subr.bf16.mxu0 0
        %3692 = vmatpush2.bf16.msra.mxu0 %v3496
        %3693 = vmatprep.subr.bf16.mxu0 0
        %3694 = vmatpush2.bf16.msra.mxu0 %v3495
        %3695 = vmatprep.subr.bf16.mxu0 0
        %3696 = vmatpush2.bf16.msra.mxu0 %v3494
        %3697 = vmatprep.subr.bf16.mxu0 0
        %3698 = vmatpush2.bf16.msra.mxu0 %v3493
        %3699 = vmatprep.subr.bf16.mxu0 0
        %3700 = vmatpush2.bf16.msra.mxu0 %v3492
        %3701 = vmatprep.subr.bf16.mxu0 0
        %3702 = vmatpush2.bf16.msra.mxu0 %v3491
        %3703 = vmatprep.subr.bf16.mxu0 0
        %3704 = vmatpush2.bf16.msra.mxu0 %v3490
        %3705 = vmatprep.subr.bf16.mxu0 0
        %3706 = vmatpush2.bf16.msra.mxu0 %v3489
        %3707 = vmatprep.mubr.bf16.mxu0 %v3100
        %3708 = vmatmul.mubr.bf16.gmra.mxu0 %v3083
        %v3709 = vpop.f32.mrf.mxu0
        %v3710 = vadd.f32 %v3669, %v3709
        %v3711 = vpop.f32.mrf.mxu0
        %v3712 = vpop.f32.mrf.mxu0
        %v3713 = vadd.f32 %v3672, %v3712
        %v3714 = vpop.f32.mrf.mxu0
        %3715 = vdwg.mxu0
        %3716 = vmatprep.subr.bf16.mxu0 0
        %3717 = vmatpush1.bf16.msra.mxu0 %v3504
        %3718 = vmatprep.subr.bf16.mxu0 0
        %3719 = vmatpush1.bf16.msra.mxu0 %v3503
        %3720 = vmatprep.subr.bf16.mxu0 0
        %3721 = vmatpush1.bf16.msra.mxu0 %v3502
        %3722 = vmatprep.subr.bf16.mxu0 0
        %3723 = vmatpush1.bf16.msra.mxu0 %v3501
        %3724 = vmatprep.subr.bf16.mxu0 0
        %3725 = vmatpush1.bf16.msra.mxu0 %v3500
        %3726 = vmatprep.subr.bf16.mxu0 0
        %3727 = vmatpush1.bf16.msra.mxu0 %v3499
        %3728 = vmatprep.subr.bf16.mxu0 0
        %3729 = vmatpush1.bf16.msra.mxu0 %v3498
        %3730 = vmatprep.subr.bf16.mxu0 0
        %3731 = vmatpush1.bf16.msra.mxu0 %v3497
        %3732 = vmatprep.subr.bf16.mxu0 0
        %3733 = vmatpush2.bf16.msra.mxu0 %v3512
        %3734 = vmatprep.subr.bf16.mxu0 0
        %3735 = vmatpush2.bf16.msra.mxu0 %v3511
        %3736 = vmatprep.subr.bf16.mxu0 0
        %3737 = vmatpush2.bf16.msra.mxu0 %v3510
        %3738 = vmatprep.subr.bf16.mxu0 0
        %3739 = vmatpush2.bf16.msra.mxu0 %v3509
        %3740 = vmatprep.subr.bf16.mxu0 0
        %3741 = vmatpush2.bf16.msra.mxu0 %v3508
        %3742 = vmatprep.subr.bf16.mxu0 0
        %3743 = vmatpush2.bf16.msra.mxu0 %v3507
        %3744 = vmatprep.subr.bf16.mxu0 0
        %3745 = vmatpush2.bf16.msra.mxu0 %v3506
        %3746 = vmatprep.subr.bf16.mxu0 0
        %3747 = vmatpush2.bf16.msra.mxu0 %v3505
        %3748 = vmatprep.mubr.bf16.mxu0 %v3134
        %3749 = vmatmul.mubr.bf16.gmra.mxu0 %v3117
        %v3750 = vpop.f32.mrf.mxu0
        %v3751 = vadd.f32 %v3710, %v3750
        %v3752 = vpop.f32.mrf.mxu0
        %v3753 = vpop.f32.mrf.mxu0
        %v3754 = vadd.f32 %v3713, %v3753
        %v3755 = vpop.f32.mrf.mxu0
        %3756 = vdwg.mxu0
        %3757 = vmatprep.subr.bf16.mxu0 0
        %3758 = vmatpush1.bf16.msra.mxu0 %v3520
        %3759 = vmatprep.subr.bf16.mxu0 0
        %3760 = vmatpush1.bf16.msra.mxu0 %v3519
        %3761 = vmatprep.subr.bf16.mxu0 0
        %3762 = vmatpush1.bf16.msra.mxu0 %v3518
        %3763 = vmatprep.subr.bf16.mxu0 0
        %3764 = vmatpush1.bf16.msra.mxu0 %v3517
        %3765 = vmatprep.subr.bf16.mxu0 0
        %3766 = vmatpush1.bf16.msra.mxu0 %v3516
        %3767 = vmatprep.subr.bf16.mxu0 0
        %3768 = vmatpush1.bf16.msra.mxu0 %v3515
        %3769 = vmatprep.subr.bf16.mxu0 0
        %3770 = vmatpush1.bf16.msra.mxu0 %v3514
        %3771 = vmatprep.subr.bf16.mxu0 0
        %3772 = vmatpush1.bf16.msra.mxu0 %v3513
        %3773 = vmatprep.subr.bf16.mxu0 0
        %3774 = vmatpush2.bf16.msra.mxu0 0
        %3775 = vmatprep.subr.bf16.mxu0 0
        %3776 = vmatpush2.bf16.msra.mxu0 0
        %3777 = vmatprep.subr.bf16.mxu0 0
        %3778 = vmatpush2.bf16.msra.mxu0 0
        %3779 = vmatprep.subr.bf16.mxu0 0
        %3780 = vmatpush2.bf16.msra.mxu0 0
        %3781 = vmatprep.subr.bf16.mxu0 0
        %3782 = vmatpush2.bf16.msra.mxu0 0
        %3783 = vmatprep.subr.bf16.mxu0 0
        %3784 = vmatpush2.bf16.msra.mxu0 0
        %3785 = vmatprep.subr.bf16.mxu0 0
        %3786 = vmatpush2.bf16.msra.mxu0 0
        %3787 = vmatprep.subr.bf16.mxu0 0
        %3788 = vmatpush2.bf16.msra.mxu0 0
        %3789 = vmatprep.mubr.bf16.mxu0 0
        %3790 = vmatmul.mubr.bf16.gmra.mxu0 %v3151
        %v3791 = vpop.f32.mrf.mxu0
        %v3792 = vadd.f32 %v3751, %v3791
        %v3793 = vpop.f32.mrf.mxu0
        %v3794 = vpop.f32.mrf.mxu0
        %v3795 = vadd.f32 %v3754, %v3794
        %v3796 = vpop.f32.mrf.mxu0
        %3797 = vdwg.mxu0
        %v3798 = vmax.f32 %v3792, 0.0
        %v3799 = vmax.f32 %v3795, 0.0
        %v3800 = vpack.c.bf16 %v3799, %v3798
        %v3801 = vld [vmem:[%s4] sm:$0xf]
        %v3802 = vld [vmem:[%s4 + $0x4] sm:$0xf]
        %v3803 = vld [vmem:[%s4 + $0x8] sm:$0xf]
        %v3804 = vld [vmem:[%s4 + $0xc] sm:$0xf]
        %v3805 = vld [vmem:[%s4 + $0x10] sm:$0xf]
        %v3806 = vld [vmem:[%s4 + $0x14] sm:$0xf]
        %v3807 = vld [vmem:[%s4 + $0x18] sm:$0xf]
        %v3808 = vld [vmem:[%s4 + $0x1c] sm:$0xf]
        %v3809 = vld [vmem:[%s4 + $0x20] sm:$0xf]
        %v3810 = vld [vmem:[%s4 + $0x24] sm:$0xf]
        %v3811 = vld [vmem:[%s4 + $0x28] sm:$0xf]
        %v3812 = vld [vmem:[%s4 + $0x2c] sm:$0xf]
        %v3813 = vld [vmem:[%s4 + $0x30] sm:$0xf]
        %v3814 = vld [vmem:[%s4 + $0x34] sm:$0xf]
        %v3815 = vld [vmem:[%s4 + $0x38] sm:$0xf]
        %v3816 = vld [vmem:[%s4 + $0x3c] sm:$0xf]
        %v3833 = vunpack.c.l.b16 %v3801
        %v3834 = vunpack.c.l.b16 %v3802
        %v3835 = vunpack.c.l.b16 %v3803
        %v3836 = vunpack.c.l.b16 %v3804
        %v3837 = vunpack.c.l.b16 %v3805
        %v3838 = vunpack.c.l.b16 %v3806
        %v3839 = vunpack.c.l.b16 %v3807
        %v3840 = vunpack.c.l.b16 %v3808
        %v3841 = vunpack.c.l.b16 %v3809
        %v3842 = vunpack.c.l.b16 %v3810
        %v3843 = vunpack.c.l.b16 %v3811
        %v3844 = vunpack.c.l.b16 %v3812
        %v3845 = vunpack.c.l.b16 %v3813
        %v3846 = vunpack.c.l.b16 %v3814
        %v3847 = vunpack.c.l.b16 %v3815
        %v3848 = vunpack.c.l.b16 %v3816
        %v3849 = vpack.c.b16 %v3834, %v3833
        %v3850 = vpack.c.b16 %v3836, %v3835
        %v3851 = vpack.c.b16 %v3838, %v3837
        %v3852 = vpack.c.b16 %v3840, %v3839
        %v3853 = vpack.c.b16 %v3842, %v3841
        %v3854 = vpack.c.b16 %v3844, %v3843
        %v3855 = vpack.c.b16 %v3846, %v3845
        %v3856 = vpack.c.b16 %v3848, %v3847
        %3865 = vmatprep.subr.bf16.mxu0 0
        %3866 = vmatpush1.bf16.msra.mxu0 %v3856
        %3867 = vmatprep.subr.bf16.mxu0 0
        %3868 = vmatpush1.bf16.msra.mxu0 %v3855
        %3869 = vmatprep.subr.bf16.mxu0 0
        %3870 = vmatpush1.bf16.msra.mxu0 %v3854
        %3871 = vmatprep.subr.bf16.mxu0 0
        %3872 = vmatpush1.bf16.msra.mxu0 %v3853
        %3873 = vmatprep.subr.bf16.mxu0 0
        %3874 = vmatpush1.bf16.msra.mxu0 %v3852
        %3875 = vmatprep.subr.bf16.mxu0 0
        %3876 = vmatpush1.bf16.msra.mxu0 %v3851
        %3877 = vmatprep.subr.bf16.mxu0 0
        %3878 = vmatpush1.bf16.msra.mxu0 %v3850
        %3879 = vmatprep.subr.bf16.mxu0 0
        %3880 = vmatpush1.bf16.msra.mxu0 %v3849
        %3881 = vmatprep.subr.bf16.mxu0 0
        %3882 = vmatpush2.bf16.msra.mxu0 0
        %3883 = vmatprep.subr.bf16.mxu0 0
        %3884 = vmatpush2.bf16.msra.mxu0 0
        %3885 = vmatprep.subr.bf16.mxu0 0
        %3886 = vmatpush2.bf16.msra.mxu0 0
        %3887 = vmatprep.subr.bf16.mxu0 0
        %3888 = vmatpush2.bf16.msra.mxu0 0
        %3889 = vmatprep.subr.bf16.mxu0 0
        %3890 = vmatpush2.bf16.msra.mxu0 0
        %3891 = vmatprep.subr.bf16.mxu0 0
        %3892 = vmatpush2.bf16.msra.mxu0 0
        %3893 = vmatprep.subr.bf16.mxu0 0
        %3894 = vmatpush2.bf16.msra.mxu0 0
        %3895 = vmatprep.subr.bf16.mxu0 0
        %3896 = vmatpush2.bf16.msra.mxu0 0
        %3897 = vmatprep.mubr.bf16.mxu0 0
        %3898 = vmatmul.mubr.bf16.gmra.mxu0 %v3800
        %v3899 = vpop.f32.mrf.mxu0
        %v3900 = vadd.f32 0.0, %v3899
        %v3901 = vpop.f32.mrf.mxu0
        %v3902 = vpop.f32.mrf.mxu0
        %v3903 = vadd.f32 0.0, %v3902
        %v3904 = vpop.f32.mrf.mxu0
        %3905 = vdwg.mxu0
        %v3906 = vadd.f32 %v2700, %v3900
        %v3907 = vadd.f32 %v2701, %v3903
        %v3908 = vmax.f32 %v3906, 0.0
        %v3909 = vmax.f32 %v3907, 0.0
        %3910 = vst [vmem:[%s271] sm:$0xff] %v3908
        %3911 = vst [vmem:[%s271 + $0x8] sm:$0xff] %v3909
        %s3912 = sand.u32 %s181, 1
        %s3913 = scalar_lea.sflag [#allocation4], %s3912
        %s3914 = sand.u32 %s181, 1
        %s3915 = smul.addr %s3914, 16
        %s3916 = scalar_lea.vmem [#allocation3], %s3915
        // Predicated region
        $region49: #{encoder_forward.5} parent=47 // pred_check
          %p3917 = pneg %p191
        $region50: #{encoder_forward.5} parent=47 // pred_check_branch
          %3919 = sbr.rel (%p3917) target = $region52
        $region51: #{encoder_forward.5} parent=47 // pred_region
          %s3921 = ssub.s32 256, 256
          %3922 = vsyncadd %s3913, %s3921
          %s3923 = smul.addr %s21, 2
          %s3924 = smul.addr %s3923, 128
          %s3925 = scalar_lea.hbm %s7, %s3924
          %s3926 = sshll.u32 %s3916, 4
          %s3927 = int_to_ptr.vmem [resolvable:$true] %s3926
          %3932 = dma.vmem_to_hbm [thread:$0]  %s3927, 256, %s3925, %s3913, 128, 128, 8
        $region52: #{encoder_forward.5} parent=47 // pred_fallthru
          _
      $region48: #{encoder_forward.5} parent=5 // pred_fallthru
        _
      %p3933 = scmp.le.s32.totalorder 2, %s16
      // Predicated region
      $region53: #{encoder_forward.5} parent=5 // pred_check
        %p3934 = pneg %p3933
      $region54: #{encoder_forward.5} parent=5 // pred_check_branch
        %3936 = sbr.rel (%p3934) target = $region56
      $region55: #{encoder_forward.5} parent=5 // pred_region
        %s3937 = ssub.s32 %s16, 2
        // Predicated region
        $region57: #{encoder_forward.5} parent=55 // pred_check
          %p3938 = pneg %p197
        $region58: #{encoder_forward.5} parent=55 // pred_check_branch
          %3940 = sbr.rel (%p3938) target = $region60
        $region59: #{encoder_forward.5} parent=55 // pred_region
          %s3941 = sand.u32 %s182, 1
          %s3942 = scalar_lea.sflag [#allocation4], %s3941
          %s3943 = sand.u32 %s182, 1
          %s3944 = smul.addr %s3943, 16
          %s3945 = scalar_lea.vmem [#allocation3], %s3944
          %3946 = dma.done %s3942, 256
        $region60: #{encoder_forward.5} parent=55 // pred_fallthru
          _
      $region56: #{encoder_forward.5} parent=5 // pred_fallthru
        _
    $region6: #{encoder_forward.5} parent=1 // loop_footer
      %s20 = sadd.s32 1, %s16
    $region7: #{encoder_forward.5} parent=1 // loop_footer_branch
      %15 = sbr.rel target = $region3
    $region8: #{encoder_forward.5} parent=1 // loop_exit
      _
    %3947 = vsyncpa [#allocation4], 1
    %s3948 = scalar_lea.sflag [#allocation4], 1
    %3949 = vsyncpa %s3948, 1

</llo_original>
